<compile_context>
chip_gen: v7x
topology: tpu7x:2x2x1
jax: 0.10.0
libtpu: 0.0.40
codegen_flags: <defaults>
</compile_context>

<pallas_src>
import jax
import jax.numpy as jnp
from jax.experimental import pallas as pl
from jax.experimental.pallas import tpu as pltpu

LANE = 128
SUBLANE = 8


def _round_up(x, m):
    return (x + m - 1) // m * m


# --------------------------- fused LSTM + head kernel ---------------------------
def _make_fused_kernel(T, Bp, n_layers, Hp):
    def kernel(x_ref, *refs):
        # refs = [wih_0, whh_0, b_0, ..., wih_{L-1}, whh_{L-1}, b_{L-1},
        #         head_w, head_b, out_ref, gx_sc, hseq_sc]
        layer_refs = refs[:3 * n_layers]
        head_w_ref = refs[3 * n_layers + 0]
        head_b_ref = refs[3 * n_layers + 1]
        out_ref = refs[3 * n_layers + 2]
        gx_sc = refs[3 * n_layers + 3]      # (T*Bp, 4*Hp) input-projected gates
        hseq_sc = refs[3 * n_layers + 4]    # (T*Bp, Hp)   inter-layer hidden seq

        h_last = None
        for l in range(n_layers):                       # statically unrolled
            wih_ref = layer_refs[3 * l + 0]
            whh_ref = layer_refs[3 * l + 1]
            b_ref = layer_refs[3 * l + 2]

            # Hoisted input projection: one batched matmul over ALL timesteps.
            layer_in = x_ref[...] if l == 0 else hseq_sc[...]
            gx_sc[...] = (
                jnp.dot(layer_in, wih_ref[...],
                        preferred_element_type=jnp.float32)
                + b_ref[...])

            whh = whh_ref[...]                          # (Hp, 4*Hp) VMEM-resident
            h = jnp.zeros((Bp, Hp), jnp.float32)
            c = jnp.zeros((Bp, Hp), jnp.float32)
            last_layer = (l == n_layers - 1)

            for t in range(T):                          # statically unrolled, T small
                gates = gx_sc[t * Bp:(t + 1) * Bp, :] + jnp.dot(
                    h, whh, preferred_element_type=jnp.float32)   # (Bp, 4*Hp)
                # Hp % 128 == 0 -> every gate slice is vreg-aligned (no lane
                # extraction); sigmoid/tanh are whole-vreg EUP pushes.
                i_g = jax.nn.sigmoid(gates[:, 0 * Hp:1 * Hp])
                f_g = jax.nn.sigmoid(gates[:, 1 * Hp:2 * Hp])
                g_g = jnp.tanh(gates[:, 2 * Hp:3 * Hp])
                o_g = jax.nn.sigmoid(gates[:, 3 * Hp:4 * Hp])
                c = f_g * c + i_g * g_g
                h = o_g * jnp.tanh(c)
                if not last_layer:                      # last layer keeps only h_T
                    hseq_sc[t * Bp:(t + 1) * Bp, :] = h
            h_last = h

        # Fused classifier head: matmul + log_softmax over padded class lanes.
        logits = (jnp.dot(h_last, head_w_ref[...],
                          preferred_element_type=jnp.float32)
                  + head_b_ref[...])                    # (Bp, Cp) lane-dense
        m = jnp.max(logits, axis=-1, keepdims=True)
        z = logits - m
        lse = jnp.log(jnp.sum(jnp.exp(z), axis=-1, keepdims=True))
        out_ref[...] = z - lse

    return kernel


# ------------------------------- full forward ---------------------------------
def lstm_model_forward(token_ids, params):
    B, T = token_ids.shape
    emb_table = params["embedding"]
    D = emb_table.shape[1]
    H = params["lstm_layers"][0][1].shape[0]
    C = params["head_w"].shape[1]
    n_layers = len(params["lstm_layers"])

    Bp = _round_up(max(B, SUBLANE), SUBLANE)
    Dp = _round_up(D, LANE)
    Hp = _round_up(H, LANE)
    Cp = _round_up(C, LANE)

    # Embedding lookup: data-dependent gather kept in plain JAX glue.
    # TODO(synk): GloVe pretrained vectors replaced by a deterministic random table.
    emb = emb_table[token_ids]                          # (B, T, D)
    x = jnp.transpose(emb, (1, 0, 2))                   # time-major (T, B, D)
    x = jnp.pad(x, ((0, 0), (0, Bp - B), (0, Dp - D)))
    x = x.reshape(T * Bp, Dp).astype(jnp.float32)

    def pad_gate_cols(w, h, hp):
        # (R, 4h) -> (R, 4hp): pad each gate's columns so each gate occupies a
        # whole number of 128-lane vregs (zeros keep the math exact).
        r = w.shape[0]
        w4 = jnp.pad(w.reshape(r, 4, h), ((0, 0), (0, 0), (0, hp - h)))
        return w4.reshape(r, 4 * hp)

    args = [x]
    for l, (w_ih, w_hh, b) in enumerate(params["lstm_layers"]):
        din = w_ih.shape[0]
        dinp = Dp if l == 0 else Hp
        w_ih_p = jnp.pad(pad_gate_cols(w_ih, H, Hp), ((0, dinp - din), (0, 0)))
        w_hh_p = jnp.pad(pad_gate_cols(w_hh, H, Hp), ((0, Hp - H), (0, 0)))
        b_p = pad_gate_cols(b.reshape(1, 4 * H), H, Hp)
        args += [w_ih_p, w_hh_p, b_p]

    head_w_p = jnp.pad(params["head_w"], ((0, Hp - H), (0, Cp - C)))
    # Padded classes get a huge negative bias so log_softmax ignores them.
    head_b_p = jnp.pad(params["head_b"].reshape(1, C), ((0, 0), (0, Cp - C)),
                       constant_values=-1e30)
    args += [head_w_p, head_b_p]

    out_padded = pl.pallas_call(
        _make_fused_kernel(T, Bp, n_layers, Hp),
        out_shape=jax.ShapeDtypeStruct((Bp, Cp), jnp.float32),
        scratch_shapes=[
            pltpu.VMEM((T * Bp, 4 * Hp), jnp.float32),   # input-projected gates
            pltpu.VMEM((T * Bp, Hp), jnp.float32),       # inter-layer hidden seq
        ],
    )(*args)
    return out_padded[:B, :C]                            # (B, 3) log-probs


# ----------------------------- pure-JAX reference ------------------------------
def reference_forward(token_ids, params):
    emb = params["embedding"][token_ids]
    x = jnp.transpose(emb, (1, 0, 2))
    for (w_ih, w_hh, b) in params["lstm_layers"]:
        H = w_hh.shape[0]
        B = x.shape[1]

        def step(carry, x_t):
            h, c = carry
            gates = x_t @ w_ih + h @ w_hh + b[0]
            i = jax.nn.sigmoid(gates[:, 0 * H:1 * H])
            f = jax.nn.sigmoid(gates[:, 1 * H:2 * H])
            g = jnp.tanh(gates[:, 2 * H:3 * H])
            o = jax.nn.sigmoid(gates[:, 3 * H:4 * H])
            c = f * c + i * g
            h = o * jnp.tanh(c)
            return (h, c), h

        init = (jnp.zeros((B, H), jnp.float32), jnp.zeros((B, H), jnp.float32))
        _, hs = jax.lax.scan(step, init, x)
        x = hs
    h_last = x[-1]
    logits = h_last @ params["head_w"] + params["head_b"]
    return jax.nn.log_softmax(logits, axis=1)


# ----------------------------------- main ---------------------------------------
if __name__ == "__main__":
    key = jax.random.PRNGKey(0)

    vocab_size = 100
    embed_dim = 32
    hidden_dim = 32
    n_layers = 2
    B, T = 2, 8
    n_classes = 3

    ks = jax.random.split(key, 3 + 3 * n_layers)

    embedding = jax.random.normal(ks[0], (vocab_size, embed_dim), jnp.float32) * 0.1

    lstm_layers = []
    for layer in range(n_layers):
        D = embed_dim if layer == 0 else hidden_dim
        w_ih = jax.random.normal(ks[3 + 3 * layer + 0], (D, 4 * hidden_dim), jnp.float32) * 0.1
        w_hh = jax.random.normal(ks[3 + 3 * layer + 1], (hidden_dim, 4 * hidden_dim), jnp.float32) * 0.1
        b = jax.random.normal(ks[3 + 3 * layer + 2], (1, 4 * hidden_dim), jnp.float32) * 0.1
        lstm_layers.append((w_ih, w_hh, b))

    head_w = jax.random.normal(ks[1], (hidden_dim, n_classes), jnp.float32) * 0.1
    head_b = jax.random.normal(ks[2], (n_classes,), jnp.float32) * 0.1

    params = {
        "embedding": embedding,
        "lstm_layers": lstm_layers,
        "head_w": head_w,
        "head_b": head_b,
    }

    token_ids = jax.random.randint(key, (B, T), 0, vocab_size, dtype=jnp.int32)

    out = lstm_model_forward(token_ids, params)
    out = jax.block_until_ready(out)

    ref = reference_forward(token_ids, params)
    assert out.shape == (B, n_classes)
    assert jnp.allclose(out, ref, atol=1e-5), (out, ref)

    print("KERNEL_OK")
</pallas_src>

<mosaic_0001>
module attributes {stable_mosaic.version = 11 : i64} {
  func.func @kernel(%arg0: memref<64x128xf32, #tpu.memory_space<vmem>>, %arg1: memref<128x512xf32, #tpu.memory_space<vmem>>, %arg2: memref<128x512xf32, #tpu.memory_space<vmem>>, %arg3: memref<1x512xf32, #tpu.memory_space<vmem>>, %arg4: memref<128x512xf32, #tpu.memory_space<vmem>>, %arg5: memref<128x512xf32, #tpu.memory_space<vmem>>, %arg6: memref<1x512xf32, #tpu.memory_space<vmem>>, %arg7: memref<128x128xf32, #tpu.memory_space<vmem>>, %arg8: memref<1x128xf32, #tpu.memory_space<vmem>>, %arg9: memref<8x128xf32, #tpu.memory_space<vmem>>, %arg10: memref<64x512xf32, #tpu.memory_space<vmem>>, %arg11: memref<64x128xf32, #tpu.memory_space<vmem>>) attributes {dimension_semantics = [], scalar_prefetch = 0 : i64, scratch_operands = 2 : i64, tpu.core_type = #tpu.core_type<tc>} {
    %c0 = arith.constant 0 : index
    %c0_0 = arith.constant 0 : index
    %0 = vector.load %arg0[%c0, %c0_0] : memref<64x128xf32, #tpu.memory_space<vmem>>, vector<64x128xf32>
    %c0_1 = arith.constant 0 : index
    %c0_2 = arith.constant 0 : index
    %1 = vector.load %arg1[%c0_1, %c0_2] : memref<128x512xf32, #tpu.memory_space<vmem>>, vector<128x512xf32>
    %cst = arith.constant dense<0.000000e+00> : vector<64x512xf32>
    %2 = tpu.matmul %0, %1, %cst {dimension_numbers = #tpu.dot_dimension_numbers<[1], [0], [0], [1], [0, 0, 1, 1], [], []>} : vector<64x128xf32>, vector<128x512xf32>, vector<64x512xf32> -> vector<64x512xf32>
    %c0_3 = arith.constant 0 : index
    %c0_4 = arith.constant 0 : index
    %3 = vector.load %arg3[%c0_3, %c0_4] : memref<1x512xf32, #tpu.memory_space<vmem>>, vector<1x512xf32>
    %4 = vector.broadcast %3 : vector<1x512xf32> to vector<64x512xf32>
    %5 = arith.addf %2, %4 : vector<64x512xf32>
    %c0_5 = arith.constant 0 : index
    %c0_6 = arith.constant 0 : index
    %6 = vector.load %arg10[%c0_5, %c0_6] : memref<64x512xf32, #tpu.memory_space<vmem>>, vector<64x512xf32>
    tpu.vector_store %arg10[%c0_5, %c0_6], %5 {strides = array<i32>} : memref<64x512xf32, #tpu.memory_space<vmem>>, vector<64x512xf32>,
    %c0_7 = arith.constant 0 : index
    %c0_8 = arith.constant 0 : index
    %7 = vector.load %arg2[%c0_7, %c0_8] : memref<128x512xf32, #tpu.memory_space<vmem>>, vector<128x512xf32>
    %cst_9 = arith.constant 0.000000e+00 : f32
    %8 = vector.broadcast %cst_9 : f32 to vector<8x128xf32>
    %cst_10 = arith.constant 0.000000e+00 : f32
    %9 = vector.broadcast %cst_10 : f32 to vector<8x128xf32>
    %c0_11 = arith.constant 0 : index
    %c0_12 = arith.constant 0 : index
    %10 = vector.load %arg10[%c0_11, %c0_12] : memref<64x512xf32, #tpu.memory_space<vmem>>, vector<8x512xf32>
    %cst_13 = arith.constant dense<0.000000e+00> : vector<8x512xf32>
    %11 = tpu.matmul %8, %7, %cst_13 {dimension_numbers = #tpu.dot_dimension_numbers<[1], [0], [0], [1], [0, 0, 1, 1], [], []>} : vector<8x128xf32>, vector<128x512xf32>, vector<8x512xf32> -> vector<8x512xf32>
    %12 = arith.addf %10, %11 : vector<8x512xf32>
    %13 = vector.extract_strided_slice %12 {offsets = [0, 0], sizes = [8, 128], strides = [1, 1]} : vector<8x512xf32> to vector<8x128xf32>
    %14 = arith.negf %13 : vector<8x128xf32>
    %15 = math.exp %14 : vector<8x128xf32>
    %cst_14 = arith.constant 1.000000e+00 : f32
    %16 = vector.broadcast %cst_14 : f32 to vector<8x128xf32>
    %17 = arith.addf %16, %15 : vector<8x128xf32>
    %18 = arith.divf %16, %17 : vector<8x128xf32>
    %19 = vector.extract_strided_slice %12 {offsets = [0, 128], sizes = [8, 128], strides = [1, 1]} : vector<8x512xf32> to vector<8x128xf32>
    %20 = arith.negf %19 : vector<8x128xf32>
    %21 = math.exp %20 : vector<8x128xf32>
    %cst_15 = arith.constant 1.000000e+00 : f32
    %22 = vector.broadcast %cst_15 : f32 to vector<8x128xf32>
    %23 = arith.addf %22, %21 : vector<8x128xf32>
    %24 = arith.divf %22, %23 : vector<8x128xf32>
    %25 = vector.extract_strided_slice %12 {offsets = [0, 256], sizes = [8, 128], strides = [1, 1]} : vector<8x512xf32> to vector<8x128xf32>
    %26 = math.tanh %25 : vector<8x128xf32>
    %27 = vector.extract_strided_slice %12 {offsets = [0, 384], sizes = [8, 128], strides = [1, 1]} : vector<8x512xf32> to vector<8x128xf32>
    %28 = arith.negf %27 : vector<8x128xf32>
    %29 = math.exp %28 : vector<8x128xf32>
    %cst_16 = arith.constant 1.000000e+00 : f32
    %30 = vector.broadcast %cst_16 : f32 to vector<8x128xf32>
    %31 = arith.addf %30, %29 : vector<8x128xf32>
    %32 = arith.divf %30, %31 : vector<8x128xf32>
    %33 = arith.mulf %24, %9 : vector<8x128xf32>
    %34 = arith.mulf %18, %26 : vector<8x128xf32>
    %35 = arith.addf %33, %34 : vector<8x128xf32>
    %36 = math.tanh %35 : vector<8x128xf32>
    %37 = arith.mulf %32, %36 : vector<8x128xf32>
    %c0_17 = arith.constant 0 : index
    %c0_18 = arith.constant 0 : index
    %38 = vector.load %arg11[%c0_17, %c0_18] : memref<64x128xf32, #tpu.memory_space<vmem>>, vector<8x128xf32>
    tpu.vector_store %arg11[%c0_17, %c0_18], %37 {strides = array<i32>} : memref<64x128xf32, #tpu.memory_space<vmem>>, vector<8x128xf32>,
    %c8 = arith.constant 8 : index
    %c0_19 = arith.constant 0 : index
    %39 = vector.load %arg10[%c8, %c0_19] : memref<64x512xf32, #tpu.memory_space<vmem>>, vector<8x512xf32>
    %cst_20 = arith.constant dense<0.000000e+00> : vector<8x512xf32>
    %40 = tpu.matmul %37, %7, %cst_20 {dimension_numbers = #tpu.dot_dimension_numbers<[1], [0], [0], [1], [0, 0, 1, 1], [], []>} : vector<8x128xf32>, vector<128x512xf32>, vector<8x512xf32> -> vector<8x512xf32>
    %41 = arith.addf %39, %40 : vector<8x512xf32>
    %42 = vector.extract_strided_slice %41 {offsets = [0, 0], sizes = [8, 128], strides = [1, 1]} : vector<8x512xf32> to vector<8x128xf32>
    %43 = arith.negf %42 : vector<8x128xf32>
    %44 = math.exp %43 : vector<8x128xf32>
    %cst_21 = arith.constant 1.000000e+00 : f32
    %45 = vector.broadcast %cst_21 : f32 to vector<8x128xf32>
    %46 = arith.addf %45, %44 : vector<8x128xf32>
    %47 = arith.divf %45, %46 : vector<8x128xf32>
    %48 = vector.extract_strided_slice %41 {offsets = [0, 128], sizes = [8, 128], strides = [1, 1]} : vector<8x512xf32> to vector<8x128xf32>
    %49 = arith.negf %48 : vector<8x128xf32>
    %50 = math.exp %49 : vector<8x128xf32>
    %cst_22 = arith.constant 1.000000e+00 : f32
    %51 = vector.broadcast %cst_22 : f32 to vector<8x128xf32>
    %52 = arith.addf %51, %50 : vector<8x128xf32>
    %53 = arith.divf %51, %52 : vector<8x128xf32>
    %54 = vector.extract_strided_slice %41 {offsets = [0, 256], sizes = [8, 128], strides = [1, 1]} : vector<8x512xf32> to vector<8x128xf32>
    %55 = math.tanh %54 : vector<8x128xf32>
    %56 = vector.extract_strided_slice %41 {offsets = [0, 384], sizes = [8, 128], strides = [1, 1]} : vector<8x512xf32> to vector<8x128xf32>
    %57 = arith.negf %56 : vector<8x128xf32>
    %58 = math.exp %57 : vector<8x128xf32>
    %cst_23 = arith.constant 1.000000e+00 : f32
    %59 = vector.broadcast %cst_23 : f32 to vector<8x128xf32>
    %60 = arith.addf %59, %58 : vector<8x128xf32>
    %61 = arith.divf %59, %60 : vector<8x128xf32>
    %62 = arith.mulf %53, %35 : vector<8x128xf32>
    %63 = arith.mulf %47, %55 : vector<8x128xf32>
    %64 = arith.addf %62, %63 : vector<8x128xf32>
    %65 = math.tanh %64 : vector<8x128xf32>
    %66 = arith.mulf %61, %65 : vector<8x128xf32>
    %c8_24 = arith.constant 8 : index
    %c0_25 = arith.constant 0 : index
    %67 = vector.load %arg11[%c8_24, %c0_25] : memref<64x128xf32, #tpu.memory_space<vmem>>, vector<8x128xf32>
    tpu.vector_store %arg11[%c8_24, %c0_25], %66 {strides = array<i32>} : memref<64x128xf32, #tpu.memory_space<vmem>>, vector<8x128xf32>,
    %c16 = arith.constant 16 : index
    %c0_26 = arith.constant 0 : index
    %68 = vector.load %arg10[%c16, %c0_26] : memref<64x512xf32, #tpu.memory_space<vmem>>, vector<8x512xf32>
    %cst_27 = arith.constant dense<0.000000e+00> : vector<8x512xf32>
    %69 = tpu.matmul %66, %7, %cst_27 {dimension_numbers = #tpu.dot_dimension_numbers<[1], [0], [0], [1], [0, 0, 1, 1], [], []>} : vector<8x128xf32>, vector<128x512xf32>, vector<8x512xf32> -> vector<8x512xf32>
    %70 = arith.addf %68, %69 : vector<8x512xf32>
    %71 = vector.extract_strided_slice %70 {offsets = [0, 0], sizes = [8, 128], strides = [1, 1]} : vector<8x512xf32> to vector<8x128xf32>
    %72 = arith.negf %71 : vector<8x128xf32>
    %73 = math.exp %72 : vector<8x128xf32>
    %cst_28 = arith.constant 1.000000e+00 : f32
    %74 = vector.broadcast %cst_28 : f32 to vector<8x128xf32>
    %75 = arith.addf %74, %73 : vector<8x128xf32>
    %76 = arith.divf %74, %75 : vector<8x128xf32>
    %77 = vector.extract_strided_slice %70 {offsets = [0, 128], sizes = [8, 128], strides = [1, 1]} : vector<8x512xf32> to vector<8x128xf32>
    %78 = arith.negf %77 : vector<8x128xf32>
    %79 = math.exp %78 : vector<8x128xf32>
    %cst_29 = arith.constant 1.000000e+00 : f32
    %80 = vector.broadcast %cst_29 : f32 to vector<8x128xf32>
    %81 = arith.addf %80, %79 : vector<8x128xf32>
    %82 = arith.divf %80, %81 : vector<8x128xf32>
    %83 = vector.extract_strided_slice %70 {offsets = [0, 256], sizes = [8, 128], strides = [1, 1]} : vector<8x512xf32> to vector<8x128xf32>
    %84 = math.tanh %83 : vector<8x128xf32>
    %85 = vector.extract_strided_slice %70 {offsets = [0, 384], sizes = [8, 128], strides = [1, 1]} : vector<8x512xf32> to vector<8x128xf32>
    %86 = arith.negf %85 : vector<8x128xf32>
    %87 = math.exp %86 : vector<8x128xf32>
    %cst_30 = arith.constant 1.000000e+00 : f32
    %88 = vector.broadcast %cst_30 : f32 to vector<8x128xf32>
    %89 = arith.addf %88, %87 : vector<8x128xf32>
    %90 = arith.divf %88, %89 : vector<8x128xf32>
    %91 = arith.mulf %82, %64 : vector<8x128xf32>
    %92 = arith.mulf %76, %84 : vector<8x128xf32>
    %93 = arith.addf %91, %92 : vector<8x128xf32>
    %94 = math.tanh %93 : vector<8x128xf32>
    %95 = arith.mulf %90, %94 : vector<8x128xf32>
    %c16_31 = arith.constant 16 : index
    %c0_32 = arith.constant 0 : index
    %96 = vector.load %arg11[%c16_31, %c0_32] : memref<64x128xf32, #tpu.memory_space<vmem>>, vector<8x128xf32>
    tpu.vector_store %arg11[%c16_31, %c0_32], %95 {strides = array<i32>} : memref<64x128xf32, #tpu.memory_space<vmem>>, vector<8x128xf32>,
    %c24 = arith.constant 24 : index
    %c0_33 = arith.constant 0 : index
    %97 = vector.load %arg10[%c24, %c0_33] : memref<64x512xf32, #tpu.memory_space<vmem>>, vector<8x512xf32>
    %cst_34 = arith.constant dense<0.000000e+00> : vector<8x512xf32>
    %98 = tpu.matmul %95, %7, %cst_34 {dimension_numbers = #tpu.dot_dimension_numbers<[1], [0], [0], [1], [0, 0, 1, 1], [], []>} : vector<8x128xf32>, vector<128x512xf32>, vector<8x512xf32> -> vector<8x512xf32>
    %99 = arith.addf %97, %98 : vector<8x512xf32>
    %100 = vector.extract_strided_slice %99 {offsets = [0, 0], sizes = [8, 128], strides = [1, 1]} : vector<8x512xf32> to vector<8x128xf32>
    %101 = arith.negf %100 : vector<8x128xf32>
    %102 = math.exp %101 : vector<8x128xf32>
    %cst_35 = arith.constant 1.000000e+00 : f32
    %103 = vector.broadcast %cst_35 : f32 to vector<8x128xf32>
    %104 = arith.addf %103, %102 : vector<8x128xf32>
    %105 = arith.divf %103, %104 : vector<8x128xf32>
    %106 = vector.extract_strided_slice %99 {offsets = [0, 128], sizes = [8, 128], strides = [1, 1]} : vector<8x512xf32> to vector<8x128xf32>
    %107 = arith.negf %106 : vector<8x128xf32>
    %108 = math.exp %107 : vector<8x128xf32>
    %cst_36 = arith.constant 1.000000e+00 : f32
    %109 = vector.broadcast %cst_36 : f32 to vector<8x128xf32>
    %110 = arith.addf %109, %108 : vector<8x128xf32>
    %111 = arith.divf %109, %110 : vector<8x128xf32>
    %112 = vector.extract_strided_slice %99 {offsets = [0, 256], sizes = [8, 128], strides = [1, 1]} : vector<8x512xf32> to vector<8x128xf32>
    %113 = math.tanh %112 : vector<8x128xf32>
    %114 = vector.extract_strided_slice %99 {offsets = [0, 384], sizes = [8, 128], strides = [1, 1]} : vector<8x512xf32> to vector<8x128xf32>
    %115 = arith.negf %114 : vector<8x128xf32>
    %116 = math.exp %115 : vector<8x128xf32>
    %cst_37 = arith.constant 1.000000e+00 : f32
    %117 = vector.broadcast %cst_37 : f32 to vector<8x128xf32>
    %118 = arith.addf %117, %116 : vector<8x128xf32>
    %119 = arith.divf %117, %118 : vector<8x128xf32>
    %120 = arith.mulf %111, %93 : vector<8x128xf32>
    %121 = arith.mulf %105, %113 : vector<8x128xf32>
    %122 = arith.addf %120, %121 : vector<8x128xf32>
    %123 = math.tanh %122 : vector<8x128xf32>
    %124 = arith.mulf %119, %123 : vector<8x128xf32>
    %c24_38 = arith.constant 24 : index
    %c0_39 = arith.constant 0 : index
    %125 = vector.load %arg11[%c24_38, %c0_39] : memref<64x128xf32, #tpu.memory_space<vmem>>, vector<8x128xf32>
    tpu.vector_store %arg11[%c24_38, %c0_39], %124 {strides = array<i32>} : memref<64x128xf32, #tpu.memory_space<vmem>>, vector<8x128xf32>,
    %c32 = arith.constant 32 : index
    %c0_40 = arith.constant 0 : index
    %126 = vector.load %arg10[%c32, %c0_40] : memref<64x512xf32, #tpu.memory_space<vmem>>, vector<8x512xf32>
    %cst_41 = arith.constant dense<0.000000e+00> : vector<8x512xf32>
    %127 = tpu.matmul %124, %7, %cst_41 {dimension_numbers = #tpu.dot_dimension_numbers<[1], [0], [0], [1], [0, 0, 1, 1], [], []>} : vector<8x128xf32>, vector<128x512xf32>, vector<8x512xf32> -> vector<8x512xf32>
    %128 = arith.addf %126, %127 : vector<8x512xf32>
    %129 = vector.extract_strided_slice %128 {offsets = [0, 0], sizes = [8, 128], strides = [1, 1]} : vector<8x512xf32> to vector<8x128xf32>
    %130 = arith.negf %129 : vector<8x128xf32>
    %131 = math.exp %130 : vector<8x128xf32>
    %cst_42 = arith.constant 1.000000e+00 : f32
    %132 = vector.broadcast %cst_42 : f32 to vector<8x128xf32>
    %133 = arith.addf %132, %131 : vector<8x128xf32>
    %134 = arith.divf %132, %133 : vector<8x128xf32>
    %135 = vector.extract_strided_slice %128 {offsets = [0, 128], sizes = [8, 128], strides = [1, 1]} : vector<8x512xf32> to vector<8x128xf32>
    %136 = arith.negf %135 : vector<8x128xf32>
    %137 = math.exp %136 : vector<8x128xf32>
    %cst_43 = arith.constant 1.000000e+00 : f32
    %138 = vector.broadcast %cst_43 : f32 to vector<8x128xf32>
    %139 = arith.addf %138, %137 : vector<8x128xf32>
    %140 = arith.divf %138, %139 : vector<8x128xf32>
    %141 = vector.extract_strided_slice %128 {offsets = [0, 256], sizes = [8, 128], strides = [1, 1]} : vector<8x512xf32> to vector<8x128xf32>
    %142 = math.tanh %141 : vector<8x128xf32>
    %143 = vector.extract_strided_slice %128 {offsets = [0, 384], sizes = [8, 128], strides = [1, 1]} : vector<8x512xf32> to vector<8x128xf32>
    %144 = arith.negf %143 : vector<8x128xf32>
    %145 = math.exp %144 : vector<8x128xf32>
    %cst_44 = arith.constant 1.000000e+00 : f32
    %146 = vector.broadcast %cst_44 : f32 to vector<8x128xf32>
    %147 = arith.addf %146, %145 : vector<8x128xf32>
    %148 = arith.divf %146, %147 : vector<8x128xf32>
    %149 = arith.mulf %140, %122 : vector<8x128xf32>
    %150 = arith.mulf %134, %142 : vector<8x128xf32>
    %151 = arith.addf %149, %150 : vector<8x128xf32>
    %152 = math.tanh %151 : vector<8x128xf32>
    %153 = arith.mulf %148, %152 : vector<8x128xf32>
    %c32_45 = arith.constant 32 : index
    %c0_46 = arith.constant 0 : index
    %154 = vector.load %arg11[%c32_45, %c0_46] : memref<64x128xf32, #tpu.memory_space<vmem>>, vector<8x128xf32>
    tpu.vector_store %arg11[%c32_45, %c0_46], %153 {strides = array<i32>} : memref<64x128xf32, #tpu.memory_space<vmem>>, vector<8x128xf32>,
    %c40 = arith.constant 40 : index
    %c0_47 = arith.constant 0 : index
    %155 = vector.load %arg10[%c40, %c0_47] : memref<64x512xf32, #tpu.memory_space<vmem>>, vector<8x512xf32>
    %cst_48 = arith.constant dense<0.000000e+00> : vector<8x512xf32>
    %156 = tpu.matmul %153, %7, %cst_48 {dimension_numbers = #tpu.dot_dimension_numbers<[1], [0], [0], [1], [0, 0, 1, 1], [], []>} : vector<8x128xf32>, vector<128x512xf32>, vector<8x512xf32> -> vector<8x512xf32>
    %157 = arith.addf %155, %156 : vector<8x512xf32>
    %158 = vector.extract_strided_slice %157 {offsets = [0, 0], sizes = [8, 128], strides = [1, 1]} : vector<8x512xf32> to vector<8x128xf32>
    %159 = arith.negf %158 : vector<8x128xf32>
    %160 = math.exp %159 : vector<8x128xf32>
    %cst_49 = arith.constant 1.000000e+00 : f32
    %161 = vector.broadcast %cst_49 : f32 to vector<8x128xf32>
    %162 = arith.addf %161, %160 : vector<8x128xf32>
    %163 = arith.divf %161, %162 : vector<8x128xf32>
    %164 = vector.extract_strided_slice %157 {offsets = [0, 128], sizes = [8, 128], strides = [1, 1]} : vector<8x512xf32> to vector<8x128xf32>
    %165 = arith.negf %164 : vector<8x128xf32>
    %166 = math.exp %165 : vector<8x128xf32>
    %cst_50 = arith.constant 1.000000e+00 : f32
    %167 = vector.broadcast %cst_50 : f32 to vector<8x128xf32>
    %168 = arith.addf %167, %166 : vector<8x128xf32>
    %169 = arith.divf %167, %168 : vector<8x128xf32>
    %170 = vector.extract_strided_slice %157 {offsets = [0, 256], sizes = [8, 128], strides = [1, 1]} : vector<8x512xf32> to vector<8x128xf32>
    %171 = math.tanh %170 : vector<8x128xf32>
    %172 = vector.extract_strided_slice %157 {offsets = [0, 384], sizes = [8, 128], strides = [1, 1]} : vector<8x512xf32> to vector<8x128xf32>
    %173 = arith.negf %172 : vector<8x128xf32>
    %174 = math.exp %173 : vector<8x128xf32>
    %cst_51 = arith.constant 1.000000e+00 : f32
    %175 = vector.broadcast %cst_51 : f32 to vector<8x128xf32>
    %176 = arith.addf %175, %174 : vector<8x128xf32>
    %177 = arith.divf %175, %176 : vector<8x128xf32>
    %178 = arith.mulf %169, %151 : vector<8x128xf32>
    %179 = arith.mulf %163, %171 : vector<8x128xf32>
    %180 = arith.addf %178, %179 : vector<8x128xf32>
    %181 = math.tanh %180 : vector<8x128xf32>
    %182 = arith.mulf %177, %181 : vector<8x128xf32>
    %c40_52 = arith.constant 40 : index
    %c0_53 = arith.constant 0 : index
    %183 = vector.load %arg11[%c40_52, %c0_53] : memref<64x128xf32, #tpu.memory_space<vmem>>, vector<8x128xf32>
    tpu.vector_store %arg11[%c40_52, %c0_53], %182 {strides = array<i32>} : memref<64x128xf32, #tpu.memory_space<vmem>>, vector<8x128xf32>,
    %c48 = arith.constant 48 : index
    %c0_54 = arith.constant 0 : index
    %184 = vector.load %arg10[%c48, %c0_54] : memref<64x512xf32, #tpu.memory_space<vmem>>, vector<8x512xf32>
    %cst_55 = arith.constant dense<0.000000e+00> : vector<8x512xf32>
    %185 = tpu.matmul %182, %7, %cst_55 {dimension_numbers = #tpu.dot_dimension_numbers<[1], [0], [0], [1], [0, 0, 1, 1], [], []>} : vector<8x128xf32>, vector<128x512xf32>, vector<8x512xf32> -> vector<8x512xf32>
    %186 = arith.addf %184, %185 : vector<8x512xf32>
    %187 = vector.extract_strided_slice %186 {offsets = [0, 0], sizes = [8, 128], strides = [1, 1]} : vector<8x512xf32> to vector<8x128xf32>
    %188 = arith.negf %187 : vector<8x128xf32>
    %189 = math.exp %188 : vector<8x128xf32>
    %cst_56 = arith.constant 1.000000e+00 : f32
    %190 = vector.broadcast %cst_56 : f32 to vector<8x128xf32>
    %191 = arith.addf %190, %189 : vector<8x128xf32>
    %192 = arith.divf %190, %191 : vector<8x128xf32>
    %193 = vector.extract_strided_slice %186 {offsets = [0, 128], sizes = [8, 128], strides = [1, 1]} : vector<8x512xf32> to vector<8x128xf32>
    %194 = arith.negf %193 : vector<8x128xf32>
    %195 = math.exp %194 : vector<8x128xf32>
    %cst_57 = arith.constant 1.000000e+00 : f32
    %196 = vector.broadcast %cst_57 : f32 to vector<8x128xf32>
    %197 = arith.addf %196, %195 : vector<8x128xf32>
    %198 = arith.divf %196, %197 : vector<8x128xf32>
    %199 = vector.extract_strided_slice %186 {offsets = [0, 256], sizes = [8, 128], strides = [1, 1]} : vector<8x512xf32> to vector<8x128xf32>
    %200 = math.tanh %199 : vector<8x128xf32>
    %201 = vector.extract_strided_slice %186 {offsets = [0, 384], sizes = [8, 128], strides = [1, 1]} : vector<8x512xf32> to vector<8x128xf32>
    %202 = arith.negf %201 : vector<8x128xf32>
    %203 = math.exp %202 : vector<8x128xf32>
    %cst_58 = arith.constant 1.000000e+00 : f32
    %204 = vector.broadcast %cst_58 : f32 to vector<8x128xf32>
    %205 = arith.addf %204, %203 : vector<8x128xf32>
    %206 = arith.divf %204, %205 : vector<8x128xf32>
    %207 = arith.mulf %198, %180 : vector<8x128xf32>
    %208 = arith.mulf %192, %200 : vector<8x128xf32>
    %209 = arith.addf %207, %208 : vector<8x128xf32>
    %210 = math.tanh %209 : vector<8x128xf32>
    %211 = arith.mulf %206, %210 : vector<8x128xf32>
    %c48_59 = arith.constant 48 : index
    %c0_60 = arith.constant 0 : index
    %212 = vector.load %arg11[%c48_59, %c0_60] : memref<64x128xf32, #tpu.memory_space<vmem>>, vector<8x128xf32>
    tpu.vector_store %arg11[%c48_59, %c0_60], %211 {strides = array<i32>} : memref<64x128xf32, #tpu.memory_space<vmem>>, vector<8x128xf32>,
    %c56 = arith.constant 56 : index
    %c0_61 = arith.constant 0 : index
    %213 = vector.load %arg10[%c56, %c0_61] : memref<64x512xf32, #tpu.memory_space<vmem>>, vector<8x512xf32>
    %cst_62 = arith.constant dense<0.000000e+00> : vector<8x512xf32>
    %214 = tpu.matmul %211, %7, %cst_62 {dimension_numbers = #tpu.dot_dimension_numbers<[1], [0], [0], [1], [0, 0, 1, 1], [], []>} : vector<8x128xf32>, vector<128x512xf32>, vector<8x512xf32> -> vector<8x512xf32>
    %215 = arith.addf %213, %214 : vector<8x512xf32>
    %216 = vector.extract_strided_slice %215 {offsets = [0, 0], sizes = [8, 128], strides = [1, 1]} : vector<8x512xf32> to vector<8x128xf32>
    %217 = arith.negf %216 : vector<8x128xf32>
    %218 = math.exp %217 : vector<8x128xf32>
    %cst_63 = arith.constant 1.000000e+00 : f32
    %219 = vector.broadcast %cst_63 : f32 to vector<8x128xf32>
    %220 = arith.addf %219, %218 : vector<8x128xf32>
    %221 = arith.divf %219, %220 : vector<8x128xf32>
    %222 = vector.extract_strided_slice %215 {offsets = [0, 128], sizes = [8, 128], strides = [1, 1]} : vector<8x512xf32> to vector<8x128xf32>
    %223 = arith.negf %222 : vector<8x128xf32>
    %224 = math.exp %223 : vector<8x128xf32>
    %cst_64 = arith.constant 1.000000e+00 : f32
    %225 = vector.broadcast %cst_64 : f32 to vector<8x128xf32>
    %226 = arith.addf %225, %224 : vector<8x128xf32>
    %227 = arith.divf %225, %226 : vector<8x128xf32>
    %228 = vector.extract_strided_slice %215 {offsets = [0, 256], sizes = [8, 128], strides = [1, 1]} : vector<8x512xf32> to vector<8x128xf32>
    %229 = math.tanh %228 : vector<8x128xf32>
    %230 = vector.extract_strided_slice %215 {offsets = [0, 384], sizes = [8, 128], strides = [1, 1]} : vector<8x512xf32> to vector<8x128xf32>
    %231 = arith.negf %230 : vector<8x128xf32>
    %232 = math.exp %231 : vector<8x128xf32>
    %cst_65 = arith.constant 1.000000e+00 : f32
    %233 = vector.broadcast %cst_65 : f32 to vector<8x128xf32>
    %234 = arith.addf %233, %232 : vector<8x128xf32>
    %235 = arith.divf %233, %234 : vector<8x128xf32>
    %236 = arith.mulf %227, %209 : vector<8x128xf32>
    %237 = arith.mulf %221, %229 : vector<8x128xf32>
    %238 = arith.addf %236, %237 : vector<8x128xf32>
    %239 = math.tanh %238 : vector<8x128xf32>
    %240 = arith.mulf %235, %239 : vector<8x128xf32>
    %c56_66 = arith.constant 56 : index
    %c0_67 = arith.constant 0 : index
    %241 = vector.load %arg11[%c56_66, %c0_67] : memref<64x128xf32, #tpu.memory_space<vmem>>, vector<8x128xf32>
    tpu.vector_store %arg11[%c56_66, %c0_67], %240 {strides = array<i32>} : memref<64x128xf32, #tpu.memory_space<vmem>>, vector<8x128xf32>,
    %c0_68 = arith.constant 0 : index
    %c0_69 = arith.constant 0 : index
    %242 = vector.load %arg11[%c0_68, %c0_69] : memref<64x128xf32, #tpu.memory_space<vmem>>, vector<64x128xf32>
    %c0_70 = arith.constant 0 : index
    %c0_71 = arith.constant 0 : index
    %243 = vector.load %arg4[%c0_70, %c0_71] : memref<128x512xf32, #tpu.memory_space<vmem>>, vector<128x512xf32>
    %cst_72 = arith.constant dense<0.000000e+00> : vector<64x512xf32>
    %244 = tpu.matmul %242, %243, %cst_72 {dimension_numbers = #tpu.dot_dimension_numbers<[1], [0], [0], [1], [0, 0, 1, 1], [], []>} : vector<64x128xf32>, vector<128x512xf32>, vector<64x512xf32> -> vector<64x512xf32>
    %c0_73 = arith.constant 0 : index
    %c0_74 = arith.constant 0 : index
    %245 = vector.load %arg6[%c0_73, %c0_74] : memref<1x512xf32, #tpu.memory_space<vmem>>, vector<1x512xf32>
    %246 = vector.broadcast %245 : vector<1x512xf32> to vector<64x512xf32>
    %247 = arith.addf %244, %246 : vector<64x512xf32>
    %c0_75 = arith.constant 0 : index
    %c0_76 = arith.constant 0 : index
    %248 = vector.load %arg10[%c0_75, %c0_76] : memref<64x512xf32, #tpu.memory_space<vmem>>, vector<64x512xf32>
    tpu.vector_store %arg10[%c0_75, %c0_76], %247 {strides = array<i32>} : memref<64x512xf32, #tpu.memory_space<vmem>>, vector<64x512xf32>,
    %c0_77 = arith.constant 0 : index
    %c0_78 = arith.constant 0 : index
    %249 = vector.load %arg5[%c0_77, %c0_78] : memref<128x512xf32, #tpu.memory_space<vmem>>, vector<128x512xf32>
    %cst_79 = arith.constant 0.000000e+00 : f32
    %250 = vector.broadcast %cst_79 : f32 to vector<8x128xf32>
    %cst_80 = arith.constant 0.000000e+00 : f32
    %251 = vector.broadcast %cst_80 : f32 to vector<8x128xf32>
    %c0_81 = arith.constant 0 : index
    %c0_82 = arith.constant 0 : index
    %252 = vector.load %arg10[%c0_81, %c0_82] : memref<64x512xf32, #tpu.memory_space<vmem>>, vector<8x512xf32>
    %cst_83 = arith.constant dense<0.000000e+00> : vector<8x512xf32>
    %253 = tpu.matmul %250, %249, %cst_83 {dimension_numbers = #tpu.dot_dimension_numbers<[1], [0], [0], [1], [0, 0, 1, 1], [], []>} : vector<8x128xf32>, vector<128x512xf32>, vector<8x512xf32> -> vector<8x512xf32>
    %254 = arith.addf %252, %253 : vector<8x512xf32>
    %255 = vector.extract_strided_slice %254 {offsets = [0, 0], sizes = [8, 128], strides = [1, 1]} : vector<8x512xf32> to vector<8x128xf32>
    %256 = arith.negf %255 : vector<8x128xf32>
    %257 = math.exp %256 : vector<8x128xf32>
    %cst_84 = arith.constant 1.000000e+00 : f32
    %258 = vector.broadcast %cst_84 : f32 to vector<8x128xf32>
    %259 = arith.addf %258, %257 : vector<8x128xf32>
    %260 = arith.divf %258, %259 : vector<8x128xf32>
    %261 = vector.extract_strided_slice %254 {offsets = [0, 128], sizes = [8, 128], strides = [1, 1]} : vector<8x512xf32> to vector<8x128xf32>
    %262 = arith.negf %261 : vector<8x128xf32>
    %263 = math.exp %262 : vector<8x128xf32>
    %cst_85 = arith.constant 1.000000e+00 : f32
    %264 = vector.broadcast %cst_85 : f32 to vector<8x128xf32>
    %265 = arith.addf %264, %263 : vector<8x128xf32>
    %266 = arith.divf %264, %265 : vector<8x128xf32>
    %267 = vector.extract_strided_slice %254 {offsets = [0, 256], sizes = [8, 128], strides = [1, 1]} : vector<8x512xf32> to vector<8x128xf32>
    %268 = math.tanh %267 : vector<8x128xf32>
    %269 = vector.extract_strided_slice %254 {offsets = [0, 384], sizes = [8, 128], strides = [1, 1]} : vector<8x512xf32> to vector<8x128xf32>
    %270 = arith.negf %269 : vector<8x128xf32>
    %271 = math.exp %270 : vector<8x128xf32>
    %cst_86 = arith.constant 1.000000e+00 : f32
    %272 = vector.broadcast %cst_86 : f32 to vector<8x128xf32>
    %273 = arith.addf %272, %271 : vector<8x128xf32>
    %274 = arith.divf %272, %273 : vector<8x128xf32>
    %275 = arith.mulf %266, %251 : vector<8x128xf32>
    %276 = arith.mulf %260, %268 : vector<8x128xf32>
    %277 = arith.addf %275, %276 : vector<8x128xf32>
    %278 = math.tanh %277 : vector<8x128xf32>
    %279 = arith.mulf %274, %278 : vector<8x128xf32>
    %c8_87 = arith.constant 8 : index
    %c0_88 = arith.constant 0 : index
    %280 = vector.load %arg10[%c8_87, %c0_88] : memref<64x512xf32, #tpu.memory_space<vmem>>, vector<8x512xf32>
    %cst_89 = arith.constant dense<0.000000e+00> : vector<8x512xf32>
    %281 = tpu.matmul %279, %249, %cst_89 {dimension_numbers = #tpu.dot_dimension_numbers<[1], [0], [0], [1], [0, 0, 1, 1], [], []>} : vector<8x128xf32>, vector<128x512xf32>, vector<8x512xf32> -> vector<8x512xf32>
    %282 = arith.addf %280, %281 : vector<8x512xf32>
    %283 = vector.extract_strided_slice %282 {offsets = [0, 0], sizes = [8, 128], strides = [1, 1]} : vector<8x512xf32> to vector<8x128xf32>
    %284 = arith.negf %283 : vector<8x128xf32>
    %285 = math.exp %284 : vector<8x128xf32>
    %cst_90 = arith.constant 1.000000e+00 : f32
    %286 = vector.broadcast %cst_90 : f32 to vector<8x128xf32>
    %287 = arith.addf %286, %285 : vector<8x128xf32>
    %288 = arith.divf %286, %287 : vector<8x128xf32>
    %289 = vector.extract_strided_slice %282 {offsets = [0, 128], sizes = [8, 128], strides = [1, 1]} : vector<8x512xf32> to vector<8x128xf32>
    %290 = arith.negf %289 : vector<8x128xf32>
    %291 = math.exp %290 : vector<8x128xf32>
    %cst_91 = arith.constant 1.000000e+00 : f32
    %292 = vector.broadcast %cst_91 : f32 to vector<8x128xf32>
    %293 = arith.addf %292, %291 : vector<8x128xf32>
    %294 = arith.divf %292, %293 : vector<8x128xf32>
    %295 = vector.extract_strided_slice %282 {offsets = [0, 256], sizes = [8, 128], strides = [1, 1]} : vector<8x512xf32> to vector<8x128xf32>
    %296 = math.tanh %295 : vector<8x128xf32>
    %297 = vector.extract_strided_slice %282 {offsets = [0, 384], sizes = [8, 128], strides = [1, 1]} : vector<8x512xf32> to vector<8x128xf32>
    %298 = arith.negf %297 : vector<8x128xf32>
    %299 = math.exp %298 : vector<8x128xf32>
    %cst_92 = arith.constant 1.000000e+00 : f32
    %300 = vector.broadcast %cst_92 : f32 to vector<8x128xf32>
    %301 = arith.addf %300, %299 : vector<8x128xf32>
    %302 = arith.divf %300, %301 : vector<8x128xf32>
    %303 = arith.mulf %294, %277 : vector<8x128xf32>
    %304 = arith.mulf %288, %296 : vector<8x128xf32>
    %305 = arith.addf %303, %304 : vector<8x128xf32>
    %306 = math.tanh %305 : vector<8x128xf32>
    %307 = arith.mulf %302, %306 : vector<8x128xf32>
    %c16_93 = arith.constant 16 : index
    %c0_94 = arith.constant 0 : index
    %308 = vector.load %arg10[%c16_93, %c0_94] : memref<64x512xf32, #tpu.memory_space<vmem>>, vector<8x512xf32>
    %cst_95 = arith.constant dense<0.000000e+00> : vector<8x512xf32>
    %309 = tpu.matmul %307, %249, %cst_95 {dimension_numbers = #tpu.dot_dimension_numbers<[1], [0], [0], [1], [0, 0, 1, 1], [], []>} : vector<8x128xf32>, vector<128x512xf32>, vector<8x512xf32> -> vector<8x512xf32>
    %310 = arith.addf %308, %309 : vector<8x512xf32>
    %311 = vector.extract_strided_slice %310 {offsets = [0, 0], sizes = [8, 128], strides = [1, 1]} : vector<8x512xf32> to vector<8x128xf32>
    %312 = arith.negf %311 : vector<8x128xf32>
    %313 = math.exp %312 : vector<8x128xf32>
    %cst_96 = arith.constant 1.000000e+00 : f32
    %314 = vector.broadcast %cst_96 : f32 to vector<8x128xf32>
    %315 = arith.addf %314, %313 : vector<8x128xf32>
    %316 = arith.divf %314, %315 : vector<8x128xf32>
    %317 = vector.extract_strided_slice %310 {offsets = [0, 128], sizes = [8, 128], strides = [1, 1]} : vector<8x512xf32> to vector<8x128xf32>
    %318 = arith.negf %317 : vector<8x128xf32>
    %319 = math.exp %318 : vector<8x128xf32>
    %cst_97 = arith.constant 1.000000e+00 : f32
    %320 = vector.broadcast %cst_97 : f32 to vector<8x128xf32>
    %321 = arith.addf %320, %319 : vector<8x128xf32>
    %322 = arith.divf %320, %321 : vector<8x128xf32>
    %323 = vector.extract_strided_slice %310 {offsets = [0, 256], sizes = [8, 128], strides = [1, 1]} : vector<8x512xf32> to vector<8x128xf32>
    %324 = math.tanh %323 : vector<8x128xf32>
    %325 = vector.extract_strided_slice %310 {offsets = [0, 384], sizes = [8, 128], strides = [1, 1]} : vector<8x512xf32> to vector<8x128xf32>
    %326 = arith.negf %325 : vector<8x128xf32>
    %327 = math.exp %326 : vector<8x128xf32>
    %cst_98 = arith.constant 1.000000e+00 : f32
    %328 = vector.broadcast %cst_98 : f32 to vector<8x128xf32>
    %329 = arith.addf %328, %327 : vector<8x128xf32>
    %330 = arith.divf %328, %329 : vector<8x128xf32>
    %331 = arith.mulf %322, %305 : vector<8x128xf32>
    %332 = arith.mulf %316, %324 : vector<8x128xf32>
    %333 = arith.addf %331, %332 : vector<8x128xf32>
    %334 = math.tanh %333 : vector<8x128xf32>
    %335 = arith.mulf %330, %334 : vector<8x128xf32>
    %c24_99 = arith.constant 24 : index
    %c0_100 = arith.constant 0 : index
    %336 = vector.load %arg10[%c24_99, %c0_100] : memref<64x512xf32, #tpu.memory_space<vmem>>, vector<8x512xf32>
    %cst_101 = arith.constant dense<0.000000e+00> : vector<8x512xf32>
    %337 = tpu.matmul %335, %249, %cst_101 {dimension_numbers = #tpu.dot_dimension_numbers<[1], [0], [0], [1], [0, 0, 1, 1], [], []>} : vector<8x128xf32>, vector<128x512xf32>, vector<8x512xf32> -> vector<8x512xf32>
    %338 = arith.addf %336, %337 : vector<8x512xf32>
    %339 = vector.extract_strided_slice %338 {offsets = [0, 0], sizes = [8, 128], strides = [1, 1]} : vector<8x512xf32> to vector<8x128xf32>
    %340 = arith.negf %339 : vector<8x128xf32>
    %341 = math.exp %340 : vector<8x128xf32>
    %cst_102 = arith.constant 1.000000e+00 : f32
    %342 = vector.broadcast %cst_102 : f32 to vector<8x128xf32>
    %343 = arith.addf %342, %341 : vector<8x128xf32>
    %344 = arith.divf %342, %343 : vector<8x128xf32>
    %345 = vector.extract_strided_slice %338 {offsets = [0, 128], sizes = [8, 128], strides = [1, 1]} : vector<8x512xf32> to vector<8x128xf32>
    %346 = arith.negf %345 : vector<8x128xf32>
    %347 = math.exp %346 : vector<8x128xf32>
    %cst_103 = arith.constant 1.000000e+00 : f32
    %348 = vector.broadcast %cst_103 : f32 to vector<8x128xf32>
    %349 = arith.addf %348, %347 : vector<8x128xf32>
    %350 = arith.divf %348, %349 : vector<8x128xf32>
    %351 = vector.extract_strided_slice %338 {offsets = [0, 256], sizes = [8, 128], strides = [1, 1]} : vector<8x512xf32> to vector<8x128xf32>
    %352 = math.tanh %351 : vector<8x128xf32>
    %353 = vector.extract_strided_slice %338 {offsets = [0, 384], sizes = [8, 128], strides = [1, 1]} : vector<8x512xf32> to vector<8x128xf32>
    %354 = arith.negf %353 : vector<8x128xf32>
    %355 = math.exp %354 : vector<8x128xf32>
    %cst_104 = arith.constant 1.000000e+00 : f32
    %356 = vector.broadcast %cst_104 : f32 to vector<8x128xf32>
    %357 = arith.addf %356, %355 : vector<8x128xf32>
    %358 = arith.divf %356, %357 : vector<8x128xf32>
    %359 = arith.mulf %350, %333 : vector<8x128xf32>
    %360 = arith.mulf %344, %352 : vector<8x128xf32>
    %361 = arith.addf %359, %360 : vector<8x128xf32>
    %362 = math.tanh %361 : vector<8x128xf32>
    %363 = arith.mulf %358, %362 : vector<8x128xf32>
    %c32_105 = arith.constant 32 : index
    %c0_106 = arith.constant 0 : index
    %364 = vector.load %arg10[%c32_105, %c0_106] : memref<64x512xf32, #tpu.memory_space<vmem>>, vector<8x512xf32>
    %cst_107 = arith.constant dense<0.000000e+00> : vector<8x512xf32>
    %365 = tpu.matmul %363, %249, %cst_107 {dimension_numbers = #tpu.dot_dimension_numbers<[1], [0], [0], [1], [0, 0, 1, 1], [], []>} : vector<8x128xf32>, vector<128x512xf32>, vector<8x512xf32> -> vector<8x512xf32>
    %366 = arith.addf %364, %365 : vector<8x512xf32>
    %367 = vector.extract_strided_slice %366 {offsets = [0, 0], sizes = [8, 128], strides = [1, 1]} : vector<8x512xf32> to vector<8x128xf32>
    %368 = arith.negf %367 : vector<8x128xf32>
    %369 = math.exp %368 : vector<8x128xf32>
    %cst_108 = arith.constant 1.000000e+00 : f32
    %370 = vector.broadcast %cst_108 : f32 to vector<8x128xf32>
    %371 = arith.addf %370, %369 : vector<8x128xf32>
    %372 = arith.divf %370, %371 : vector<8x128xf32>
    %373 = vector.extract_strided_slice %366 {offsets = [0, 128], sizes = [8, 128], strides = [1, 1]} : vector<8x512xf32> to vector<8x128xf32>
    %374 = arith.negf %373 : vector<8x128xf32>
    %375 = math.exp %374 : vector<8x128xf32>
    %cst_109 = arith.constant 1.000000e+00 : f32
    %376 = vector.broadcast %cst_109 : f32 to vector<8x128xf32>
    %377 = arith.addf %376, %375 : vector<8x128xf32>
    %378 = arith.divf %376, %377 : vector<8x128xf32>
    %379 = vector.extract_strided_slice %366 {offsets = [0, 256], sizes = [8, 128], strides = [1, 1]} : vector<8x512xf32> to vector<8x128xf32>
    %380 = math.tanh %379 : vector<8x128xf32>
    %381 = vector.extract_strided_slice %366 {offsets = [0, 384], sizes = [8, 128], strides = [1, 1]} : vector<8x512xf32> to vector<8x128xf32>
    %382 = arith.negf %381 : vector<8x128xf32>
    %383 = math.exp %382 : vector<8x128xf32>
    %cst_110 = arith.constant 1.000000e+00 : f32
    %384 = vector.broadcast %cst_110 : f32 to vector<8x128xf32>
    %385 = arith.addf %384, %383 : vector<8x128xf32>
    %386 = arith.divf %384, %385 : vector<8x128xf32>
    %387 = arith.mulf %378, %361 : vector<8x128xf32>
    %388 = arith.mulf %372, %380 : vector<8x128xf32>
    %389 = arith.addf %387, %388 : vector<8x128xf32>
    %390 = math.tanh %389 : vector<8x128xf32>
    %391 = arith.mulf %386, %390 : vector<8x128xf32>
    %c40_111 = arith.constant 40 : index
    %c0_112 = arith.constant 0 : index
    %392 = vector.load %arg10[%c40_111, %c0_112] : memref<64x512xf32, #tpu.memory_space<vmem>>, vector<8x512xf32>
    %cst_113 = arith.constant dense<0.000000e+00> : vector<8x512xf32>
    %393 = tpu.matmul %391, %249, %cst_113 {dimension_numbers = #tpu.dot_dimension_numbers<[1], [0], [0], [1], [0, 0, 1, 1], [], []>} : vector<8x128xf32>, vector<128x512xf32>, vector<8x512xf32> -> vector<8x512xf32>
    %394 = arith.addf %392, %393 : vector<8x512xf32>
    %395 = vector.extract_strided_slice %394 {offsets = [0, 0], sizes = [8, 128], strides = [1, 1]} : vector<8x512xf32> to vector<8x128xf32>
    %396 = arith.negf %395 : vector<8x128xf32>
    %397 = math.exp %396 : vector<8x128xf32>
    %cst_114 = arith.constant 1.000000e+00 : f32
    %398 = vector.broadcast %cst_114 : f32 to vector<8x128xf32>
    %399 = arith.addf %398, %397 : vector<8x128xf32>
    %400 = arith.divf %398, %399 : vector<8x128xf32>
    %401 = vector.extract_strided_slice %394 {offsets = [0, 128], sizes = [8, 128], strides = [1, 1]} : vector<8x512xf32> to vector<8x128xf32>
    %402 = arith.negf %401 : vector<8x128xf32>
    %403 = math.exp %402 : vector<8x128xf32>
    %cst_115 = arith.constant 1.000000e+00 : f32
    %404 = vector.broadcast %cst_115 : f32 to vector<8x128xf32>
    %405 = arith.addf %404, %403 : vector<8x128xf32>
    %406 = arith.divf %404, %405 : vector<8x128xf32>
    %407 = vector.extract_strided_slice %394 {offsets = [0, 256], sizes = [8, 128], strides = [1, 1]} : vector<8x512xf32> to vector<8x128xf32>
    %408 = math.tanh %407 : vector<8x128xf32>
    %409 = vector.extract_strided_slice %394 {offsets = [0, 384], sizes = [8, 128], strides = [1, 1]} : vector<8x512xf32> to vector<8x128xf32>
    %410 = arith.negf %409 : vector<8x128xf32>
    %411 = math.exp %410 : vector<8x128xf32>
    %cst_116 = arith.constant 1.000000e+00 : f32
    %412 = vector.broadcast %cst_116 : f32 to vector<8x128xf32>
    %413 = arith.addf %412, %411 : vector<8x128xf32>
    %414 = arith.divf %412, %413 : vector<8x128xf32>
    %415 = arith.mulf %406, %389 : vector<8x128xf32>
    %416 = arith.mulf %400, %408 : vector<8x128xf32>
    %417 = arith.addf %415, %416 : vector<8x128xf32>
    %418 = math.tanh %417 : vector<8x128xf32>
    %419 = arith.mulf %414, %418 : vector<8x128xf32>
    %c48_117 = arith.constant 48 : index
    %c0_118 = arith.constant 0 : index
    %420 = vector.load %arg10[%c48_117, %c0_118] : memref<64x512xf32, #tpu.memory_space<vmem>>, vector<8x512xf32>
    %cst_119 = arith.constant dense<0.000000e+00> : vector<8x512xf32>
    %421 = tpu.matmul %419, %249, %cst_119 {dimension_numbers = #tpu.dot_dimension_numbers<[1], [0], [0], [1], [0, 0, 1, 1], [], []>} : vector<8x128xf32>, vector<128x512xf32>, vector<8x512xf32> -> vector<8x512xf32>
    %422 = arith.addf %420, %421 : vector<8x512xf32>
    %423 = vector.extract_strided_slice %422 {offsets = [0, 0], sizes = [8, 128], strides = [1, 1]} : vector<8x512xf32> to vector<8x128xf32>
    %424 = arith.negf %423 : vector<8x128xf32>
    %425 = math.exp %424 : vector<8x128xf32>
    %cst_120 = arith.constant 1.000000e+00 : f32
    %426 = vector.broadcast %cst_120 : f32 to vector<8x128xf32>
    %427 = arith.addf %426, %425 : vector<8x128xf32>
    %428 = arith.divf %426, %427 : vector<8x128xf32>
    %429 = vector.extract_strided_slice %422 {offsets = [0, 128], sizes = [8, 128], strides = [1, 1]} : vector<8x512xf32> to vector<8x128xf32>
    %430 = arith.negf %429 : vector<8x128xf32>
    %431 = math.exp %430 : vector<8x128xf32>
    %cst_121 = arith.constant 1.000000e+00 : f32
    %432 = vector.broadcast %cst_121 : f32 to vector<8x128xf32>
    %433 = arith.addf %432, %431 : vector<8x128xf32>
    %434 = arith.divf %432, %433 : vector<8x128xf32>
    %435 = vector.extract_strided_slice %422 {offsets = [0, 256], sizes = [8, 128], strides = [1, 1]} : vector<8x512xf32> to vector<8x128xf32>
    %436 = math.tanh %435 : vector<8x128xf32>
    %437 = vector.extract_strided_slice %422 {offsets = [0, 384], sizes = [8, 128], strides = [1, 1]} : vector<8x512xf32> to vector<8x128xf32>
    %438 = arith.negf %437 : vector<8x128xf32>
    %439 = math.exp %438 : vector<8x128xf32>
    %cst_122 = arith.constant 1.000000e+00 : f32
    %440 = vector.broadcast %cst_122 : f32 to vector<8x128xf32>
    %441 = arith.addf %440, %439 : vector<8x128xf32>
    %442 = arith.divf %440, %441 : vector<8x128xf32>
    %443 = arith.mulf %434, %417 : vector<8x128xf32>
    %444 = arith.mulf %428, %436 : vector<8x128xf32>
    %445 = arith.addf %443, %444 : vector<8x128xf32>
    %446 = math.tanh %445 : vector<8x128xf32>
    %447 = arith.mulf %442, %446 : vector<8x128xf32>
    %c56_123 = arith.constant 56 : index
    %c0_124 = arith.constant 0 : index
    %448 = vector.load %arg10[%c56_123, %c0_124] : memref<64x512xf32, #tpu.memory_space<vmem>>, vector<8x512xf32>
    %cst_125 = arith.constant dense<0.000000e+00> : vector<8x512xf32>
    %449 = tpu.matmul %447, %249, %cst_125 {dimension_numbers = #tpu.dot_dimension_numbers<[1], [0], [0], [1], [0, 0, 1, 1], [], []>} : vector<8x128xf32>, vector<128x512xf32>, vector<8x512xf32> -> vector<8x512xf32>
    %450 = arith.addf %448, %449 : vector<8x512xf32>
    %451 = vector.extract_strided_slice %450 {offsets = [0, 0], sizes = [8, 128], strides = [1, 1]} : vector<8x512xf32> to vector<8x128xf32>
    %452 = arith.negf %451 : vector<8x128xf32>
    %453 = math.exp %452 : vector<8x128xf32>
    %cst_126 = arith.constant 1.000000e+00 : f32
    %454 = vector.broadcast %cst_126 : f32 to vector<8x128xf32>
    %455 = arith.addf %454, %453 : vector<8x128xf32>
    %456 = arith.divf %454, %455 : vector<8x128xf32>
    %457 = vector.extract_strided_slice %450 {offsets = [0, 128], sizes = [8, 128], strides = [1, 1]} : vector<8x512xf32> to vector<8x128xf32>
    %458 = arith.negf %457 : vector<8x128xf32>
    %459 = math.exp %458 : vector<8x128xf32>
    %cst_127 = arith.constant 1.000000e+00 : f32
    %460 = vector.broadcast %cst_127 : f32 to vector<8x128xf32>
    %461 = arith.addf %460, %459 : vector<8x128xf32>
    %462 = arith.divf %460, %461 : vector<8x128xf32>
    %463 = vector.extract_strided_slice %450 {offsets = [0, 256], sizes = [8, 128], strides = [1, 1]} : vector<8x512xf32> to vector<8x128xf32>
    %464 = math.tanh %463 : vector<8x128xf32>
    %465 = vector.extract_strided_slice %450 {offsets = [0, 384], sizes = [8, 128], strides = [1, 1]} : vector<8x512xf32> to vector<8x128xf32>
    %466 = arith.negf %465 : vector<8x128xf32>
    %467 = math.exp %466 : vector<8x128xf32>
    %cst_128 = arith.constant 1.000000e+00 : f32
    %468 = vector.broadcast %cst_128 : f32 to vector<8x128xf32>
    %469 = arith.addf %468, %467 : vector<8x128xf32>
    %470 = arith.divf %468, %469 : vector<8x128xf32>
    %471 = arith.mulf %462, %445 : vector<8x128xf32>
    %472 = arith.mulf %456, %464 : vector<8x128xf32>
    %473 = arith.addf %471, %472 : vector<8x128xf32>
    %474 = math.tanh %473 : vector<8x128xf32>
    %475 = arith.mulf %470, %474 : vector<8x128xf32>
    %c0_129 = arith.constant 0 : index
    %c0_130 = arith.constant 0 : index
    %476 = vector.load %arg7[%c0_129, %c0_130] : memref<128x128xf32, #tpu.memory_space<vmem>>, vector<128x128xf32>
    %cst_131 = arith.constant dense<0.000000e+00> : vector<8x128xf32>
    %477 = tpu.matmul %475, %476, %cst_131 {dimension_numbers = #tpu.dot_dimension_numbers<[1], [0], [0], [1], [0, 0, 1, 1], [], []>} : vector<8x128xf32>, vector<128x128xf32>, vector<8x128xf32> -> vector<8x128xf32>
    %c0_132 = arith.constant 0 : index
    %c0_133 = arith.constant 0 : index
    %478 = vector.load %arg8[%c0_132, %c0_133] : memref<1x128xf32, #tpu.memory_space<vmem>>, vector<1x128xf32>
    %479 = vector.broadcast %478 : vector<1x128xf32> to vector<8x128xf32>
    %480 = arith.addf %477, %479 : vector<8x128xf32>
    %cst_134 = arith.constant dense<0xFF800000> : vector<8xf32>
    %481 = vector.multi_reduction <maximumf>, %480, %cst_134 [1] : vector<8x128xf32> to vector<8xf32>
    %482 = vector.shape_cast %481 : vector<8xf32> to vector<8x1xf32>
    %483 = vector.broadcast %482 : vector<8x1xf32> to vector<8x128xf32>
    %484 = arith.subf %480, %483 : vector<8x128xf32>
    %485 = math.exp %484 : vector<8x128xf32>
    %cst_135 = arith.constant dense<0.000000e+00> : vector<8xf32>
    %486 = vector.multi_reduction <add>, %485, %cst_135 [1] : vector<8x128xf32> to vector<8xf32>
    %487 = vector.shape_cast %486 : vector<8xf32> to vector<8x1xf32>
    %488 = math.log %487 : vector<8x1xf32>
    %489 = vector.broadcast %488 : vector<8x1xf32> to vector<8x128xf32>
    %490 = arith.subf %484, %489 : vector<8x128xf32>
    %c0_136 = arith.constant 0 : index
    %c0_137 = arith.constant 0 : index
    %491 = vector.load %arg9[%c0_136, %c0_137] : memref<8x128xf32, #tpu.memory_space<vmem>>, vector<8x128xf32>
    tpu.vector_store %arg9[%c0_136, %c0_137], %490 {strides = array<i32>} : memref<8x128xf32, #tpu.memory_space<vmem>>, vector<8x128xf32>,
    return
  }
}

</mosaic_0001>

<llo_original>
// kernel: tpu_custom_call.1
$region0: #{tpu_custom_call.1}
  #allocation0 [shape = 'u32[]', space=smem, size = 0x4, offset = 0x4, fixed_abs, tag = 'smem constant byte address 0x4 - core index']
  #allocation1 [shape = 'u32[144,128]{1,0:T(1,128)}', space=vmem, size = 0x12000, scoped, tag = 'internal scratch']
  #allocation2 [shape = 'f32[64,512]{1,0:T(8,128)}', space=vmem, size = 0x20000, scoped, tag = 'scratch operand']
  #allocation3 [shape = 'f32[64,128]{1,0:T(8,128)}', space=vmem, size = 0x8000, scoped, tag = 'scratch operand']
  %s0 = inlined_call_operand.hbm [shape: f32[64,128], index: 0, kind: input, shape index: {}]
  %s1 = inlined_call_operand.hbm [shape: f32[128,512], index: 1, kind: input, shape index: {}]
  %s2 = inlined_call_operand.hbm [shape: f32[128,512], index: 2, kind: input, shape index: {}]
  %s3 = inlined_call_operand.vmem [shape: f32[1,512], index: 3, kind: input, shape index: {}]
  %s4 = inlined_call_operand.hbm [shape: f32[128,512], index: 4, kind: input, shape index: {}]
  %s5 = inlined_call_operand.hbm [shape: f32[128,512], index: 5, kind: input, shape index: {}]
  %s6 = inlined_call_operand.vmem [shape: f32[1,512], index: 6, kind: input, shape index: {}]
  %s7 = inlined_call_operand.hbm [shape: f32[128,128], index: 7, kind: input, shape index: {}]
  %s8 = inlined_call_operand.vmem [shape: f32[1,128], index: 8, kind: input, shape index: {}]
  %s9 = inlined_call_operand.hbm [shape: f32[8,128], index: 9, kind: output, shape index: {}]
  %s10 = sld [smem:[#allocation0]]
  $region70: #{tpu_custom_call.1} parent=0
    _
  %s12 = ssub.s32 1, %s10
  %s13 = scalar_select 0, %s12, %s10
  $region1: #{tpu_custom_call.1} parent=0
    #allocation4 [shape = 'u8[32768]{0}', space=vmem, size = 0x8000, scoped, tag = 'input window, operand 0, single buffered']
    #allocation5 [shape = 's32[1]{0}', space=sflag, size = 0x4, scoped, tag = 'scoped memory for tpu_custom_call.1']
    #allocation6 [shape = 's32[1]{0}', space=sflag, size = 0x4, scoped, tag = 'scoped memory for tpu_custom_call.1']
    #allocation7 [shape = 'u8[262144]{0}', space=vmem, size = 0x40000, scoped, tag = 'input window, operand 1, single buffered']
    #allocation8 [shape = 's32[1]{0}', space=sflag, size = 0x4, scoped, tag = 'scoped memory for tpu_custom_call.1']
    #allocation9 [shape = 'u8[262144]{0}', space=vmem, size = 0x40000, scoped, tag = 'input window, operand 2, single buffered']
    #allocation10 [shape = 'u8[262144]{0}', space=vmem, size = 0x40000, scoped, tag = 'input window, operand 4, single buffered']
    #allocation11 [shape = 's32[1]{0}', space=sflag, size = 0x4, scoped, tag = 'scoped memory for tpu_custom_call.1']
    #allocation12 [shape = 'u8[262144]{0}', space=vmem, size = 0x40000, scoped, tag = 'input window, operand 5, single buffered']
    #allocation13 [shape = 'u8[65536]{0}', space=vmem, size = 0x10000, scoped, tag = 'input window, operand 7, single buffered']
    #allocation14 [shape = 's32[1]{0}', space=sflag, size = 0x4, scoped, tag = 'scoped memory for tpu_custom_call.1']
    #allocation15 [shape = 'u8[4096]{0}', space=vmem, size = 0x1000, scoped, tag = 'output window, operand 0, single buffered']
    %14 = vsyncpa [#allocation5], 0
    %15 = vsyncpa [#allocation8], 0
    %16 = vsyncpa [#allocation11], 0
    %17 = vsyncpa [#allocation14], 0
    %18 = vsyncpa [#allocation6], 0
    // Predicated region
    $region2: #{tpu_custom_call.1} parent=1 // pred_check
      _
    $region3: #{tpu_custom_call.1} parent=1 // pred_check_branch
      %20 = sbr.rel (0) target = $region5
    $region4: #{tpu_custom_call.1} parent=1 // pred_region
      %s22 = ssub.s32 1024, 1024
      %23 = vsyncadd [#allocation5], %s22
      %s24 = sshll.u32 [#allocation4], 4
      %s25 = int_to_ptr.vmem [resolvable:$true] %s24
      %30 = dma.hbm_to_vmem [thread:$0]  %s0, 1024, %s25, [#allocation5], 128, 128, 8
    $region5: #{tpu_custom_call.1} parent=1 // pred_fallthru
      _
    // Predicated region
    $region6: #{tpu_custom_call.1} parent=1 // pred_check
      _
    $region7: #{tpu_custom_call.1} parent=1 // pred_check_branch
      %32 = sbr.rel (0) target = $region9
    $region8: #{tpu_custom_call.1} parent=1 // pred_region
      %s34 = ssub.s32 8192, 8192
      %35 = vsyncadd [#allocation8], %s34
      %s36 = sshll.u32 [#allocation7], 4
      %s37 = int_to_ptr.vmem [resolvable:$true] %s36
      %42 = dma.hbm_to_vmem [thread:$0]  %s1, 8192, %s37, [#allocation8], 512, 512, 32
    $region9: #{tpu_custom_call.1} parent=1 // pred_fallthru
      _
    // Predicated region
    $region10: #{tpu_custom_call.1} parent=1 // pred_check
      _
    $region11: #{tpu_custom_call.1} parent=1 // pred_check_branch
      %44 = sbr.rel (0) target = $region13
    $region12: #{tpu_custom_call.1} parent=1 // pred_region
      %s46 = ssub.s32 8192, 8192
      %47 = vsyncadd [#allocation8], %s46
      %s48 = sshll.u32 [#allocation9], 4
      %s49 = int_to_ptr.vmem [resolvable:$true] %s48
      %54 = dma.hbm_to_vmem [thread:$0]  %s2, 8192, %s49, [#allocation8], 512, 512, 32
    $region13: #{tpu_custom_call.1} parent=1 // pred_fallthru
      _
    // Predicated region
    $region14: #{tpu_custom_call.1} parent=1 // pred_check
      _
    $region15: #{tpu_custom_call.1} parent=1 // pred_check_branch
      %56 = sbr.rel (0) target = $region17
    $region16: #{tpu_custom_call.1} parent=1 // pred_region
      _
    $region17: #{tpu_custom_call.1} parent=1 // pred_fallthru
      _
    // Predicated region
    $region18: #{tpu_custom_call.1} parent=1 // pred_check
      _
    $region19: #{tpu_custom_call.1} parent=1 // pred_check_branch
      %58 = sbr.rel (0) target = $region21
    $region20: #{tpu_custom_call.1} parent=1 // pred_region
      %s60 = ssub.s32 8192, 8192
      %61 = vsyncadd [#allocation11], %s60
      %s62 = sshll.u32 [#allocation10], 4
      %s63 = int_to_ptr.vmem [resolvable:$true] %s62
      %68 = dma.hbm_to_vmem [thread:$0]  %s4, 8192, %s63, [#allocation11], 512, 512, 32
    $region21: #{tpu_custom_call.1} parent=1 // pred_fallthru
      _
    // Predicated region
    $region22: #{tpu_custom_call.1} parent=1 // pred_check
      _
    $region23: #{tpu_custom_call.1} parent=1 // pred_check_branch
      %70 = sbr.rel (0) target = $region25
    $region24: #{tpu_custom_call.1} parent=1 // pred_region
      %s72 = ssub.s32 8192, 8192
      %73 = vsyncadd [#allocation11], %s72
      %s74 = sshll.u32 [#allocation12], 4
      %s75 = int_to_ptr.vmem [resolvable:$true] %s74
      %80 = dma.hbm_to_vmem [thread:$0]  %s5, 8192, %s75, [#allocation11], 512, 512, 32
    $region25: #{tpu_custom_call.1} parent=1 // pred_fallthru
      _
    // Predicated region
    $region26: #{tpu_custom_call.1} parent=1 // pred_check
      _
    $region27: #{tpu_custom_call.1} parent=1 // pred_check_branch
      %82 = sbr.rel (0) target = $region29
    $region28: #{tpu_custom_call.1} parent=1 // pred_region
      _
    $region29: #{tpu_custom_call.1} parent=1 // pred_fallthru
      _
    // Predicated region
    $region30: #{tpu_custom_call.1} parent=1 // pred_check
      _
    $region31: #{tpu_custom_call.1} parent=1 // pred_check_branch
      %84 = sbr.rel (0) target = $region33
    $region32: #{tpu_custom_call.1} parent=1 // pred_region
      %s86 = ssub.s32 2048, 2048
      %87 = vsyncadd [#allocation14], %s86
      %s88 = sshll.u32 [#allocation13], 4
      %s89 = int_to_ptr.vmem [resolvable:$true] %s88
      %94 = dma.hbm_to_vmem [thread:$0]  %s7, 2048, %s89, [#allocation14], 128, 128, 8
    $region33: #{tpu_custom_call.1} parent=1 // pred_fallthru
      _
    // Predicated region
    $region34: #{tpu_custom_call.1} parent=1 // pred_check
      _
    $region35: #{tpu_custom_call.1} parent=1 // pred_check_branch
      %96 = sbr.rel (0) target = $region37
    $region36: #{tpu_custom_call.1} parent=1 // pred_region
      _
    $region37: #{tpu_custom_call.1} parent=1 // pred_fallthru
      _
    // Predicated region
    $region38: #{tpu_custom_call.1} parent=1 // pred_check
      _
    $region39: #{tpu_custom_call.1} parent=1 // pred_check_branch
      %98 = sbr.rel (0) target = $region41
    $region40: #{tpu_custom_call.1} parent=1 // pred_region
      %99 = dma.done [#allocation5], 1024
    $region41: #{tpu_custom_call.1} parent=1 // pred_fallthru
      _
    // Predicated region
    $region42: #{tpu_custom_call.1} parent=1 // pred_check
      _
    $region43: #{tpu_custom_call.1} parent=1 // pred_check_branch
      %101 = sbr.rel (0) target = $region45
    $region44: #{tpu_custom_call.1} parent=1 // pred_region
      %102 = dma.done [#allocation8], 8192
    $region45: #{tpu_custom_call.1} parent=1 // pred_fallthru
      _
    // Predicated region
    $region46: #{tpu_custom_call.1} parent=1 // pred_check
      _
    $region47: #{tpu_custom_call.1} parent=1 // pred_check_branch
      %104 = sbr.rel (0) target = $region49
    $region48: #{tpu_custom_call.1} parent=1 // pred_region
      %105 = dma.done [#allocation8], 8192
    $region49: #{tpu_custom_call.1} parent=1 // pred_fallthru
      _
    // Predicated region
    $region50: #{tpu_custom_call.1} parent=1 // pred_check
      _
    $region51: #{tpu_custom_call.1} parent=1 // pred_check_branch
      %107 = sbr.rel (0) target = $region53
    $region52: #{tpu_custom_call.1} parent=1 // pred_region
      %108 = dma.done [#allocation11], 8192
    $region53: #{tpu_custom_call.1} parent=1 // pred_fallthru
      _
    // Predicated region
    $region54: #{tpu_custom_call.1} parent=1 // pred_check
      _
    $region55: #{tpu_custom_call.1} parent=1 // pred_check_branch
      %110 = sbr.rel (0) target = $region57
    $region56: #{tpu_custom_call.1} parent=1 // pred_region
      %111 = dma.done [#allocation11], 8192
    $region57: #{tpu_custom_call.1} parent=1 // pred_fallthru
      _
    // Predicated region
    $region58: #{tpu_custom_call.1} parent=1 // pred_check
      _
    $region59: #{tpu_custom_call.1} parent=1 // pred_check_branch
      %113 = sbr.rel (0) target = $region61
    $region60: #{tpu_custom_call.1} parent=1 // pred_region
      %114 = dma.done [#allocation14], 2048
    $region61: #{tpu_custom_call.1} parent=1 // pred_fallthru
      _
    %v115 = vld [vmem:[#allocation4] sm:$0xff]
    %v116 = vld [vmem:[#allocation4 + $0x8] sm:$0xff]
    %v117 = vld [vmem:[#allocation4 + $0x10] sm:$0xff]
    %v118 = vld [vmem:[#allocation4 + $0x18] sm:$0xff]
    %v119 = vld [vmem:[#allocation4 + $0x20] sm:$0xff]
    %v120 = vld [vmem:[#allocation4 + $0x28] sm:$0xff]
    %v121 = vld [vmem:[#allocation4 + $0x30] sm:$0xff]
    %v122 = vld [vmem:[#allocation4 + $0x38] sm:$0xff]
    %v123 = vld [vmem:[#allocation7] sm:$0xff]
    %v124 = vld [vmem:[#allocation7 + $0x8] sm:$0xff]
    %v125 = vld [vmem:[#allocation7 + $0x10] sm:$0xff]
    %v126 = vld [vmem:[#allocation7 + $0x18] sm:$0xff]
    %v127 = vld [vmem:[#allocation7 + $0x20] sm:$0xff]
    %v128 = vld [vmem:[#allocation7 + $0x28] sm:$0xff]
    %v129 = vld [vmem:[#allocation7 + $0x30] sm:$0xff]
    %v130 = vld [vmem:[#allocation7 + $0x38] sm:$0xff]
    %v131 = vld [vmem:[#allocation7 + $0x40] sm:$0xff]
    %v132 = vld [vmem:[#allocation7 + $0x48] sm:$0xff]
    %v133 = vld [vmem:[#allocation7 + $0x50] sm:$0xff]
    %v134 = vld [vmem:[#allocation7 + $0x58] sm:$0xff]
    %v135 = vld [vmem:[#allocation7 + $0x60] sm:$0xff]
    %v136 = vld [vmem:[#allocation7 + $0x68] sm:$0xff]
    %v137 = vld [vmem:[#allocation7 + $0x70] sm:$0xff]
    %v138 = vld [vmem:[#allocation7 + $0x78] sm:$0xff]
    %v139 = vld [vmem:[#allocation7 + $0x80] sm:$0xff]
    %v140 = vld [vmem:[#allocation7 + $0x88] sm:$0xff]
    %v141 = vld [vmem:[#allocation7 + $0x90] sm:$0xff]
    %v142 = vld [vmem:[#allocation7 + $0x98] sm:$0xff]
    %v143 = vld [vmem:[#allocation7 + $0xa0] sm:$0xff]
    %v144 = vld [vmem:[#allocation7 + $0xa8] sm:$0xff]
    %v145 = vld [vmem:[#allocation7 + $0xb0] sm:$0xff]
    %v146 = vld [vmem:[#allocation7 + $0xb8] sm:$0xff]
    %v147 = vld [vmem:[#allocation7 + $0xc0] sm:$0xff]
    %v148 = vld [vmem:[#allocation7 + $0xc8] sm:$0xff]
    %v149 = vld [vmem:[#allocation7 + $0xd0] sm:$0xff]
    %v150 = vld [vmem:[#allocation7 + $0xd8] sm:$0xff]
    %v151 = vld [vmem:[#allocation7 + $0xe0] sm:$0xff]
    %v152 = vld [vmem:[#allocation7 + $0xe8] sm:$0xff]
    %v153 = vld [vmem:[#allocation7 + $0xf0] sm:$0xff]
    %v154 = vld [vmem:[#allocation7 + $0xf8] sm:$0xff]
    %v155 = vld [vmem:[#allocation7 + $0x100] sm:$0xff]
    %v156 = vld [vmem:[#allocation7 + $0x108] sm:$0xff]
    %v157 = vld [vmem:[#allocation7 + $0x110] sm:$0xff]
    %v158 = vld [vmem:[#allocation7 + $0x118] sm:$0xff]
    %v159 = vld [vmem:[#allocation7 + $0x120] sm:$0xff]
    %v160 = vld [vmem:[#allocation7 + $0x128] sm:$0xff]
    %v161 = vld [vmem:[#allocation7 + $0x130] sm:$0xff]
    %v162 = vld [vmem:[#allocation7 + $0x138] sm:$0xff]
    %v163 = vld [vmem:[#allocation7 + $0x140] sm:$0xff]
    %v164 = vld [vmem:[#allocation7 + $0x148] sm:$0xff]
    %v165 = vld [vmem:[#allocation7 + $0x150] sm:$0xff]
    %v166 = vld [vmem:[#allocation7 + $0x158] sm:$0xff]
    %v167 = vld [vmem:[#allocation7 + $0x160] sm:$0xff]
    %v168 = vld [vmem:[#allocation7 + $0x168] sm:$0xff]
    %v169 = vld [vmem:[#allocation7 + $0x170] sm:$0xff]
    %v170 = vld [vmem:[#allocation7 + $0x178] sm:$0xff]
    %v171 = vld [vmem:[#allocation7 + $0x180] sm:$0xff]
    %v172 = vld [vmem:[#allocation7 + $0x188] sm:$0xff]
    %v173 = vld [vmem:[#allocation7 + $0x190] sm:$0xff]
    %v174 = vld [vmem:[#allocation7 + $0x198] sm:$0xff]
    %v175 = vld [vmem:[#allocation7 + $0x1a0] sm:$0xff]
    %v176 = vld [vmem:[#allocation7 + $0x1a8] sm:$0xff]
    %v177 = vld [vmem:[#allocation7 + $0x1b0] sm:$0xff]
    %v178 = vld [vmem:[#allocation7 + $0x1b8] sm:$0xff]
    %v179 = vld [vmem:[#allocation7 + $0x1c0] sm:$0xff]
    %v180 = vld [vmem:[#allocation7 + $0x1c8] sm:$0xff]
    %v181 = vld [vmem:[#allocation7 + $0x1d0] sm:$0xff]
    %v182 = vld [vmem:[#allocation7 + $0x1d8] sm:$0xff]
    %v183 = vld [vmem:[#allocation7 + $0x1e0] sm:$0xff]
    %v184 = vld [vmem:[#allocation7 + $0x1e8] sm:$0xff]
    %v185 = vld [vmem:[#allocation7 + $0x1f0] sm:$0xff]
    %v186 = vld [vmem:[#allocation7 + $0x1f8] sm:$0xff]
    %v187 = vld [vmem:[%s3] sm:$0xf]
    %v189 = vlaneseq
    %v190 = vshrl.u32 %v189, 7
    %v191 = vsub.s32 0, %v190
    %v192 = vrot.slane %v187, %v191
    %v193 = vlaneseq
    %v194 = vshrl.u32 %v193, 7
    %v195 = vsub.s32 1, %v194
    %v196 = vrot.slane %v187, %v195
    %v197 = vlaneseq
    %v198 = vshrl.u32 %v197, 7
    %v199 = vsub.s32 2, %v198
    %v200 = vrot.slane %v187, %v199
    %v201 = vlaneseq
    %v202 = vshrl.u32 %v201, 7
    %v203 = vsub.s32 3, %v202
    %v204 = vrot.slane %v187, %v203
    %209 = vmatprep.subr.mxu0 %v124
    %210 = vmatpush1.msra.mxu0 %v123
    %211 = vmatprep.subr.mxu0 %v128
    %212 = vmatpush1.msra.mxu0 %v127
    %213 = vmatprep.subr.mxu0 %v132
    %214 = vmatpush1.msra.mxu0 %v131
    %215 = vmatprep.subr.mxu0 %v136
    %216 = vmatpush1.msra.mxu0 %v135
    %217 = vmatprep.subr.mxu0 %v140
    %218 = vmatpush1.msra.mxu0 %v139
    %219 = vmatprep.subr.mxu0 %v144
    %220 = vmatpush1.msra.mxu0 %v143
    %221 = vmatprep.subr.mxu0 %v148
    %222 = vmatpush1.msra.mxu0 %v147
    %223 = vmatprep.subr.mxu0 %v152
    %224 = vmatpush1.msra.mxu0 %v151
    %225 = vmatprep.subr.mxu0 %v156
    %226 = vmatpush1.msra.mxu0 %v155
    %227 = vmatprep.subr.mxu0 %v160
    %228 = vmatpush1.msra.mxu0 %v159
    %229 = vmatprep.subr.mxu0 %v164
    %230 = vmatpush1.msra.mxu0 %v163
    %231 = vmatprep.subr.mxu0 %v168
    %232 = vmatpush1.msra.mxu0 %v167
    %233 = vmatprep.subr.mxu0 %v172
    %234 = vmatpush1.msra.mxu0 %v171
    %235 = vmatprep.subr.mxu0 %v176
    %236 = vmatpush1.msra.mxu0 %v175
    %237 = vmatprep.subr.mxu0 %v180
    %238 = vmatpush1.msra.mxu0 %v179
    %239 = vmatprep.subr.mxu0 %v184
    %240 = vmatpush1.msra.mxu0 %v183
    %241 = vmatprep.subr.mxu0 0.0
    %242 = vmatpush1.msra.mxu0 0.0
    %243 = vmatprep.subr.mxu0 0.0
    %244 = vmatpush1.msra.mxu0 0.0
    %245 = vmatprep.subr.mxu0 0.0
    %246 = vmatpush1.msra.mxu0 0.0
    %247 = vmatprep.subr.mxu0 0.0
    %248 = vmatpush1.msra.mxu0 0.0
    %249 = vmatprep.subr.mxu0 0.0
    %250 = vmatpush1.msra.mxu0 0.0
    %251 = vmatprep.subr.mxu0 0.0
    %252 = vmatpush1.msra.mxu0 0.0
    %253 = vmatprep.subr.mxu0 0.0
    %254 = vmatpush1.msra.mxu0 0.0
    %255 = vmatprep.subr.mxu0 0.0
    %256 = vmatpush1.msra.mxu0 0.0
    %257 = vmatprep.subr.mxu0 0.0
    %258 = vmatpush1.msra.mxu0 0.0
    %259 = vmatprep.subr.mxu0 0.0
    %260 = vmatpush1.msra.mxu0 0.0
    %261 = vmatprep.subr.mxu0 0.0
    %262 = vmatpush1.msra.mxu0 0.0
    %263 = vmatprep.subr.mxu0 0.0
    %264 = vmatpush1.msra.mxu0 0.0
    %265 = vmatprep.subr.mxu0 0.0
    %266 = vmatpush1.msra.mxu0 0.0
    %267 = vmatprep.subr.mxu0 0.0
    %268 = vmatpush1.msra.mxu0 0.0
    %269 = vmatprep.subr.mxu0 0.0
    %270 = vmatpush1.msra.mxu0 0.0
    %271 = vmatprep.subr.mxu0 0.0
    %272 = vmatpush1.msra.mxu0 0.0
    %273 = vmatprep.mubr.f32.mxu0 0.0
    %274 = vmatmul.mubr.f32.gmra.mrb[0].mxu0 %v115
    %v275 = vpop.f32.mrb[0].mxu0
    %v276 = vadd.f32 %v192, %v275
    %v277 = vpop.f32.mrb[0].mxu0
    %v278 = vadd.f32 %v196, %v277
    %279 = vmatprep.mubr.f32.mxu0 0.0
    %280 = vmatmul.mubr.f32.gmra.mrb[0].mxu0 %v116
    %v281 = vpop.f32.mrb[0].mxu0
    %v282 = vadd.f32 %v192, %v281
    %v283 = vpop.f32.mrb[0].mxu0
    %v284 = vadd.f32 %v196, %v283
    %285 = vmatprep.mubr.f32.mxu0 0.0
    %286 = vmatmul.mubr.f32.gmra.mrb[0].mxu0 %v117
    %v287 = vpop.f32.mrb[0].mxu0
    %v288 = vadd.f32 %v192, %v287
    %v289 = vpop.f32.mrb[0].mxu0
    %v290 = vadd.f32 %v196, %v289
    %291 = vmatprep.mubr.f32.mxu0 0.0
    %292 = vmatmul.mubr.f32.gmra.mrb[0].mxu0 %v118
    %v293 = vpop.f32.mrb[0].mxu0
    %v294 = vadd.f32 %v192, %v293
    %v295 = vpop.f32.mrb[0].mxu0
    %v296 = vadd.f32 %v196, %v295
    %297 = vmatprep.mubr.f32.mxu0 0.0
    %298 = vmatmul.mubr.f32.gmra.mrb[0].mxu0 %v119
    %v299 = vpop.f32.mrb[0].mxu0
    %v300 = vadd.f32 %v192, %v299
    %v301 = vpop.f32.mrb[0].mxu0
    %v302 = vadd.f32 %v196, %v301
    %303 = vmatprep.mubr.f32.mxu0 0.0
    %304 = vmatmul.mubr.f32.gmra.mrb[0].mxu0 %v120
    %v305 = vpop.f32.mrb[0].mxu0
    %v306 = vadd.f32 %v192, %v305
    %v307 = vpop.f32.mrb[0].mxu0
    %v308 = vadd.f32 %v196, %v307
    %309 = vmatprep.mubr.f32.mxu0 0.0
    %310 = vmatmul.mubr.f32.gmra.mrb[0].mxu0 %v121
    %v311 = vpop.f32.mrb[0].mxu0
    %v312 = vadd.f32 %v192, %v311
    %v313 = vpop.f32.mrb[0].mxu0
    %v314 = vadd.f32 %v196, %v313
    %315 = vmatprep.mubr.f32.mxu0 0.0
    %316 = vmatmul.mubr.f32.gmra.mrb[0].mxu0 %v122
    %v317 = vpop.f32.mrb[0].mxu0
    %v318 = vadd.f32 %v192, %v317
    %v319 = vpop.f32.mrb[0].mxu0
    %v320 = vadd.f32 %v196, %v319
    %321 = vdwg.mxu0
    %322 = vmatprep.subr.mxu0 %v126
    %323 = vmatpush1.msra.mxu0 %v125
    %324 = vmatprep.subr.mxu0 %v130
    %325 = vmatpush1.msra.mxu0 %v129
    %326 = vmatprep.subr.mxu0 %v134
    %327 = vmatpush1.msra.mxu0 %v133
    %328 = vmatprep.subr.mxu0 %v138
    %329 = vmatpush1.msra.mxu0 %v137
    %330 = vmatprep.subr.mxu0 %v142
    %331 = vmatpush1.msra.mxu0 %v141
    %332 = vmatprep.subr.mxu0 %v146
    %333 = vmatpush1.msra.mxu0 %v145
    %334 = vmatprep.subr.mxu0 %v150
    %335 = vmatpush1.msra.mxu0 %v149
    %336 = vmatprep.subr.mxu0 %v154
    %337 = vmatpush1.msra.mxu0 %v153
    %338 = vmatprep.subr.mxu0 %v158
    %339 = vmatpush1.msra.mxu0 %v157
    %340 = vmatprep.subr.mxu0 %v162
    %341 = vmatpush1.msra.mxu0 %v161
    %342 = vmatprep.subr.mxu0 %v166
    %343 = vmatpush1.msra.mxu0 %v165
    %344 = vmatprep.subr.mxu0 %v170
    %345 = vmatpush1.msra.mxu0 %v169
    %346 = vmatprep.subr.mxu0 %v174
    %347 = vmatpush1.msra.mxu0 %v173
    %348 = vmatprep.subr.mxu0 %v178
    %349 = vmatpush1.msra.mxu0 %v177
    %350 = vmatprep.subr.mxu0 %v182
    %351 = vmatpush1.msra.mxu0 %v181
    %352 = vmatprep.subr.mxu0 %v186
    %353 = vmatpush1.msra.mxu0 %v185
    %354 = vmatprep.subr.mxu0 0.0
    %355 = vmatpush1.msra.mxu0 0.0
    %356 = vmatprep.subr.mxu0 0.0
    %357 = vmatpush1.msra.mxu0 0.0
    %358 = vmatprep.subr.mxu0 0.0
    %359 = vmatpush1.msra.mxu0 0.0
    %360 = vmatprep.subr.mxu0 0.0
    %361 = vmatpush1.msra.mxu0 0.0
    %362 = vmatprep.subr.mxu0 0.0
    %363 = vmatpush1.msra.mxu0 0.0
    %364 = vmatprep.subr.mxu0 0.0
    %365 = vmatpush1.msra.mxu0 0.0
    %366 = vmatprep.subr.mxu0 0.0
    %367 = vmatpush1.msra.mxu0 0.0
    %368 = vmatprep.subr.mxu0 0.0
    %369 = vmatpush1.msra.mxu0 0.0
    %370 = vmatprep.subr.mxu0 0.0
    %371 = vmatpush1.msra.mxu0 0.0
    %372 = vmatprep.subr.mxu0 0.0
    %373 = vmatpush1.msra.mxu0 0.0
    %374 = vmatprep.subr.mxu0 0.0
    %375 = vmatpush1.msra.mxu0 0.0
    %376 = vmatprep.subr.mxu0 0.0
    %377 = vmatpush1.msra.mxu0 0.0
    %378 = vmatprep.subr.mxu0 0.0
    %379 = vmatpush1.msra.mxu0 0.0
    %380 = vmatprep.subr.mxu0 0.0
    %381 = vmatpush1.msra.mxu0 0.0
    %382 = vmatprep.subr.mxu0 0.0
    %383 = vmatpush1.msra.mxu0 0.0
    %384 = vmatprep.subr.mxu0 0.0
    %385 = vmatpush1.msra.mxu0 0.0
    %386 = vmatprep.mubr.f32.mxu0 0.0
    %387 = vmatmul.mubr.f32.gmra.mrb[0].mxu0 %v115
    %v388 = vpop.f32.mrb[0].mxu0
    %v389 = vadd.f32 %v200, %v388
    %v390 = vpop.f32.mrb[0].mxu0
    %v391 = vadd.f32 %v204, %v390
    %392 = vmatprep.mubr.f32.mxu0 0.0
    %393 = vmatmul.mubr.f32.gmra.mrb[0].mxu0 %v116
    %v394 = vpop.f32.mrb[0].mxu0
    %v395 = vadd.f32 %v200, %v394
    %v396 = vpop.f32.mrb[0].mxu0
    %v397 = vadd.f32 %v204, %v396
    %398 = vmatprep.mubr.f32.mxu0 0.0
    %399 = vmatmul.mubr.f32.gmra.mrb[0].mxu0 %v117
    %v400 = vpop.f32.mrb[0].mxu0
    %v401 = vadd.f32 %v200, %v400
    %v402 = vpop.f32.mrb[0].mxu0
    %v403 = vadd.f32 %v204, %v402
    %404 = vmatprep.mubr.f32.mxu0 0.0
    %405 = vmatmul.mubr.f32.gmra.mrb[0].mxu0 %v118
    %v406 = vpop.f32.mrb[0].mxu0
    %v407 = vadd.f32 %v200, %v406
    %v408 = vpop.f32.mrb[0].mxu0
    %v409 = vadd.f32 %v204, %v408
    %410 = vmatprep.mubr.f32.mxu0 0.0
    %411 = vmatmul.mubr.f32.gmra.mrb[0].mxu0 %v119
    %v412 = vpop.f32.mrb[0].mxu0
    %v413 = vadd.f32 %v200, %v412
    %v414 = vpop.f32.mrb[0].mxu0
    %v415 = vadd.f32 %v204, %v414
    %416 = vmatprep.mubr.f32.mxu0 0.0
    %417 = vmatmul.mubr.f32.gmra.mrb[0].mxu0 %v120
    %v418 = vpop.f32.mrb[0].mxu0
    %v419 = vadd.f32 %v200, %v418
    %v420 = vpop.f32.mrb[0].mxu0
    %v421 = vadd.f32 %v204, %v420
    %422 = vmatprep.mubr.f32.mxu0 0.0
    %423 = vmatmul.mubr.f32.gmra.mrb[0].mxu0 %v121
    %v424 = vpop.f32.mrb[0].mxu0
    %v425 = vadd.f32 %v200, %v424
    %v426 = vpop.f32.mrb[0].mxu0
    %v427 = vadd.f32 %v204, %v426
    %428 = vmatprep.mubr.f32.mxu0 0.0
    %429 = vmatmul.mubr.f32.gmra.mrb[0].mxu0 %v122
    %v430 = vpop.f32.mrb[0].mxu0
    %v431 = vadd.f32 %v200, %v430
    %v432 = vpop.f32.mrb[0].mxu0
    %v433 = vadd.f32 %v204, %v432
    %434 = vdwg.mxu0
    %435 = vst [vmem:[#allocation2] sm:$0xff] %v276
    %436 = vst [vmem:[#allocation2 + $0x8] sm:$0xff] %v278
    %437 = vst [vmem:[#allocation2 + $0x10] sm:$0xff] %v389
    %438 = vst [vmem:[#allocation2 + $0x18] sm:$0xff] %v391
    %439 = vst [vmem:[#allocation2 + $0x20] sm:$0xff] %v282
    %440 = vst [vmem:[#allocation2 + $0x28] sm:$0xff] %v284
    %441 = vst [vmem:[#allocation2 + $0x30] sm:$0xff] %v395
    %442 = vst [vmem:[#allocation2 + $0x38] sm:$0xff] %v397
    %443 = vst [vmem:[#allocation2 + $0x40] sm:$0xff] %v288
    %444 = vst [vmem:[#allocation2 + $0x48] sm:$0xff] %v290
    %445 = vst [vmem:[#allocation2 + $0x50] sm:$0xff] %v401
    %446 = vst [vmem:[#allocation2 + $0x58] sm:$0xff] %v403
    %447 = vst [vmem:[#allocation2 + $0x60] sm:$0xff] %v294
    %448 = vst [vmem:[#allocation2 + $0x68] sm:$0xff] %v296
    %449 = vst [vmem:[#allocation2 + $0x70] sm:$0xff] %v407
    %450 = vst [vmem:[#allocation2 + $0x78] sm:$0xff] %v409
    %451 = vst [vmem:[#allocation2 + $0x80] sm:$0xff] %v300
    %452 = vst [vmem:[#allocation2 + $0x88] sm:$0xff] %v302
    %453 = vst [vmem:[#allocation2 + $0x90] sm:$0xff] %v413
    %454 = vst [vmem:[#allocation2 + $0x98] sm:$0xff] %v415
    %455 = vst [vmem:[#allocation2 + $0xa0] sm:$0xff] %v306
    %456 = vst [vmem:[#allocation2 + $0xa8] sm:$0xff] %v308
    %457 = vst [vmem:[#allocation2 + $0xb0] sm:$0xff] %v419
    %458 = vst [vmem:[#allocation2 + $0xb8] sm:$0xff] %v421
    %459 = vst [vmem:[#allocation2 + $0xc0] sm:$0xff] %v312
    %460 = vst [vmem:[#allocation2 + $0xc8] sm:$0xff] %v314
    %461 = vst [vmem:[#allocation2 + $0xd0] sm:$0xff] %v425
    %462 = vst [vmem:[#allocation2 + $0xd8] sm:$0xff] %v427
    %463 = vst [vmem:[#allocation2 + $0xe0] sm:$0xff] %v318
    %464 = vst [vmem:[#allocation2 + $0xe8] sm:$0xff] %v320
    %465 = vst [vmem:[#allocation2 + $0xf0] sm:$0xff] %v431
    %466 = vst [vmem:[#allocation2 + $0xf8] sm:$0xff] %v433
    %v467 = vld [vmem:[#allocation9] sm:$0xff]
    %v468 = vld [vmem:[#allocation9 + $0x8] sm:$0xff]
    %v469 = vld [vmem:[#allocation9 + $0x10] sm:$0xff]
    %v470 = vld [vmem:[#allocation9 + $0x18] sm:$0xff]
    %v471 = vld [vmem:[#allocation9 + $0x20] sm:$0xff]
    %v472 = vld [vmem:[#allocation9 + $0x28] sm:$0xff]
    %v473 = vld [vmem:[#allocation9 + $0x30] sm:$0xff]
    %v474 = vld [vmem:[#allocation9 + $0x38] sm:$0xff]
    %v475 = vld [vmem:[#allocation9 + $0x40] sm:$0xff]
    %v476 = vld [vmem:[#allocation9 + $0x48] sm:$0xff]
    %v477 = vld [vmem:[#allocation9 + $0x50] sm:$0xff]
    %v478 = vld [vmem:[#allocation9 + $0x58] sm:$0xff]
    %v479 = vld [vmem:[#allocation9 + $0x60] sm:$0xff]
    %v480 = vld [vmem:[#allocation9 + $0x68] sm:$0xff]
    %v481 = vld [vmem:[#allocation9 + $0x70] sm:$0xff]
    %v482 = vld [vmem:[#allocation9 + $0x78] sm:$0xff]
    %v483 = vld [vmem:[#allocation9 + $0x80] sm:$0xff]
    %v484 = vld [vmem:[#allocation9 + $0x88] sm:$0xff]
    %v485 = vld [vmem:[#allocation9 + $0x90] sm:$0xff]
    %v486 = vld [vmem:[#allocation9 + $0x98] sm:$0xff]
    %v487 = vld [vmem:[#allocation9 + $0xa0] sm:$0xff]
    %v488 = vld [vmem:[#allocation9 + $0xa8] sm:$0xff]
    %v489 = vld [vmem:[#allocation9 + $0xb0] sm:$0xff]
    %v490 = vld [vmem:[#allocation9 + $0xb8] sm:$0xff]
    %v491 = vld [vmem:[#allocation9 + $0xc0] sm:$0xff]
    %v492 = vld [vmem:[#allocation9 + $0xc8] sm:$0xff]
    %v493 = vld [vmem:[#allocation9 + $0xd0] sm:$0xff]
    %v494 = vld [vmem:[#allocation9 + $0xd8] sm:$0xff]
    %v495 = vld [vmem:[#allocation9 + $0xe0] sm:$0xff]
    %v496 = vld [vmem:[#allocation9 + $0xe8] sm:$0xff]
    %v497 = vld [vmem:[#allocation9 + $0xf0] sm:$0xff]
    %v498 = vld [vmem:[#allocation9 + $0xf8] sm:$0xff]
    %v499 = vld [vmem:[#allocation9 + $0x100] sm:$0xff]
    %v500 = vld [vmem:[#allocation9 + $0x108] sm:$0xff]
    %v501 = vld [vmem:[#allocation9 + $0x110] sm:$0xff]
    %v502 = vld [vmem:[#allocation9 + $0x118] sm:$0xff]
    %v503 = vld [vmem:[#allocation9 + $0x120] sm:$0xff]
    %v504 = vld [vmem:[#allocation9 + $0x128] sm:$0xff]
    %v505 = vld [vmem:[#allocation9 + $0x130] sm:$0xff]
    %v506 = vld [vmem:[#allocation9 + $0x138] sm:$0xff]
    %v507 = vld [vmem:[#allocation9 + $0x140] sm:$0xff]
    %v508 = vld [vmem:[#allocation9 + $0x148] sm:$0xff]
    %v509 = vld [vmem:[#allocation9 + $0x150] sm:$0xff]
    %v510 = vld [vmem:[#allocation9 + $0x158] sm:$0xff]
    %v511 = vld [vmem:[#allocation9 + $0x160] sm:$0xff]
    %v512 = vld [vmem:[#allocation9 + $0x168] sm:$0xff]
    %v513 = vld [vmem:[#allocation9 + $0x170] sm:$0xff]
    %v514 = vld [vmem:[#allocation9 + $0x178] sm:$0xff]
    %v515 = vld [vmem:[#allocation9 + $0x180] sm:$0xff]
    %v516 = vld [vmem:[#allocation9 + $0x188] sm:$0xff]
    %v517 = vld [vmem:[#allocation9 + $0x190] sm:$0xff]
    %v518 = vld [vmem:[#allocation9 + $0x198] sm:$0xff]
    %v519 = vld [vmem:[#allocation9 + $0x1a0] sm:$0xff]
    %v520 = vld [vmem:[#allocation9 + $0x1a8] sm:$0xff]
    %v521 = vld [vmem:[#allocation9 + $0x1b0] sm:$0xff]
    %v522 = vld [vmem:[#allocation9 + $0x1b8] sm:$0xff]
    %v523 = vld [vmem:[#allocation9 + $0x1c0] sm:$0xff]
    %v524 = vld [vmem:[#allocation9 + $0x1c8] sm:$0xff]
    %v525 = vld [vmem:[#allocation9 + $0x1d0] sm:$0xff]
    %v526 = vld [vmem:[#allocation9 + $0x1d8] sm:$0xff]
    %v527 = vld [vmem:[#allocation9 + $0x1e0] sm:$0xff]
    %v528 = vld [vmem:[#allocation9 + $0x1e8] sm:$0xff]
    %v529 = vld [vmem:[#allocation9 + $0x1f0] sm:$0xff]
    %v530 = vld [vmem:[#allocation9 + $0x1f8] sm:$0xff]
    %v531 = vld [vmem:[#allocation2] sm:$0xff]
    %v532 = vld [vmem:[#allocation2 + $0x8] sm:$0xff]
    %v533 = vld [vmem:[#allocation2 + $0x10] sm:$0xff]
    %v534 = vld [vmem:[#allocation2 + $0x18] sm:$0xff]
    %535 = vmatprep.subr.mxu0 %v468
    %536 = vmatpush1.msra.mxu0 %v467
    %537 = vmatprep.subr.mxu0 %v472
    %538 = vmatpush1.msra.mxu0 %v471
    %539 = vmatprep.subr.mxu0 %v476
    %540 = vmatpush1.msra.mxu0 %v475
    %541 = vmatprep.subr.mxu0 %v480
    %542 = vmatpush1.msra.mxu0 %v479
    %543 = vmatprep.subr.mxu0 %v484
    %544 = vmatpush1.msra.mxu0 %v483
    %545 = vmatprep.subr.mxu0 %v488
    %546 = vmatpush1.msra.mxu0 %v487
    %547 = vmatprep.subr.mxu0 %v492
    %548 = vmatpush1.msra.mxu0 %v491
    %549 = vmatprep.subr.mxu0 %v496
    %550 = vmatpush1.msra.mxu0 %v495
    %551 = vmatprep.subr.mxu0 %v500
    %552 = vmatpush1.msra.mxu0 %v499
    %553 = vmatprep.subr.mxu0 %v504
    %554 = vmatpush1.msra.mxu0 %v503
    %555 = vmatprep.subr.mxu0 %v508
    %556 = vmatpush1.msra.mxu0 %v507
    %557 = vmatprep.subr.mxu0 %v512
    %558 = vmatpush1.msra.mxu0 %v511
    %559 = vmatprep.subr.mxu0 %v516
    %560 = vmatpush1.msra.mxu0 %v515
    %561 = vmatprep.subr.mxu0 %v520
    %562 = vmatpush1.msra.mxu0 %v519
    %563 = vmatprep.subr.mxu0 %v524
    %564 = vmatpush1.msra.mxu0 %v523
    %565 = vmatprep.subr.mxu0 %v528
    %566 = vmatpush1.msra.mxu0 %v527
    %567 = vmatprep.subr.mxu0 0.0
    %568 = vmatpush1.msra.mxu0 0.0
    %569 = vmatprep.subr.mxu0 0.0
    %570 = vmatpush1.msra.mxu0 0.0
    %571 = vmatprep.subr.mxu0 0.0
    %572 = vmatpush1.msra.mxu0 0.0
    %573 = vmatprep.subr.mxu0 0.0
    %574 = vmatpush1.msra.mxu0 0.0
    %575 = vmatprep.subr.mxu0 0.0
    %576 = vmatpush1.msra.mxu0 0.0
    %577 = vmatprep.subr.mxu0 0.0
    %578 = vmatpush1.msra.mxu0 0.0
    %579 = vmatprep.subr.mxu0 0.0
    %580 = vmatpush1.msra.mxu0 0.0
    %581 = vmatprep.subr.mxu0 0.0
    %582 = vmatpush1.msra.mxu0 0.0
    %583 = vmatprep.subr.mxu0 0.0
    %584 = vmatpush1.msra.mxu0 0.0
    %585 = vmatprep.subr.mxu0 0.0
    %586 = vmatpush1.msra.mxu0 0.0
    %587 = vmatprep.subr.mxu0 0.0
    %588 = vmatpush1.msra.mxu0 0.0
    %589 = vmatprep.subr.mxu0 0.0
    %590 = vmatpush1.msra.mxu0 0.0
    %591 = vmatprep.subr.mxu0 0.0
    %592 = vmatpush1.msra.mxu0 0.0
    %593 = vmatprep.subr.mxu0 0.0
    %594 = vmatpush1.msra.mxu0 0.0
    %595 = vmatprep.subr.mxu0 0.0
    %596 = vmatpush1.msra.mxu0 0.0
    %597 = vmatprep.subr.mxu0 0.0
    %598 = vmatpush1.msra.mxu0 0.0
    %599 = vmatprep.mubr.f32.mxu0 0.0
    %600 = vmatmul.mubr.f32.gmra.mrb[0].mxu0 0.0
    %v601 = vpop.f32.mrb[0].mxu0
    %v602 = vadd.f32 0.0, %v601
    %v603 = vpop.f32.mrb[0].mxu0
    %v604 = vadd.f32 0.0, %v603
    %605 = vdwg.mxu0
    %606 = vmatprep.subr.mxu0 %v470
    %607 = vmatpush1.msra.mxu0 %v469
    %608 = vmatprep.subr.mxu0 %v474
    %609 = vmatpush1.msra.mxu0 %v473
    %610 = vmatprep.subr.mxu0 %v478
    %611 = vmatpush1.msra.mxu0 %v477
    %612 = vmatprep.subr.mxu0 %v482
    %613 = vmatpush1.msra.mxu0 %v481
    %614 = vmatprep.subr.mxu0 %v486
    %615 = vmatpush1.msra.mxu0 %v485
    %616 = vmatprep.subr.mxu0 %v490
    %617 = vmatpush1.msra.mxu0 %v489
    %618 = vmatprep.subr.mxu0 %v494
    %619 = vmatpush1.msra.mxu0 %v493
    %620 = vmatprep.subr.mxu0 %v498
    %621 = vmatpush1.msra.mxu0 %v497
    %622 = vmatprep.subr.mxu0 %v502
    %623 = vmatpush1.msra.mxu0 %v501
    %624 = vmatprep.subr.mxu0 %v506
    %625 = vmatpush1.msra.mxu0 %v505
    %626 = vmatprep.subr.mxu0 %v510
    %627 = vmatpush1.msra.mxu0 %v509
    %628 = vmatprep.subr.mxu0 %v514
    %629 = vmatpush1.msra.mxu0 %v513
    %630 = vmatprep.subr.mxu0 %v518
    %631 = vmatpush1.msra.mxu0 %v517
    %632 = vmatprep.subr.mxu0 %v522
    %633 = vmatpush1.msra.mxu0 %v521
    %634 = vmatprep.subr.mxu0 %v526
    %635 = vmatpush1.msra.mxu0 %v525
    %636 = vmatprep.subr.mxu0 %v530
    %637 = vmatpush1.msra.mxu0 %v529
    %638 = vmatprep.subr.mxu0 0.0
    %639 = vmatpush1.msra.mxu0 0.0
    %640 = vmatprep.subr.mxu0 0.0
    %641 = vmatpush1.msra.mxu0 0.0
    %642 = vmatprep.subr.mxu0 0.0
    %643 = vmatpush1.msra.mxu0 0.0
    %644 = vmatprep.subr.mxu0 0.0
    %645 = vmatpush1.msra.mxu0 0.0
    %646 = vmatprep.subr.mxu0 0.0
    %647 = vmatpush1.msra.mxu0 0.0
    %648 = vmatprep.subr.mxu0 0.0
    %649 = vmatpush1.msra.mxu0 0.0
    %650 = vmatprep.subr.mxu0 0.0
    %651 = vmatpush1.msra.mxu0 0.0
    %652 = vmatprep.subr.mxu0 0.0
    %653 = vmatpush1.msra.mxu0 0.0
    %654 = vmatprep.subr.mxu0 0.0
    %655 = vmatpush1.msra.mxu0 0.0
    %656 = vmatprep.subr.mxu0 0.0
    %657 = vmatpush1.msra.mxu0 0.0
    %658 = vmatprep.subr.mxu0 0.0
    %659 = vmatpush1.msra.mxu0 0.0
    %660 = vmatprep.subr.mxu0 0.0
    %661 = vmatpush1.msra.mxu0 0.0
    %662 = vmatprep.subr.mxu0 0.0
    %663 = vmatpush1.msra.mxu0 0.0
    %664 = vmatprep.subr.mxu0 0.0
    %665 = vmatpush1.msra.mxu0 0.0
    %666 = vmatprep.subr.mxu0 0.0
    %667 = vmatpush1.msra.mxu0 0.0
    %668 = vmatprep.subr.mxu0 0.0
    %669 = vmatpush1.msra.mxu0 0.0
    %670 = vmatprep.mubr.f32.mxu0 0.0
    %671 = vmatmul.mubr.f32.gmra.mrb[0].mxu0 0.0
    %v672 = vpop.f32.mrb[0].mxu0
    %v673 = vadd.f32 0.0, %v672
    %v674 = vpop.f32.mrb[0].mxu0
    %v675 = vadd.f32 0.0, %v674
    %676 = vdwg.mxu0
    %v677 = vadd.f32 %v531, %v602
    %v678 = vadd.f32 %v532, %v604
    %v679 = vadd.f32 %v533, %v673
    %v680 = vadd.f32 %v534, %v675
    %v681 = vxor.u32 %v677, 2147483648
    %v682 = vmul.f32 %v681, 1.442695
    %v683 = vpow.pop %v682
    %v684 = vadd.f32 %v683, 1.0
    %v685 = vrcp.pop %v684
    %v686 = vmul.f32 1.0, %v685
    %v687 = vxor.u32 %v678, 2147483648
    %v688 = vmul.f32 %v687, 1.442695
    %v689 = vpow.pop %v688
    %v690 = vadd.f32 %v689, 1.0
    %v691 = vrcp.pop %v690
    %v692 = vmul.f32 1.0, %v691
    %v693 = vtanh.pop %v679
    %v694 = vxor.u32 %v680, 2147483648
    %v695 = vmul.f32 %v694, 1.442695
    %v696 = vpow.pop %v695
    %v697 = vadd.f32 %v696, 1.0
    %v698 = vrcp.pop %v697
    %v699 = vmul.f32 1.0, %v698
    %v700 = vmul.f32 %v692, 0.0
    %v701 = vmul.f32 %v686, %v693
    %v702 = vadd.f32 %v700, %v701
    %v703 = vtanh.pop %v702
    %v704 = vmul.f32 %v699, %v703
    %705 = vst [vmem:[#allocation3] sm:$0xff] %v704
    %v706 = vld [vmem:[#allocation2 + $0x20] sm:$0xff]
    %v707 = vld [vmem:[#allocation2 + $0x28] sm:$0xff]
    %v708 = vld [vmem:[#allocation2 + $0x30] sm:$0xff]
    %v709 = vld [vmem:[#allocation2 + $0x38] sm:$0xff]
    %710 = vmatprep.subr.mxu0 %v468
    %711 = vmatpush1.msra.mxu0 %v467
    %712 = vmatprep.subr.mxu0 %v472
    %713 = vmatpush1.msra.mxu0 %v471
    %714 = vmatprep.subr.mxu0 %v476
    %715 = vmatpush1.msra.mxu0 %v475
    %716 = vmatprep.subr.mxu0 %v480
    %717 = vmatpush1.msra.mxu0 %v479
    %718 = vmatprep.subr.mxu0 %v484
    %719 = vmatpush1.msra.mxu0 %v483
    %720 = vmatprep.subr.mxu0 %v488
    %721 = vmatpush1.msra.mxu0 %v487
    %722 = vmatprep.subr.mxu0 %v492
    %723 = vmatpush1.msra.mxu0 %v491
    %724 = vmatprep.subr.mxu0 %v496
    %725 = vmatpush1.msra.mxu0 %v495
    %726 = vmatprep.subr.mxu0 %v500
    %727 = vmatpush1.msra.mxu0 %v499
    %728 = vmatprep.subr.mxu0 %v504
    %729 = vmatpush1.msra.mxu0 %v503
    %730 = vmatprep.subr.mxu0 %v508
    %731 = vmatpush1.msra.mxu0 %v507
    %732 = vmatprep.subr.mxu0 %v512
    %733 = vmatpush1.msra.mxu0 %v511
    %734 = vmatprep.subr.mxu0 %v516
    %735 = vmatpush1.msra.mxu0 %v515
    %736 = vmatprep.subr.mxu0 %v520
    %737 = vmatpush1.msra.mxu0 %v519
    %738 = vmatprep.subr.mxu0 %v524
    %739 = vmatpush1.msra.mxu0 %v523
    %740 = vmatprep.subr.mxu0 %v528
    %741 = vmatpush1.msra.mxu0 %v527
    %742 = vmatprep.subr.mxu0 0.0
    %743 = vmatpush1.msra.mxu0 0.0
    %744 = vmatprep.subr.mxu0 0.0
    %745 = vmatpush1.msra.mxu0 0.0
    %746 = vmatprep.subr.mxu0 0.0
    %747 = vmatpush1.msra.mxu0 0.0
    %748 = vmatprep.subr.mxu0 0.0
    %749 = vmatpush1.msra.mxu0 0.0
    %750 = vmatprep.subr.mxu0 0.0
    %751 = vmatpush1.msra.mxu0 0.0
    %752 = vmatprep.subr.mxu0 0.0
    %753 = vmatpush1.msra.mxu0 0.0
    %754 = vmatprep.subr.mxu0 0.0
    %755 = vmatpush1.msra.mxu0 0.0
    %756 = vmatprep.subr.mxu0 0.0
    %757 = vmatpush1.msra.mxu0 0.0
    %758 = vmatprep.subr.mxu0 0.0
    %759 = vmatpush1.msra.mxu0 0.0
    %760 = vmatprep.subr.mxu0 0.0
    %761 = vmatpush1.msra.mxu0 0.0
    %762 = vmatprep.subr.mxu0 0.0
    %763 = vmatpush1.msra.mxu0 0.0
    %764 = vmatprep.subr.mxu0 0.0
    %765 = vmatpush1.msra.mxu0 0.0
    %766 = vmatprep.subr.mxu0 0.0
    %767 = vmatpush1.msra.mxu0 0.0
    %768 = vmatprep.subr.mxu0 0.0
    %769 = vmatpush1.msra.mxu0 0.0
    %770 = vmatprep.subr.mxu0 0.0
    %771 = vmatpush1.msra.mxu0 0.0
    %772 = vmatprep.subr.mxu0 0.0
    %773 = vmatpush1.msra.mxu0 0.0
    %774 = vmatprep.mubr.f32.mxu0 0.0
    %775 = vmatmul.mubr.f32.gmra.mrb[0].mxu0 %v704
    %v776 = vpop.f32.mrb[0].mxu0
    %v777 = vadd.f32 0.0, %v776
    %v778 = vpop.f32.mrb[0].mxu0
    %v779 = vadd.f32 0.0, %v778
    %780 = vdwg.mxu0
    %781 = vmatprep.subr.mxu0 %v470
    %782 = vmatpush1.msra.mxu0 %v469
    %783 = vmatprep.subr.mxu0 %v474
    %784 = vmatpush1.msra.mxu0 %v473
    %785 = vmatprep.subr.mxu0 %v478
    %786 = vmatpush1.msra.mxu0 %v477
    %787 = vmatprep.subr.mxu0 %v482
    %788 = vmatpush1.msra.mxu0 %v481
    %789 = vmatprep.subr.mxu0 %v486
    %790 = vmatpush1.msra.mxu0 %v485
    %791 = vmatprep.subr.mxu0 %v490
    %792 = vmatpush1.msra.mxu0 %v489
    %793 = vmatprep.subr.mxu0 %v494
    %794 = vmatpush1.msra.mxu0 %v493
    %795 = vmatprep.subr.mxu0 %v498
    %796 = vmatpush1.msra.mxu0 %v497
    %797 = vmatprep.subr.mxu0 %v502
    %798 = vmatpush1.msra.mxu0 %v501
    %799 = vmatprep.subr.mxu0 %v506
    %800 = vmatpush1.msra.mxu0 %v505
    %801 = vmatprep.subr.mxu0 %v510
    %802 = vmatpush1.msra.mxu0 %v509
    %803 = vmatprep.subr.mxu0 %v514
    %804 = vmatpush1.msra.mxu0 %v513
    %805 = vmatprep.subr.mxu0 %v518
    %806 = vmatpush1.msra.mxu0 %v517
    %807 = vmatprep.subr.mxu0 %v522
    %808 = vmatpush1.msra.mxu0 %v521
    %809 = vmatprep.subr.mxu0 %v526
    %810 = vmatpush1.msra.mxu0 %v525
    %811 = vmatprep.subr.mxu0 %v530
    %812 = vmatpush1.msra.mxu0 %v529
    %813 = vmatprep.subr.mxu0 0.0
    %814 = vmatpush1.msra.mxu0 0.0
    %815 = vmatprep.subr.mxu0 0.0
    %816 = vmatpush1.msra.mxu0 0.0
    %817 = vmatprep.subr.mxu0 0.0
    %818 = vmatpush1.msra.mxu0 0.0
    %819 = vmatprep.subr.mxu0 0.0
    %820 = vmatpush1.msra.mxu0 0.0
    %821 = vmatprep.subr.mxu0 0.0
    %822 = vmatpush1.msra.mxu0 0.0
    %823 = vmatprep.subr.mxu0 0.0
    %824 = vmatpush1.msra.mxu0 0.0
    %825 = vmatprep.subr.mxu0 0.0
    %826 = vmatpush1.msra.mxu0 0.0
    %827 = vmatprep.subr.mxu0 0.0
    %828 = vmatpush1.msra.mxu0 0.0
    %829 = vmatprep.subr.mxu0 0.0
    %830 = vmatpush1.msra.mxu0 0.0
    %831 = vmatprep.subr.mxu0 0.0
    %832 = vmatpush1.msra.mxu0 0.0
    %833 = vmatprep.subr.mxu0 0.0
    %834 = vmatpush1.msra.mxu0 0.0
    %835 = vmatprep.subr.mxu0 0.0
    %836 = vmatpush1.msra.mxu0 0.0
    %837 = vmatprep.subr.mxu0 0.0
    %838 = vmatpush1.msra.mxu0 0.0
    %839 = vmatprep.subr.mxu0 0.0
    %840 = vmatpush1.msra.mxu0 0.0
    %841 = vmatprep.subr.mxu0 0.0
    %842 = vmatpush1.msra.mxu0 0.0
    %843 = vmatprep.subr.mxu0 0.0
    %844 = vmatpush1.msra.mxu0 0.0
    %845 = vmatprep.mubr.f32.mxu0 0.0
    %846 = vmatmul.mubr.f32.gmra.mrb[0].mxu0 %v704
    %v847 = vpop.f32.mrb[0].mxu0
    %v848 = vadd.f32 0.0, %v847
    %v849 = vpop.f32.mrb[0].mxu0
    %v850 = vadd.f32 0.0, %v849
    %851 = vdwg.mxu0
    %v852 = vadd.f32 %v706, %v777
    %v853 = vadd.f32 %v707, %v779
    %v854 = vadd.f32 %v708, %v848
    %v855 = vadd.f32 %v709, %v850
    %v856 = vxor.u32 %v852, 2147483648
    %v857 = vmul.f32 %v856, 1.442695
    %v858 = vpow.pop %v857
    %v859 = vadd.f32 %v858, 1.0
    %v860 = vrcp.pop %v859
    %v861 = vmul.f32 1.0, %v860
    %v862 = vxor.u32 %v853, 2147483648
    %v863 = vmul.f32 %v862, 1.442695
    %v864 = vpow.pop %v863
    %v865 = vadd.f32 %v864, 1.0
    %v866 = vrcp.pop %v865
    %v867 = vmul.f32 1.0, %v866
    %v868 = vtanh.pop %v854
    %v869 = vxor.u32 %v855, 2147483648
    %v870 = vmul.f32 %v869, 1.442695
    %v871 = vpow.pop %v870
    %v872 = vadd.f32 %v871, 1.0
    %v873 = vrcp.pop %v872
    %v874 = vmul.f32 1.0, %v873
    %v875 = vmul.f32 %v867, %v702
    %v876 = vmul.f32 %v861, %v868
    %v877 = vadd.f32 %v875, %v876
    %v878 = vtanh.pop %v877
    %v879 = vmul.f32 %v874, %v878
    %880 = vst [vmem:[#allocation3 + $0x8] sm:$0xff] %v879
    %v881 = vld [vmem:[#allocation2 + $0x40] sm:$0xff]
    %v882 = vld [vmem:[#allocation2 + $0x48] sm:$0xff]
    %v883 = vld [vmem:[#allocation2 + $0x50] sm:$0xff]
    %v884 = vld [vmem:[#allocation2 + $0x58] sm:$0xff]
    %885 = vmatprep.subr.mxu0 %v468
    %886 = vmatpush1.msra.mxu0 %v467
    %887 = vmatprep.subr.mxu0 %v472
    %888 = vmatpush1.msra.mxu0 %v471
    %889 = vmatprep.subr.mxu0 %v476
    %890 = vmatpush1.msra.mxu0 %v475
    %891 = vmatprep.subr.mxu0 %v480
    %892 = vmatpush1.msra.mxu0 %v479
    %893 = vmatprep.subr.mxu0 %v484
    %894 = vmatpush1.msra.mxu0 %v483
    %895 = vmatprep.subr.mxu0 %v488
    %896 = vmatpush1.msra.mxu0 %v487
    %897 = vmatprep.subr.mxu0 %v492
    %898 = vmatpush1.msra.mxu0 %v491
    %899 = vmatprep.subr.mxu0 %v496
    %900 = vmatpush1.msra.mxu0 %v495
    %901 = vmatprep.subr.mxu0 %v500
    %902 = vmatpush1.msra.mxu0 %v499
    %903 = vmatprep.subr.mxu0 %v504
    %904 = vmatpush1.msra.mxu0 %v503
    %905 = vmatprep.subr.mxu0 %v508
    %906 = vmatpush1.msra.mxu0 %v507
    %907 = vmatprep.subr.mxu0 %v512
    %908 = vmatpush1.msra.mxu0 %v511
    %909 = vmatprep.subr.mxu0 %v516
    %910 = vmatpush1.msra.mxu0 %v515
    %911 = vmatprep.subr.mxu0 %v520
    %912 = vmatpush1.msra.mxu0 %v519
    %913 = vmatprep.subr.mxu0 %v524
    %914 = vmatpush1.msra.mxu0 %v523
    %915 = vmatprep.subr.mxu0 %v528
    %916 = vmatpush1.msra.mxu0 %v527
    %917 = vmatprep.subr.mxu0 0.0
    %918 = vmatpush1.msra.mxu0 0.0
    %919 = vmatprep.subr.mxu0 0.0
    %920 = vmatpush1.msra.mxu0 0.0
    %921 = vmatprep.subr.mxu0 0.0
    %922 = vmatpush1.msra.mxu0 0.0
    %923 = vmatprep.subr.mxu0 0.0
    %924 = vmatpush1.msra.mxu0 0.0
    %925 = vmatprep.subr.mxu0 0.0
    %926 = vmatpush1.msra.mxu0 0.0
    %927 = vmatprep.subr.mxu0 0.0
    %928 = vmatpush1.msra.mxu0 0.0
    %929 = vmatprep.subr.mxu0 0.0
    %930 = vmatpush1.msra.mxu0 0.0
    %931 = vmatprep.subr.mxu0 0.0
    %932 = vmatpush1.msra.mxu0 0.0
    %933 = vmatprep.subr.mxu0 0.0
    %934 = vmatpush1.msra.mxu0 0.0
    %935 = vmatprep.subr.mxu0 0.0
    %936 = vmatpush1.msra.mxu0 0.0
    %937 = vmatprep.subr.mxu0 0.0
    %938 = vmatpush1.msra.mxu0 0.0
    %939 = vmatprep.subr.mxu0 0.0
    %940 = vmatpush1.msra.mxu0 0.0
    %941 = vmatprep.subr.mxu0 0.0
    %942 = vmatpush1.msra.mxu0 0.0
    %943 = vmatprep.subr.mxu0 0.0
    %944 = vmatpush1.msra.mxu0 0.0
    %945 = vmatprep.subr.mxu0 0.0
    %946 = vmatpush1.msra.mxu0 0.0
    %947 = vmatprep.subr.mxu0 0.0
    %948 = vmatpush1.msra.mxu0 0.0
    %949 = vmatprep.mubr.f32.mxu0 0.0
    %950 = vmatmul.mubr.f32.gmra.mrb[0].mxu0 %v879
    %v951 = vpop.f32.mrb[0].mxu0
    %v952 = vadd.f32 0.0, %v951
    %v953 = vpop.f32.mrb[0].mxu0
    %v954 = vadd.f32 0.0, %v953
    %955 = vdwg.mxu0
    %956 = vmatprep.subr.mxu0 %v470
    %957 = vmatpush1.msra.mxu0 %v469
    %958 = vmatprep.subr.mxu0 %v474
    %959 = vmatpush1.msra.mxu0 %v473
    %960 = vmatprep.subr.mxu0 %v478
    %961 = vmatpush1.msra.mxu0 %v477
    %962 = vmatprep.subr.mxu0 %v482
    %963 = vmatpush1.msra.mxu0 %v481
    %964 = vmatprep.subr.mxu0 %v486
    %965 = vmatpush1.msra.mxu0 %v485
    %966 = vmatprep.subr.mxu0 %v490
    %967 = vmatpush1.msra.mxu0 %v489
    %968 = vmatprep.subr.mxu0 %v494
    %969 = vmatpush1.msra.mxu0 %v493
    %970 = vmatprep.subr.mxu0 %v498
    %971 = vmatpush1.msra.mxu0 %v497
    %972 = vmatprep.subr.mxu0 %v502
    %973 = vmatpush1.msra.mxu0 %v501
    %974 = vmatprep.subr.mxu0 %v506
    %975 = vmatpush1.msra.mxu0 %v505
    %976 = vmatprep.subr.mxu0 %v510
    %977 = vmatpush1.msra.mxu0 %v509
    %978 = vmatprep.subr.mxu0 %v514
    %979 = vmatpush1.msra.mxu0 %v513
    %980 = vmatprep.subr.mxu0 %v518
    %981 = vmatpush1.msra.mxu0 %v517
    %982 = vmatprep.subr.mxu0 %v522
    %983 = vmatpush1.msra.mxu0 %v521
    %984 = vmatprep.subr.mxu0 %v526
    %985 = vmatpush1.msra.mxu0 %v525
    %986 = vmatprep.subr.mxu0 %v530
    %987 = vmatpush1.msra.mxu0 %v529
    %988 = vmatprep.subr.mxu0 0.0
    %989 = vmatpush1.msra.mxu0 0.0
    %990 = vmatprep.subr.mxu0 0.0
    %991 = vmatpush1.msra.mxu0 0.0
    %992 = vmatprep.subr.mxu0 0.0
    %993 = vmatpush1.msra.mxu0 0.0
    %994 = vmatprep.subr.mxu0 0.0
    %995 = vmatpush1.msra.mxu0 0.0
    %996 = vmatprep.subr.mxu0 0.0
    %997 = vmatpush1.msra.mxu0 0.0
    %998 = vmatprep.subr.mxu0 0.0
    %999 = vmatpush1.msra.mxu0 0.0
    %1000 = vmatprep.subr.mxu0 0.0
    %1001 = vmatpush1.msra.mxu0 0.0
    %1002 = vmatprep.subr.mxu0 0.0
    %1003 = vmatpush1.msra.mxu0 0.0
    %1004 = vmatprep.subr.mxu0 0.0
    %1005 = vmatpush1.msra.mxu0 0.0
    %1006 = vmatprep.subr.mxu0 0.0
    %1007 = vmatpush1.msra.mxu0 0.0
    %1008 = vmatprep.subr.mxu0 0.0
    %1009 = vmatpush1.msra.mxu0 0.0
    %1010 = vmatprep.subr.mxu0 0.0
    %1011 = vmatpush1.msra.mxu0 0.0
    %1012 = vmatprep.subr.mxu0 0.0
    %1013 = vmatpush1.msra.mxu0 0.0
    %1014 = vmatprep.subr.mxu0 0.0
    %1015 = vmatpush1.msra.mxu0 0.0
    %1016 = vmatprep.subr.mxu0 0.0
    %1017 = vmatpush1.msra.mxu0 0.0
    %1018 = vmatprep.subr.mxu0 0.0
    %1019 = vmatpush1.msra.mxu0 0.0
    %1020 = vmatprep.mubr.f32.mxu0 0.0
    %1021 = vmatmul.mubr.f32.gmra.mrb[0].mxu0 %v879
    %v1022 = vpop.f32.mrb[0].mxu0
    %v1023 = vadd.f32 0.0, %v1022
    %v1024 = vpop.f32.mrb[0].mxu0
    %v1025 = vadd.f32 0.0, %v1024
    %1026 = vdwg.mxu0
    %v1027 = vadd.f32 %v881, %v952
    %v1028 = vadd.f32 %v882, %v954
    %v1029 = vadd.f32 %v883, %v1023
    %v1030 = vadd.f32 %v884, %v1025
    %v1031 = vxor.u32 %v1027, 2147483648
    %v1032 = vmul.f32 %v1031, 1.442695
    %v1033 = vpow.pop %v1032
    %v1034 = vadd.f32 %v1033, 1.0
    %v1035 = vrcp.pop %v1034
    %v1036 = vmul.f32 1.0, %v1035
    %v1037 = vxor.u32 %v1028, 2147483648
    %v1038 = vmul.f32 %v1037, 1.442695
    %v1039 = vpow.pop %v1038
    %v1040 = vadd.f32 %v1039, 1.0
    %v1041 = vrcp.pop %v1040
    %v1042 = vmul.f32 1.0, %v1041
    %v1043 = vtanh.pop %v1029
    %v1044 = vxor.u32 %v1030, 2147483648
    %v1045 = vmul.f32 %v1044, 1.442695
    %v1046 = vpow.pop %v1045
    %v1047 = vadd.f32 %v1046, 1.0
    %v1048 = vrcp.pop %v1047
    %v1049 = vmul.f32 1.0, %v1048
    %v1050 = vmul.f32 %v1042, %v877
    %v1051 = vmul.f32 %v1036, %v1043
    %v1052 = vadd.f32 %v1050, %v1051
    %v1053 = vtanh.pop %v1052
    %v1054 = vmul.f32 %v1049, %v1053
    %1055 = vst [vmem:[#allocation3 + $0x10] sm:$0xff] %v1054
    %v1056 = vld [vmem:[#allocation2 + $0x60] sm:$0xff]
    %v1057 = vld [vmem:[#allocation2 + $0x68] sm:$0xff]
    %v1058 = vld [vmem:[#allocation2 + $0x70] sm:$0xff]
    %v1059 = vld [vmem:[#allocation2 + $0x78] sm:$0xff]
    %1060 = vmatprep.subr.mxu0 %v468
    %1061 = vmatpush1.msra.mxu0 %v467
    %1062 = vmatprep.subr.mxu0 %v472
    %1063 = vmatpush1.msra.mxu0 %v471
    %1064 = vmatprep.subr.mxu0 %v476
    %1065 = vmatpush1.msra.mxu0 %v475
    %1066 = vmatprep.subr.mxu0 %v480
    %1067 = vmatpush1.msra.mxu0 %v479
    %1068 = vmatprep.subr.mxu0 %v484
    %1069 = vmatpush1.msra.mxu0 %v483
    %1070 = vmatprep.subr.mxu0 %v488
    %1071 = vmatpush1.msra.mxu0 %v487
    %1072 = vmatprep.subr.mxu0 %v492
    %1073 = vmatpush1.msra.mxu0 %v491
    %1074 = vmatprep.subr.mxu0 %v496
    %1075 = vmatpush1.msra.mxu0 %v495
    %1076 = vmatprep.subr.mxu0 %v500
    %1077 = vmatpush1.msra.mxu0 %v499
    %1078 = vmatprep.subr.mxu0 %v504
    %1079 = vmatpush1.msra.mxu0 %v503
    %1080 = vmatprep.subr.mxu0 %v508
    %1081 = vmatpush1.msra.mxu0 %v507
    %1082 = vmatprep.subr.mxu0 %v512
    %1083 = vmatpush1.msra.mxu0 %v511
    %1084 = vmatprep.subr.mxu0 %v516
    %1085 = vmatpush1.msra.mxu0 %v515
    %1086 = vmatprep.subr.mxu0 %v520
    %1087 = vmatpush1.msra.mxu0 %v519
    %1088 = vmatprep.subr.mxu0 %v524
    %1089 = vmatpush1.msra.mxu0 %v523
    %1090 = vmatprep.subr.mxu0 %v528
    %1091 = vmatpush1.msra.mxu0 %v527
    %1092 = vmatprep.subr.mxu0 0.0
    %1093 = vmatpush1.msra.mxu0 0.0
    %1094 = vmatprep.subr.mxu0 0.0
    %1095 = vmatpush1.msra.mxu0 0.0
    %1096 = vmatprep.subr.mxu0 0.0
    %1097 = vmatpush1.msra.mxu0 0.0
    %1098 = vmatprep.subr.mxu0 0.0
    %1099 = vmatpush1.msra.mxu0 0.0
    %1100 = vmatprep.subr.mxu0 0.0
    %1101 = vmatpush1.msra.mxu0 0.0
    %1102 = vmatprep.subr.mxu0 0.0
    %1103 = vmatpush1.msra.mxu0 0.0
    %1104 = vmatprep.subr.mxu0 0.0
    %1105 = vmatpush1.msra.mxu0 0.0
    %1106 = vmatprep.subr.mxu0 0.0
    %1107 = vmatpush1.msra.mxu0 0.0
    %1108 = vmatprep.subr.mxu0 0.0
    %1109 = vmatpush1.msra.mxu0 0.0
    %1110 = vmatprep.subr.mxu0 0.0
    %1111 = vmatpush1.msra.mxu0 0.0
    %1112 = vmatprep.subr.mxu0 0.0
    %1113 = vmatpush1.msra.mxu0 0.0
    %1114 = vmatprep.subr.mxu0 0.0
    %1115 = vmatpush1.msra.mxu0 0.0
    %1116 = vmatprep.subr.mxu0 0.0
    %1117 = vmatpush1.msra.mxu0 0.0
    %1118 = vmatprep.subr.mxu0 0.0
    %1119 = vmatpush1.msra.mxu0 0.0
    %1120 = vmatprep.subr.mxu0 0.0
    %1121 = vmatpush1.msra.mxu0 0.0
    %1122 = vmatprep.subr.mxu0 0.0
    %1123 = vmatpush1.msra.mxu0 0.0
    %1124 = vmatprep.mubr.f32.mxu0 0.0
    %1125 = vmatmul.mubr.f32.gmra.mrb[0].mxu0 %v1054
    %v1126 = vpop.f32.mrb[0].mxu0
    %v1127 = vadd.f32 0.0, %v1126
    %v1128 = vpop.f32.mrb[0].mxu0
    %v1129 = vadd.f32 0.0, %v1128
    %1130 = vdwg.mxu0
    %1131 = vmatprep.subr.mxu0 %v470
    %1132 = vmatpush1.msra.mxu0 %v469
    %1133 = vmatprep.subr.mxu0 %v474
    %1134 = vmatpush1.msra.mxu0 %v473
    %1135 = vmatprep.subr.mxu0 %v478
    %1136 = vmatpush1.msra.mxu0 %v477
    %1137 = vmatprep.subr.mxu0 %v482
    %1138 = vmatpush1.msra.mxu0 %v481
    %1139 = vmatprep.subr.mxu0 %v486
    %1140 = vmatpush1.msra.mxu0 %v485
    %1141 = vmatprep.subr.mxu0 %v490
    %1142 = vmatpush1.msra.mxu0 %v489
    %1143 = vmatprep.subr.mxu0 %v494
    %1144 = vmatpush1.msra.mxu0 %v493
    %1145 = vmatprep.subr.mxu0 %v498
    %1146 = vmatpush1.msra.mxu0 %v497
    %1147 = vmatprep.subr.mxu0 %v502
    %1148 = vmatpush1.msra.mxu0 %v501
    %1149 = vmatprep.subr.mxu0 %v506
    %1150 = vmatpush1.msra.mxu0 %v505
    %1151 = vmatprep.subr.mxu0 %v510
    %1152 = vmatpush1.msra.mxu0 %v509
    %1153 = vmatprep.subr.mxu0 %v514
    %1154 = vmatpush1.msra.mxu0 %v513
    %1155 = vmatprep.subr.mxu0 %v518
    %1156 = vmatpush1.msra.mxu0 %v517
    %1157 = vmatprep.subr.mxu0 %v522
    %1158 = vmatpush1.msra.mxu0 %v521
    %1159 = vmatprep.subr.mxu0 %v526
    %1160 = vmatpush1.msra.mxu0 %v525
    %1161 = vmatprep.subr.mxu0 %v530
    %1162 = vmatpush1.msra.mxu0 %v529
    %1163 = vmatprep.subr.mxu0 0.0
    %1164 = vmatpush1.msra.mxu0 0.0
    %1165 = vmatprep.subr.mxu0 0.0
    %1166 = vmatpush1.msra.mxu0 0.0
    %1167 = vmatprep.subr.mxu0 0.0
    %1168 = vmatpush1.msra.mxu0 0.0
    %1169 = vmatprep.subr.mxu0 0.0
    %1170 = vmatpush1.msra.mxu0 0.0
    %1171 = vmatprep.subr.mxu0 0.0
    %1172 = vmatpush1.msra.mxu0 0.0
    %1173 = vmatprep.subr.mxu0 0.0
    %1174 = vmatpush1.msra.mxu0 0.0
    %1175 = vmatprep.subr.mxu0 0.0
    %1176 = vmatpush1.msra.mxu0 0.0
    %1177 = vmatprep.subr.mxu0 0.0
    %1178 = vmatpush1.msra.mxu0 0.0
    %1179 = vmatprep.subr.mxu0 0.0
    %1180 = vmatpush1.msra.mxu0 0.0
    %1181 = vmatprep.subr.mxu0 0.0
    %1182 = vmatpush1.msra.mxu0 0.0
    %1183 = vmatprep.subr.mxu0 0.0
    %1184 = vmatpush1.msra.mxu0 0.0
    %1185 = vmatprep.subr.mxu0 0.0
    %1186 = vmatpush1.msra.mxu0 0.0
    %1187 = vmatprep.subr.mxu0 0.0
    %1188 = vmatpush1.msra.mxu0 0.0
    %1189 = vmatprep.subr.mxu0 0.0
    %1190 = vmatpush1.msra.mxu0 0.0
    %1191 = vmatprep.subr.mxu0 0.0
    %1192 = vmatpush1.msra.mxu0 0.0
    %1193 = vmatprep.subr.mxu0 0.0
    %1194 = vmatpush1.msra.mxu0 0.0
    %1195 = vmatprep.mubr.f32.mxu0 0.0
    %1196 = vmatmul.mubr.f32.gmra.mrb[0].mxu0 %v1054
    %v1197 = vpop.f32.mrb[0].mxu0
    %v1198 = vadd.f32 0.0, %v1197
    %v1199 = vpop.f32.mrb[0].mxu0
    %v1200 = vadd.f32 0.0, %v1199
    %1201 = vdwg.mxu0
    %v1202 = vadd.f32 %v1056, %v1127
    %v1203 = vadd.f32 %v1057, %v1129
    %v1204 = vadd.f32 %v1058, %v1198
    %v1205 = vadd.f32 %v1059, %v1200
    %v1206 = vxor.u32 %v1202, 2147483648
    %v1207 = vmul.f32 %v1206, 1.442695
    %v1208 = vpow.pop %v1207
    %v1209 = vadd.f32 %v1208, 1.0
    %v1210 = vrcp.pop %v1209
    %v1211 = vmul.f32 1.0, %v1210
    %v1212 = vxor.u32 %v1203, 2147483648
    %v1213 = vmul.f32 %v1212, 1.442695
    %v1214 = vpow.pop %v1213
    %v1215 = vadd.f32 %v1214, 1.0
    %v1216 = vrcp.pop %v1215
    %v1217 = vmul.f32 1.0, %v1216
    %v1218 = vtanh.pop %v1204
    %v1219 = vxor.u32 %v1205, 2147483648
    %v1220 = vmul.f32 %v1219, 1.442695
    %v1221 = vpow.pop %v1220
    %v1222 = vadd.f32 %v1221, 1.0
    %v1223 = vrcp.pop %v1222
    %v1224 = vmul.f32 1.0, %v1223
    %v1225 = vmul.f32 %v1217, %v1052
    %v1226 = vmul.f32 %v1211, %v1218
    %v1227 = vadd.f32 %v1225, %v1226
    %v1228 = vtanh.pop %v1227
    %v1229 = vmul.f32 %v1224, %v1228
    %1230 = vst [vmem:[#allocation3 + $0x18] sm:$0xff] %v1229
    %v1231 = vld [vmem:[#allocation2 + $0x80] sm:$0xff]
    %v1232 = vld [vmem:[#allocation2 + $0x88] sm:$0xff]
    %v1233 = vld [vmem:[#allocation2 + $0x90] sm:$0xff]
    %v1234 = vld [vmem:[#allocation2 + $0x98] sm:$0xff]
    %1235 = vmatprep.subr.mxu0 %v468
    %1236 = vmatpush1.msra.mxu0 %v467
    %1237 = vmatprep.subr.mxu0 %v472
    %1238 = vmatpush1.msra.mxu0 %v471
    %1239 = vmatprep.subr.mxu0 %v476
    %1240 = vmatpush1.msra.mxu0 %v475
    %1241 = vmatprep.subr.mxu0 %v480
    %1242 = vmatpush1.msra.mxu0 %v479
    %1243 = vmatprep.subr.mxu0 %v484
    %1244 = vmatpush1.msra.mxu0 %v483
    %1245 = vmatprep.subr.mxu0 %v488
    %1246 = vmatpush1.msra.mxu0 %v487
    %1247 = vmatprep.subr.mxu0 %v492
    %1248 = vmatpush1.msra.mxu0 %v491
    %1249 = vmatprep.subr.mxu0 %v496
    %1250 = vmatpush1.msra.mxu0 %v495
    %1251 = vmatprep.subr.mxu0 %v500
    %1252 = vmatpush1.msra.mxu0 %v499
    %1253 = vmatprep.subr.mxu0 %v504
    %1254 = vmatpush1.msra.mxu0 %v503
    %1255 = vmatprep.subr.mxu0 %v508
    %1256 = vmatpush1.msra.mxu0 %v507
    %1257 = vmatprep.subr.mxu0 %v512
    %1258 = vmatpush1.msra.mxu0 %v511
    %1259 = vmatprep.subr.mxu0 %v516
    %1260 = vmatpush1.msra.mxu0 %v515
    %1261 = vmatprep.subr.mxu0 %v520
    %1262 = vmatpush1.msra.mxu0 %v519
    %1263 = vmatprep.subr.mxu0 %v524
    %1264 = vmatpush1.msra.mxu0 %v523
    %1265 = vmatprep.subr.mxu0 %v528
    %1266 = vmatpush1.msra.mxu0 %v527
    %1267 = vmatprep.subr.mxu0 0.0
    %1268 = vmatpush1.msra.mxu0 0.0
    %1269 = vmatprep.subr.mxu0 0.0
    %1270 = vmatpush1.msra.mxu0 0.0
    %1271 = vmatprep.subr.mxu0 0.0
    %1272 = vmatpush1.msra.mxu0 0.0
    %1273 = vmatprep.subr.mxu0 0.0
    %1274 = vmatpush1.msra.mxu0 0.0
    %1275 = vmatprep.subr.mxu0 0.0
    %1276 = vmatpush1.msra.mxu0 0.0
    %1277 = vmatprep.subr.mxu0 0.0
    %1278 = vmatpush1.msra.mxu0 0.0
    %1279 = vmatprep.subr.mxu0 0.0
    %1280 = vmatpush1.msra.mxu0 0.0
    %1281 = vmatprep.subr.mxu0 0.0
    %1282 = vmatpush1.msra.mxu0 0.0
    %1283 = vmatprep.subr.mxu0 0.0
    %1284 = vmatpush1.msra.mxu0 0.0
    %1285 = vmatprep.subr.mxu0 0.0
    %1286 = vmatpush1.msra.mxu0 0.0
    %1287 = vmatprep.subr.mxu0 0.0
    %1288 = vmatpush1.msra.mxu0 0.0
    %1289 = vmatprep.subr.mxu0 0.0
    %1290 = vmatpush1.msra.mxu0 0.0
    %1291 = vmatprep.subr.mxu0 0.0
    %1292 = vmatpush1.msra.mxu0 0.0
    %1293 = vmatprep.subr.mxu0 0.0
    %1294 = vmatpush1.msra.mxu0 0.0
    %1295 = vmatprep.subr.mxu0 0.0
    %1296 = vmatpush1.msra.mxu0 0.0
    %1297 = vmatprep.subr.mxu0 0.0
    %1298 = vmatpush1.msra.mxu0 0.0
    %1299 = vmatprep.mubr.f32.mxu0 0.0
    %1300 = vmatmul.mubr.f32.gmra.mrb[0].mxu0 %v1229
    %v1301 = vpop.f32.mrb[0].mxu0
    %v1302 = vadd.f32 0.0, %v1301
    %v1303 = vpop.f32.mrb[0].mxu0
    %v1304 = vadd.f32 0.0, %v1303
    %1305 = vdwg.mxu0
    %1306 = vmatprep.subr.mxu0 %v470
    %1307 = vmatpush1.msra.mxu0 %v469
    %1308 = vmatprep.subr.mxu0 %v474
    %1309 = vmatpush1.msra.mxu0 %v473
    %1310 = vmatprep.subr.mxu0 %v478
    %1311 = vmatpush1.msra.mxu0 %v477
    %1312 = vmatprep.subr.mxu0 %v482
    %1313 = vmatpush1.msra.mxu0 %v481
    %1314 = vmatprep.subr.mxu0 %v486
    %1315 = vmatpush1.msra.mxu0 %v485
    %1316 = vmatprep.subr.mxu0 %v490
    %1317 = vmatpush1.msra.mxu0 %v489
    %1318 = vmatprep.subr.mxu0 %v494
    %1319 = vmatpush1.msra.mxu0 %v493
    %1320 = vmatprep.subr.mxu0 %v498
    %1321 = vmatpush1.msra.mxu0 %v497
    %1322 = vmatprep.subr.mxu0 %v502
    %1323 = vmatpush1.msra.mxu0 %v501
    %1324 = vmatprep.subr.mxu0 %v506
    %1325 = vmatpush1.msra.mxu0 %v505
    %1326 = vmatprep.subr.mxu0 %v510
    %1327 = vmatpush1.msra.mxu0 %v509
    %1328 = vmatprep.subr.mxu0 %v514
    %1329 = vmatpush1.msra.mxu0 %v513
    %1330 = vmatprep.subr.mxu0 %v518
    %1331 = vmatpush1.msra.mxu0 %v517
    %1332 = vmatprep.subr.mxu0 %v522
    %1333 = vmatpush1.msra.mxu0 %v521
    %1334 = vmatprep.subr.mxu0 %v526
    %1335 = vmatpush1.msra.mxu0 %v525
    %1336 = vmatprep.subr.mxu0 %v530
    %1337 = vmatpush1.msra.mxu0 %v529
    %1338 = vmatprep.subr.mxu0 0.0
    %1339 = vmatpush1.msra.mxu0 0.0
    %1340 = vmatprep.subr.mxu0 0.0
    %1341 = vmatpush1.msra.mxu0 0.0
    %1342 = vmatprep.subr.mxu0 0.0
    %1343 = vmatpush1.msra.mxu0 0.0
    %1344 = vmatprep.subr.mxu0 0.0
    %1345 = vmatpush1.msra.mxu0 0.0
    %1346 = vmatprep.subr.mxu0 0.0
    %1347 = vmatpush1.msra.mxu0 0.0
    %1348 = vmatprep.subr.mxu0 0.0
    %1349 = vmatpush1.msra.mxu0 0.0
    %1350 = vmatprep.subr.mxu0 0.0
    %1351 = vmatpush1.msra.mxu0 0.0
    %1352 = vmatprep.subr.mxu0 0.0
    %1353 = vmatpush1.msra.mxu0 0.0
    %1354 = vmatprep.subr.mxu0 0.0
    %1355 = vmatpush1.msra.mxu0 0.0
    %1356 = vmatprep.subr.mxu0 0.0
    %1357 = vmatpush1.msra.mxu0 0.0
    %1358 = vmatprep.subr.mxu0 0.0
    %1359 = vmatpush1.msra.mxu0 0.0
    %1360 = vmatprep.subr.mxu0 0.0
    %1361 = vmatpush1.msra.mxu0 0.0
    %1362 = vmatprep.subr.mxu0 0.0
    %1363 = vmatpush1.msra.mxu0 0.0
    %1364 = vmatprep.subr.mxu0 0.0
    %1365 = vmatpush1.msra.mxu0 0.0
    %1366 = vmatprep.subr.mxu0 0.0
    %1367 = vmatpush1.msra.mxu0 0.0
    %1368 = vmatprep.subr.mxu0 0.0
    %1369 = vmatpush1.msra.mxu0 0.0
    %1370 = vmatprep.mubr.f32.mxu0 0.0
    %1371 = vmatmul.mubr.f32.gmra.mrb[0].mxu0 %v1229
    %v1372 = vpop.f32.mrb[0].mxu0
    %v1373 = vadd.f32 0.0, %v1372
    %v1374 = vpop.f32.mrb[0].mxu0
    %v1375 = vadd.f32 0.0, %v1374
    %1376 = vdwg.mxu0
    %v1377 = vadd.f32 %v1231, %v1302
    %v1378 = vadd.f32 %v1232, %v1304
    %v1379 = vadd.f32 %v1233, %v1373
    %v1380 = vadd.f32 %v1234, %v1375
    %v1381 = vxor.u32 %v1377, 2147483648
    %v1382 = vmul.f32 %v1381, 1.442695
    %v1383 = vpow.pop %v1382
    %v1384 = vadd.f32 %v1383, 1.0
    %v1385 = vrcp.pop %v1384
    %v1386 = vmul.f32 1.0, %v1385
    %v1387 = vxor.u32 %v1378, 2147483648
    %v1388 = vmul.f32 %v1387, 1.442695
    %v1389 = vpow.pop %v1388
    %v1390 = vadd.f32 %v1389, 1.0
    %v1391 = vrcp.pop %v1390
    %v1392 = vmul.f32 1.0, %v1391
    %v1393 = vtanh.pop %v1379
    %v1394 = vxor.u32 %v1380, 2147483648
    %v1395 = vmul.f32 %v1394, 1.442695
    %v1396 = vpow.pop %v1395
    %v1397 = vadd.f32 %v1396, 1.0
    %v1398 = vrcp.pop %v1397
    %v1399 = vmul.f32 1.0, %v1398
    %v1400 = vmul.f32 %v1392, %v1227
    %v1401 = vmul.f32 %v1386, %v1393
    %v1402 = vadd.f32 %v1400, %v1401
    %v1403 = vtanh.pop %v1402
    %v1404 = vmul.f32 %v1399, %v1403
    %1405 = vst [vmem:[#allocation3 + $0x20] sm:$0xff] %v1404
    %v1406 = vld [vmem:[#allocation2 + $0xa0] sm:$0xff]
    %v1407 = vld [vmem:[#allocation2 + $0xa8] sm:$0xff]
    %v1408 = vld [vmem:[#allocation2 + $0xb0] sm:$0xff]
    %v1409 = vld [vmem:[#allocation2 + $0xb8] sm:$0xff]
    %1410 = vmatprep.subr.mxu0 %v468
    %1411 = vmatpush1.msra.mxu0 %v467
    %1412 = vmatprep.subr.mxu0 %v472
    %1413 = vmatpush1.msra.mxu0 %v471
    %1414 = vmatprep.subr.mxu0 %v476
    %1415 = vmatpush1.msra.mxu0 %v475
    %1416 = vmatprep.subr.mxu0 %v480
    %1417 = vmatpush1.msra.mxu0 %v479
    %1418 = vmatprep.subr.mxu0 %v484
    %1419 = vmatpush1.msra.mxu0 %v483
    %1420 = vmatprep.subr.mxu0 %v488
    %1421 = vmatpush1.msra.mxu0 %v487
    %1422 = vmatprep.subr.mxu0 %v492
    %1423 = vmatpush1.msra.mxu0 %v491
    %1424 = vmatprep.subr.mxu0 %v496
    %1425 = vmatpush1.msra.mxu0 %v495
    %1426 = vmatprep.subr.mxu0 %v500
    %1427 = vmatpush1.msra.mxu0 %v499
    %1428 = vmatprep.subr.mxu0 %v504
    %1429 = vmatpush1.msra.mxu0 %v503
    %1430 = vmatprep.subr.mxu0 %v508
    %1431 = vmatpush1.msra.mxu0 %v507
    %1432 = vmatprep.subr.mxu0 %v512
    %1433 = vmatpush1.msra.mxu0 %v511
    %1434 = vmatprep.subr.mxu0 %v516
    %1435 = vmatpush1.msra.mxu0 %v515
    %1436 = vmatprep.subr.mxu0 %v520
    %1437 = vmatpush1.msra.mxu0 %v519
    %1438 = vmatprep.subr.mxu0 %v524
    %1439 = vmatpush1.msra.mxu0 %v523
    %1440 = vmatprep.subr.mxu0 %v528
    %1441 = vmatpush1.msra.mxu0 %v527
    %1442 = vmatprep.subr.mxu0 0.0
    %1443 = vmatpush1.msra.mxu0 0.0
    %1444 = vmatprep.subr.mxu0 0.0
    %1445 = vmatpush1.msra.mxu0 0.0
    %1446 = vmatprep.subr.mxu0 0.0
    %1447 = vmatpush1.msra.mxu0 0.0
    %1448 = vmatprep.subr.mxu0 0.0
    %1449 = vmatpush1.msra.mxu0 0.0
    %1450 = vmatprep.subr.mxu0 0.0
    %1451 = vmatpush1.msra.mxu0 0.0
    %1452 = vmatprep.subr.mxu0 0.0
    %1453 = vmatpush1.msra.mxu0 0.0
    %1454 = vmatprep.subr.mxu0 0.0
    %1455 = vmatpush1.msra.mxu0 0.0
    %1456 = vmatprep.subr.mxu0 0.0
    %1457 = vmatpush1.msra.mxu0 0.0
    %1458 = vmatprep.subr.mxu0 0.0
    %1459 = vmatpush1.msra.mxu0 0.0
    %1460 = vmatprep.subr.mxu0 0.0
    %1461 = vmatpush1.msra.mxu0 0.0
    %1462 = vmatprep.subr.mxu0 0.0
    %1463 = vmatpush1.msra.mxu0 0.0
    %1464 = vmatprep.subr.mxu0 0.0
    %1465 = vmatpush1.msra.mxu0 0.0
    %1466 = vmatprep.subr.mxu0 0.0
    %1467 = vmatpush1.msra.mxu0 0.0
    %1468 = vmatprep.subr.mxu0 0.0
    %1469 = vmatpush1.msra.mxu0 0.0
    %1470 = vmatprep.subr.mxu0 0.0
    %1471 = vmatpush1.msra.mxu0 0.0
    %1472 = vmatprep.subr.mxu0 0.0
    %1473 = vmatpush1.msra.mxu0 0.0
    %1474 = vmatprep.mubr.f32.mxu0 0.0
    %1475 = vmatmul.mubr.f32.gmra.mrb[0].mxu0 %v1404
    %v1476 = vpop.f32.mrb[0].mxu0
    %v1477 = vadd.f32 0.0, %v1476
    %v1478 = vpop.f32.mrb[0].mxu0
    %v1479 = vadd.f32 0.0, %v1478
    %1480 = vdwg.mxu0
    %1481 = vmatprep.subr.mxu0 %v470
    %1482 = vmatpush1.msra.mxu0 %v469
    %1483 = vmatprep.subr.mxu0 %v474
    %1484 = vmatpush1.msra.mxu0 %v473
    %1485 = vmatprep.subr.mxu0 %v478
    %1486 = vmatpush1.msra.mxu0 %v477
    %1487 = vmatprep.subr.mxu0 %v482
    %1488 = vmatpush1.msra.mxu0 %v481
    %1489 = vmatprep.subr.mxu0 %v486
    %1490 = vmatpush1.msra.mxu0 %v485
    %1491 = vmatprep.subr.mxu0 %v490
    %1492 = vmatpush1.msra.mxu0 %v489
    %1493 = vmatprep.subr.mxu0 %v494
    %1494 = vmatpush1.msra.mxu0 %v493
    %1495 = vmatprep.subr.mxu0 %v498
    %1496 = vmatpush1.msra.mxu0 %v497
    %1497 = vmatprep.subr.mxu0 %v502
    %1498 = vmatpush1.msra.mxu0 %v501
    %1499 = vmatprep.subr.mxu0 %v506
    %1500 = vmatpush1.msra.mxu0 %v505
    %1501 = vmatprep.subr.mxu0 %v510
    %1502 = vmatpush1.msra.mxu0 %v509
    %1503 = vmatprep.subr.mxu0 %v514
    %1504 = vmatpush1.msra.mxu0 %v513
    %1505 = vmatprep.subr.mxu0 %v518
    %1506 = vmatpush1.msra.mxu0 %v517
    %1507 = vmatprep.subr.mxu0 %v522
    %1508 = vmatpush1.msra.mxu0 %v521
    %1509 = vmatprep.subr.mxu0 %v526
    %1510 = vmatpush1.msra.mxu0 %v525
    %1511 = vmatprep.subr.mxu0 %v530
    %1512 = vmatpush1.msra.mxu0 %v529
    %1513 = vmatprep.subr.mxu0 0.0
    %1514 = vmatpush1.msra.mxu0 0.0
    %1515 = vmatprep.subr.mxu0 0.0
    %1516 = vmatpush1.msra.mxu0 0.0
    %1517 = vmatprep.subr.mxu0 0.0
    %1518 = vmatpush1.msra.mxu0 0.0
    %1519 = vmatprep.subr.mxu0 0.0
    %1520 = vmatpush1.msra.mxu0 0.0
    %1521 = vmatprep.subr.mxu0 0.0
    %1522 = vmatpush1.msra.mxu0 0.0
    %1523 = vmatprep.subr.mxu0 0.0
    %1524 = vmatpush1.msra.mxu0 0.0
    %1525 = vmatprep.subr.mxu0 0.0
    %1526 = vmatpush1.msra.mxu0 0.0
    %1527 = vmatprep.subr.mxu0 0.0
    %1528 = vmatpush1.msra.mxu0 0.0
    %1529 = vmatprep.subr.mxu0 0.0
    %1530 = vmatpush1.msra.mxu0 0.0
    %1531 = vmatprep.subr.mxu0 0.0
    %1532 = vmatpush1.msra.mxu0 0.0
    %1533 = vmatprep.subr.mxu0 0.0
    %1534 = vmatpush1.msra.mxu0 0.0
    %1535 = vmatprep.subr.mxu0 0.0
    %1536 = vmatpush1.msra.mxu0 0.0
    %1537 = vmatprep.subr.mxu0 0.0
    %1538 = vmatpush1.msra.mxu0 0.0
    %1539 = vmatprep.subr.mxu0 0.0
    %1540 = vmatpush1.msra.mxu0 0.0
    %1541 = vmatprep.subr.mxu0 0.0
    %1542 = vmatpush1.msra.mxu0 0.0
    %1543 = vmatprep.subr.mxu0 0.0
    %1544 = vmatpush1.msra.mxu0 0.0
    %1545 = vmatprep.mubr.f32.mxu0 0.0
    %1546 = vmatmul.mubr.f32.gmra.mrb[0].mxu0 %v1404
    %v1547 = vpop.f32.mrb[0].mxu0
    %v1548 = vadd.f32 0.0, %v1547
    %v1549 = vpop.f32.mrb[0].mxu0
    %v1550 = vadd.f32 0.0, %v1549
    %1551 = vdwg.mxu0
    %v1552 = vadd.f32 %v1406, %v1477
    %v1553 = vadd.f32 %v1407, %v1479
    %v1554 = vadd.f32 %v1408, %v1548
    %v1555 = vadd.f32 %v1409, %v1550
    %v1556 = vxor.u32 %v1552, 2147483648
    %v1557 = vmul.f32 %v1556, 1.442695
    %v1558 = vpow.pop %v1557
    %v1559 = vadd.f32 %v1558, 1.0
    %v1560 = vrcp.pop %v1559
    %v1561 = vmul.f32 1.0, %v1560
    %v1562 = vxor.u32 %v1553, 2147483648
    %v1563 = vmul.f32 %v1562, 1.442695
    %v1564 = vpow.pop %v1563
    %v1565 = vadd.f32 %v1564, 1.0
    %v1566 = vrcp.pop %v1565
    %v1567 = vmul.f32 1.0, %v1566
    %v1568 = vtanh.pop %v1554
    %v1569 = vxor.u32 %v1555, 2147483648
    %v1570 = vmul.f32 %v1569, 1.442695
    %v1571 = vpow.pop %v1570
    %v1572 = vadd.f32 %v1571, 1.0
    %v1573 = vrcp.pop %v1572
    %v1574 = vmul.f32 1.0, %v1573
    %v1575 = vmul.f32 %v1567, %v1402
    %v1576 = vmul.f32 %v1561, %v1568
    %v1577 = vadd.f32 %v1575, %v1576
    %v1578 = vtanh.pop %v1577
    %v1579 = vmul.f32 %v1574, %v1578
    %1580 = vst [vmem:[#allocation3 + $0x28] sm:$0xff] %v1579
    %v1581 = vld [vmem:[#allocation2 + $0xc0] sm:$0xff]
    %v1582 = vld [vmem:[#allocation2 + $0xc8] sm:$0xff]
    %v1583 = vld [vmem:[#allocation2 + $0xd0] sm:$0xff]
    %v1584 = vld [vmem:[#allocation2 + $0xd8] sm:$0xff]
    %1585 = vmatprep.subr.mxu0 %v468
    %1586 = vmatpush1.msra.mxu0 %v467
    %1587 = vmatprep.subr.mxu0 %v472
    %1588 = vmatpush1.msra.mxu0 %v471
    %1589 = vmatprep.subr.mxu0 %v476
    %1590 = vmatpush1.msra.mxu0 %v475
    %1591 = vmatprep.subr.mxu0 %v480
    %1592 = vmatpush1.msra.mxu0 %v479
    %1593 = vmatprep.subr.mxu0 %v484
    %1594 = vmatpush1.msra.mxu0 %v483
    %1595 = vmatprep.subr.mxu0 %v488
    %1596 = vmatpush1.msra.mxu0 %v487
    %1597 = vmatprep.subr.mxu0 %v492
    %1598 = vmatpush1.msra.mxu0 %v491
    %1599 = vmatprep.subr.mxu0 %v496
    %1600 = vmatpush1.msra.mxu0 %v495
    %1601 = vmatprep.subr.mxu0 %v500
    %1602 = vmatpush1.msra.mxu0 %v499
    %1603 = vmatprep.subr.mxu0 %v504
    %1604 = vmatpush1.msra.mxu0 %v503
    %1605 = vmatprep.subr.mxu0 %v508
    %1606 = vmatpush1.msra.mxu0 %v507
    %1607 = vmatprep.subr.mxu0 %v512
    %1608 = vmatpush1.msra.mxu0 %v511
    %1609 = vmatprep.subr.mxu0 %v516
    %1610 = vmatpush1.msra.mxu0 %v515
    %1611 = vmatprep.subr.mxu0 %v520
    %1612 = vmatpush1.msra.mxu0 %v519
    %1613 = vmatprep.subr.mxu0 %v524
    %1614 = vmatpush1.msra.mxu0 %v523
    %1615 = vmatprep.subr.mxu0 %v528
    %1616 = vmatpush1.msra.mxu0 %v527
    %1617 = vmatprep.subr.mxu0 0.0
    %1618 = vmatpush1.msra.mxu0 0.0
    %1619 = vmatprep.subr.mxu0 0.0
    %1620 = vmatpush1.msra.mxu0 0.0
    %1621 = vmatprep.subr.mxu0 0.0
    %1622 = vmatpush1.msra.mxu0 0.0
    %1623 = vmatprep.subr.mxu0 0.0
    %1624 = vmatpush1.msra.mxu0 0.0
    %1625 = vmatprep.subr.mxu0 0.0
    %1626 = vmatpush1.msra.mxu0 0.0
    %1627 = vmatprep.subr.mxu0 0.0
    %1628 = vmatpush1.msra.mxu0 0.0
    %1629 = vmatprep.subr.mxu0 0.0
    %1630 = vmatpush1.msra.mxu0 0.0
    %1631 = vmatprep.subr.mxu0 0.0
    %1632 = vmatpush1.msra.mxu0 0.0
    %1633 = vmatprep.subr.mxu0 0.0
    %1634 = vmatpush1.msra.mxu0 0.0
    %1635 = vmatprep.subr.mxu0 0.0
    %1636 = vmatpush1.msra.mxu0 0.0
    %1637 = vmatprep.subr.mxu0 0.0
    %1638 = vmatpush1.msra.mxu0 0.0
    %1639 = vmatprep.subr.mxu0 0.0
    %1640 = vmatpush1.msra.mxu0 0.0
    %1641 = vmatprep.subr.mxu0 0.0
    %1642 = vmatpush1.msra.mxu0 0.0
    %1643 = vmatprep.subr.mxu0 0.0
    %1644 = vmatpush1.msra.mxu0 0.0
    %1645 = vmatprep.subr.mxu0 0.0
    %1646 = vmatpush1.msra.mxu0 0.0
    %1647 = vmatprep.subr.mxu0 0.0
    %1648 = vmatpush1.msra.mxu0 0.0
    %1649 = vmatprep.mubr.f32.mxu0 0.0
    %1650 = vmatmul.mubr.f32.gmra.mrb[0].mxu0 %v1579
    %v1651 = vpop.f32.mrb[0].mxu0
    %v1652 = vadd.f32 0.0, %v1651
    %v1653 = vpop.f32.mrb[0].mxu0
    %v1654 = vadd.f32 0.0, %v1653
    %1655 = vdwg.mxu0
    %1656 = vmatprep.subr.mxu0 %v470
    %1657 = vmatpush1.msra.mxu0 %v469
    %1658 = vmatprep.subr.mxu0 %v474
    %1659 = vmatpush1.msra.mxu0 %v473
    %1660 = vmatprep.subr.mxu0 %v478
    %1661 = vmatpush1.msra.mxu0 %v477
    %1662 = vmatprep.subr.mxu0 %v482
    %1663 = vmatpush1.msra.mxu0 %v481
    %1664 = vmatprep.subr.mxu0 %v486
    %1665 = vmatpush1.msra.mxu0 %v485
    %1666 = vmatprep.subr.mxu0 %v490
    %1667 = vmatpush1.msra.mxu0 %v489
    %1668 = vmatprep.subr.mxu0 %v494
    %1669 = vmatpush1.msra.mxu0 %v493
    %1670 = vmatprep.subr.mxu0 %v498
    %1671 = vmatpush1.msra.mxu0 %v497
    %1672 = vmatprep.subr.mxu0 %v502
    %1673 = vmatpush1.msra.mxu0 %v501
    %1674 = vmatprep.subr.mxu0 %v506
    %1675 = vmatpush1.msra.mxu0 %v505
    %1676 = vmatprep.subr.mxu0 %v510
    %1677 = vmatpush1.msra.mxu0 %v509
    %1678 = vmatprep.subr.mxu0 %v514
    %1679 = vmatpush1.msra.mxu0 %v513
    %1680 = vmatprep.subr.mxu0 %v518
    %1681 = vmatpush1.msra.mxu0 %v517
    %1682 = vmatprep.subr.mxu0 %v522
    %1683 = vmatpush1.msra.mxu0 %v521
    %1684 = vmatprep.subr.mxu0 %v526
    %1685 = vmatpush1.msra.mxu0 %v525
    %1686 = vmatprep.subr.mxu0 %v530
    %1687 = vmatpush1.msra.mxu0 %v529
    %1688 = vmatprep.subr.mxu0 0.0
    %1689 = vmatpush1.msra.mxu0 0.0
    %1690 = vmatprep.subr.mxu0 0.0
    %1691 = vmatpush1.msra.mxu0 0.0
    %1692 = vmatprep.subr.mxu0 0.0
    %1693 = vmatpush1.msra.mxu0 0.0
    %1694 = vmatprep.subr.mxu0 0.0
    %1695 = vmatpush1.msra.mxu0 0.0
    %1696 = vmatprep.subr.mxu0 0.0
    %1697 = vmatpush1.msra.mxu0 0.0
    %1698 = vmatprep.subr.mxu0 0.0
    %1699 = vmatpush1.msra.mxu0 0.0
    %1700 = vmatprep.subr.mxu0 0.0
    %1701 = vmatpush1.msra.mxu0 0.0
    %1702 = vmatprep.subr.mxu0 0.0
    %1703 = vmatpush1.msra.mxu0 0.0
    %1704 = vmatprep.subr.mxu0 0.0
    %1705 = vmatpush1.msra.mxu0 0.0
    %1706 = vmatprep.subr.mxu0 0.0
    %1707 = vmatpush1.msra.mxu0 0.0
    %1708 = vmatprep.subr.mxu0 0.0
    %1709 = vmatpush1.msra.mxu0 0.0
    %1710 = vmatprep.subr.mxu0 0.0
    %1711 = vmatpush1.msra.mxu0 0.0
    %1712 = vmatprep.subr.mxu0 0.0
    %1713 = vmatpush1.msra.mxu0 0.0
    %1714 = vmatprep.subr.mxu0 0.0
    %1715 = vmatpush1.msra.mxu0 0.0
    %1716 = vmatprep.subr.mxu0 0.0
    %1717 = vmatpush1.msra.mxu0 0.0
    %1718 = vmatprep.subr.mxu0 0.0
    %1719 = vmatpush1.msra.mxu0 0.0
    %1720 = vmatprep.mubr.f32.mxu0 0.0
    %1721 = vmatmul.mubr.f32.gmra.mrb[0].mxu0 %v1579
    %v1722 = vpop.f32.mrb[0].mxu0
    %v1723 = vadd.f32 0.0, %v1722
    %v1724 = vpop.f32.mrb[0].mxu0
    %v1725 = vadd.f32 0.0, %v1724
    %1726 = vdwg.mxu0
    %v1727 = vadd.f32 %v1581, %v1652
    %v1728 = vadd.f32 %v1582, %v1654
    %v1729 = vadd.f32 %v1583, %v1723
    %v1730 = vadd.f32 %v1584, %v1725
    %v1731 = vxor.u32 %v1727, 2147483648
    %v1732 = vmul.f32 %v1731, 1.442695
    %v1733 = vpow.pop %v1732
    %v1734 = vadd.f32 %v1733, 1.0
    %v1735 = vrcp.pop %v1734
    %v1736 = vmul.f32 1.0, %v1735
    %v1737 = vxor.u32 %v1728, 2147483648
    %v1738 = vmul.f32 %v1737, 1.442695
    %v1739 = vpow.pop %v1738
    %v1740 = vadd.f32 %v1739, 1.0
    %v1741 = vrcp.pop %v1740
    %v1742 = vmul.f32 1.0, %v1741
    %v1743 = vtanh.pop %v1729
    %v1744 = vxor.u32 %v1730, 2147483648
    %v1745 = vmul.f32 %v1744, 1.442695
    %v1746 = vpow.pop %v1745
    %v1747 = vadd.f32 %v1746, 1.0
    %v1748 = vrcp.pop %v1747
    %v1749 = vmul.f32 1.0, %v1748
    %v1750 = vmul.f32 %v1742, %v1577
    %v1751 = vmul.f32 %v1736, %v1743
    %v1752 = vadd.f32 %v1750, %v1751
    %v1753 = vtanh.pop %v1752
    %v1754 = vmul.f32 %v1749, %v1753
    %1755 = vst [vmem:[#allocation3 + $0x30] sm:$0xff] %v1754
    %v1756 = vld [vmem:[#allocation2 + $0xe0] sm:$0xff]
    %v1757 = vld [vmem:[#allocation2 + $0xe8] sm:$0xff]
    %v1758 = vld [vmem:[#allocation2 + $0xf0] sm:$0xff]
    %v1759 = vld [vmem:[#allocation2 + $0xf8] sm:$0xff]
    %1760 = vmatprep.subr.mxu0 %v468
    %1761 = vmatpush1.msra.mxu0 %v467
    %1762 = vmatprep.subr.mxu0 %v472
    %1763 = vmatpush1.msra.mxu0 %v471
    %1764 = vmatprep.subr.mxu0 %v476
    %1765 = vmatpush1.msra.mxu0 %v475
    %1766 = vmatprep.subr.mxu0 %v480
    %1767 = vmatpush1.msra.mxu0 %v479
    %1768 = vmatprep.subr.mxu0 %v484
    %1769 = vmatpush1.msra.mxu0 %v483
    %1770 = vmatprep.subr.mxu0 %v488
    %1771 = vmatpush1.msra.mxu0 %v487
    %1772 = vmatprep.subr.mxu0 %v492
    %1773 = vmatpush1.msra.mxu0 %v491
    %1774 = vmatprep.subr.mxu0 %v496
    %1775 = vmatpush1.msra.mxu0 %v495
    %1776 = vmatprep.subr.mxu0 %v500
    %1777 = vmatpush1.msra.mxu0 %v499
    %1778 = vmatprep.subr.mxu0 %v504
    %1779 = vmatpush1.msra.mxu0 %v503
    %1780 = vmatprep.subr.mxu0 %v508
    %1781 = vmatpush1.msra.mxu0 %v507
    %1782 = vmatprep.subr.mxu0 %v512
    %1783 = vmatpush1.msra.mxu0 %v511
    %1784 = vmatprep.subr.mxu0 %v516
    %1785 = vmatpush1.msra.mxu0 %v515
    %1786 = vmatprep.subr.mxu0 %v520
    %1787 = vmatpush1.msra.mxu0 %v519
    %1788 = vmatprep.subr.mxu0 %v524
    %1789 = vmatpush1.msra.mxu0 %v523
    %1790 = vmatprep.subr.mxu0 %v528
    %1791 = vmatpush1.msra.mxu0 %v527
    %1792 = vmatprep.subr.mxu0 0.0
    %1793 = vmatpush1.msra.mxu0 0.0
    %1794 = vmatprep.subr.mxu0 0.0
    %1795 = vmatpush1.msra.mxu0 0.0
    %1796 = vmatprep.subr.mxu0 0.0
    %1797 = vmatpush1.msra.mxu0 0.0
    %1798 = vmatprep.subr.mxu0 0.0
    %1799 = vmatpush1.msra.mxu0 0.0
    %1800 = vmatprep.subr.mxu0 0.0
    %1801 = vmatpush1.msra.mxu0 0.0
    %1802 = vmatprep.subr.mxu0 0.0
    %1803 = vmatpush1.msra.mxu0 0.0
    %1804 = vmatprep.subr.mxu0 0.0
    %1805 = vmatpush1.msra.mxu0 0.0
    %1806 = vmatprep.subr.mxu0 0.0
    %1807 = vmatpush1.msra.mxu0 0.0
    %1808 = vmatprep.subr.mxu0 0.0
    %1809 = vmatpush1.msra.mxu0 0.0
    %1810 = vmatprep.subr.mxu0 0.0
    %1811 = vmatpush1.msra.mxu0 0.0
    %1812 = vmatprep.subr.mxu0 0.0
    %1813 = vmatpush1.msra.mxu0 0.0
    %1814 = vmatprep.subr.mxu0 0.0
    %1815 = vmatpush1.msra.mxu0 0.0
    %1816 = vmatprep.subr.mxu0 0.0
    %1817 = vmatpush1.msra.mxu0 0.0
    %1818 = vmatprep.subr.mxu0 0.0
    %1819 = vmatpush1.msra.mxu0 0.0
    %1820 = vmatprep.subr.mxu0 0.0
    %1821 = vmatpush1.msra.mxu0 0.0
    %1822 = vmatprep.subr.mxu0 0.0
    %1823 = vmatpush1.msra.mxu0 0.0
    %1824 = vmatprep.mubr.f32.mxu0 0.0
    %1825 = vmatmul.mubr.f32.gmra.mrb[0].mxu0 %v1754
    %v1826 = vpop.f32.mrb[0].mxu0
    %v1827 = vadd.f32 0.0, %v1826
    %v1828 = vpop.f32.mrb[0].mxu0
    %v1829 = vadd.f32 0.0, %v1828
    %1830 = vdwg.mxu0
    %1831 = vmatprep.subr.mxu0 %v470
    %1832 = vmatpush1.msra.mxu0 %v469
    %1833 = vmatprep.subr.mxu0 %v474
    %1834 = vmatpush1.msra.mxu0 %v473
    %1835 = vmatprep.subr.mxu0 %v478
    %1836 = vmatpush1.msra.mxu0 %v477
    %1837 = vmatprep.subr.mxu0 %v482
    %1838 = vmatpush1.msra.mxu0 %v481
    %1839 = vmatprep.subr.mxu0 %v486
    %1840 = vmatpush1.msra.mxu0 %v485
    %1841 = vmatprep.subr.mxu0 %v490
    %1842 = vmatpush1.msra.mxu0 %v489
    %1843 = vmatprep.subr.mxu0 %v494
    %1844 = vmatpush1.msra.mxu0 %v493
    %1845 = vmatprep.subr.mxu0 %v498
    %1846 = vmatpush1.msra.mxu0 %v497
    %1847 = vmatprep.subr.mxu0 %v502
    %1848 = vmatpush1.msra.mxu0 %v501
    %1849 = vmatprep.subr.mxu0 %v506
    %1850 = vmatpush1.msra.mxu0 %v505
    %1851 = vmatprep.subr.mxu0 %v510
    %1852 = vmatpush1.msra.mxu0 %v509
    %1853 = vmatprep.subr.mxu0 %v514
    %1854 = vmatpush1.msra.mxu0 %v513
    %1855 = vmatprep.subr.mxu0 %v518
    %1856 = vmatpush1.msra.mxu0 %v517
    %1857 = vmatprep.subr.mxu0 %v522
    %1858 = vmatpush1.msra.mxu0 %v521
    %1859 = vmatprep.subr.mxu0 %v526
    %1860 = vmatpush1.msra.mxu0 %v525
    %1861 = vmatprep.subr.mxu0 %v530
    %1862 = vmatpush1.msra.mxu0 %v529
    %1863 = vmatprep.subr.mxu0 0.0
    %1864 = vmatpush1.msra.mxu0 0.0
    %1865 = vmatprep.subr.mxu0 0.0
    %1866 = vmatpush1.msra.mxu0 0.0
    %1867 = vmatprep.subr.mxu0 0.0
    %1868 = vmatpush1.msra.mxu0 0.0
    %1869 = vmatprep.subr.mxu0 0.0
    %1870 = vmatpush1.msra.mxu0 0.0
    %1871 = vmatprep.subr.mxu0 0.0
    %1872 = vmatpush1.msra.mxu0 0.0
    %1873 = vmatprep.subr.mxu0 0.0
    %1874 = vmatpush1.msra.mxu0 0.0
    %1875 = vmatprep.subr.mxu0 0.0
    %1876 = vmatpush1.msra.mxu0 0.0
    %1877 = vmatprep.subr.mxu0 0.0
    %1878 = vmatpush1.msra.mxu0 0.0
    %1879 = vmatprep.subr.mxu0 0.0
    %1880 = vmatpush1.msra.mxu0 0.0
    %1881 = vmatprep.subr.mxu0 0.0
    %1882 = vmatpush1.msra.mxu0 0.0
    %1883 = vmatprep.subr.mxu0 0.0
    %1884 = vmatpush1.msra.mxu0 0.0
    %1885 = vmatprep.subr.mxu0 0.0
    %1886 = vmatpush1.msra.mxu0 0.0
    %1887 = vmatprep.subr.mxu0 0.0
    %1888 = vmatpush1.msra.mxu0 0.0
    %1889 = vmatprep.subr.mxu0 0.0
    %1890 = vmatpush1.msra.mxu0 0.0
    %1891 = vmatprep.subr.mxu0 0.0
    %1892 = vmatpush1.msra.mxu0 0.0
    %1893 = vmatprep.subr.mxu0 0.0
    %1894 = vmatpush1.msra.mxu0 0.0
    %1895 = vmatprep.mubr.f32.mxu0 0.0
    %1896 = vmatmul.mubr.f32.gmra.mrb[0].mxu0 %v1754
    %v1897 = vpop.f32.mrb[0].mxu0
    %v1898 = vadd.f32 0.0, %v1897
    %v1899 = vpop.f32.mrb[0].mxu0
    %v1900 = vadd.f32 0.0, %v1899
    %1901 = vdwg.mxu0
    %v1902 = vadd.f32 %v1756, %v1827
    %v1903 = vadd.f32 %v1757, %v1829
    %v1904 = vadd.f32 %v1758, %v1898
    %v1905 = vadd.f32 %v1759, %v1900
    %v1906 = vxor.u32 %v1902, 2147483648
    %v1907 = vmul.f32 %v1906, 1.442695
    %v1908 = vpow.pop %v1907
    %v1909 = vadd.f32 %v1908, 1.0
    %v1910 = vrcp.pop %v1909
    %v1911 = vmul.f32 1.0, %v1910
    %v1912 = vxor.u32 %v1903, 2147483648
    %v1913 = vmul.f32 %v1912, 1.442695
    %v1914 = vpow.pop %v1913
    %v1915 = vadd.f32 %v1914, 1.0
    %v1916 = vrcp.pop %v1915
    %v1917 = vmul.f32 1.0, %v1916
    %v1918 = vtanh.pop %v1904
    %v1919 = vxor.u32 %v1905, 2147483648
    %v1920 = vmul.f32 %v1919, 1.442695
    %v1921 = vpow.pop %v1920
    %v1922 = vadd.f32 %v1921, 1.0
    %v1923 = vrcp.pop %v1922
    %v1924 = vmul.f32 1.0, %v1923
    %v1925 = vmul.f32 %v1917, %v1752
    %v1926 = vmul.f32 %v1911, %v1918
    %v1927 = vadd.f32 %v1925, %v1926
    %v1928 = vtanh.pop %v1927
    %v1929 = vmul.f32 %v1924, %v1928
    %1930 = vst [vmem:[#allocation3 + $0x38] sm:$0xff] %v1929
    %v1931 = vld [vmem:[#allocation3] sm:$0xff]
    %v1932 = vld [vmem:[#allocation3 + $0x8] sm:$0xff]
    %v1933 = vld [vmem:[#allocation3 + $0x10] sm:$0xff]
    %v1934 = vld [vmem:[#allocation3 + $0x18] sm:$0xff]
    %v1935 = vld [vmem:[#allocation3 + $0x20] sm:$0xff]
    %v1936 = vld [vmem:[#allocation3 + $0x28] sm:$0xff]
    %v1937 = vld [vmem:[#allocation3 + $0x30] sm:$0xff]
    %v1938 = vld [vmem:[#allocation3 + $0x38] sm:$0xff]
    %v1939 = vld [vmem:[#allocation10] sm:$0xff]
    %v1940 = vld [vmem:[#allocation10 + $0x8] sm:$0xff]
    %v1941 = vld [vmem:[#allocation10 + $0x10] sm:$0xff]
    %v1942 = vld [vmem:[#allocation10 + $0x18] sm:$0xff]
    %v1943 = vld [vmem:[#allocation10 + $0x20] sm:$0xff]
    %v1944 = vld [vmem:[#allocation10 + $0x28] sm:$0xff]
    %v1945 = vld [vmem:[#allocation10 + $0x30] sm:$0xff]
    %v1946 = vld [vmem:[#allocation10 + $0x38] sm:$0xff]
    %v1947 = vld [vmem:[#allocation10 + $0x40] sm:$0xff]
    %v1948 = vld [vmem:[#allocation10 + $0x48] sm:$0xff]
    %v1949 = vld [vmem:[#allocation10 + $0x50] sm:$0xff]
    %v1950 = vld [vmem:[#allocation10 + $0x58] sm:$0xff]
    %v1951 = vld [vmem:[#allocation10 + $0x60] sm:$0xff]
    %v1952 = vld [vmem:[#allocation10 + $0x68] sm:$0xff]
    %v1953 = vld [vmem:[#allocation10 + $0x70] sm:$0xff]
    %v1954 = vld [vmem:[#allocation10 + $0x78] sm:$0xff]
    %v1955 = vld [vmem:[#allocation10 + $0x80] sm:$0xff]
    %v1956 = vld [vmem:[#allocation10 + $0x88] sm:$0xff]
    %v1957 = vld [vmem:[#allocation10 + $0x90] sm:$0xff]
    %v1958 = vld [vmem:[#allocation10 + $0x98] sm:$0xff]
    %v1959 = vld [vmem:[#allocation10 + $0xa0] sm:$0xff]
    %v1960 = vld [vmem:[#allocation10 + $0xa8] sm:$0xff]
    %v1961 = vld [vmem:[#allocation10 + $0xb0] sm:$0xff]
    %v1962 = vld [vmem:[#allocation10 + $0xb8] sm:$0xff]
    %v1963 = vld [vmem:[#allocation10 + $0xc0] sm:$0xff]
    %v1964 = vld [vmem:[#allocation10 + $0xc8] sm:$0xff]
    %v1965 = vld [vmem:[#allocation10 + $0xd0] sm:$0xff]
    %v1966 = vld [vmem:[#allocation10 + $0xd8] sm:$0xff]
    %v1967 = vld [vmem:[#allocation10 + $0xe0] sm:$0xff]
    %v1968 = vld [vmem:[#allocation10 + $0xe8] sm:$0xff]
    %v1969 = vld [vmem:[#allocation10 + $0xf0] sm:$0xff]
    %v1970 = vld [vmem:[#allocation10 + $0xf8] sm:$0xff]
    %v1971 = vld [vmem:[#allocation10 + $0x100] sm:$0xff]
    %v1972 = vld [vmem:[#allocation10 + $0x108] sm:$0xff]
    %v1973 = vld [vmem:[#allocation10 + $0x110] sm:$0xff]
    %v1974 = vld [vmem:[#allocation10 + $0x118] sm:$0xff]
    %v1975 = vld [vmem:[#allocation10 + $0x120] sm:$0xff]
    %v1976 = vld [vmem:[#allocation10 + $0x128] sm:$0xff]
    %v1977 = vld [vmem:[#allocation10 + $0x130] sm:$0xff]
    %v1978 = vld [vmem:[#allocation10 + $0x138] sm:$0xff]
    %v1979 = vld [vmem:[#allocation10 + $0x140] sm:$0xff]
    %v1980 = vld [vmem:[#allocation10 + $0x148] sm:$0xff]
    %v1981 = vld [vmem:[#allocation10 + $0x150] sm:$0xff]
    %v1982 = vld [vmem:[#allocation10 + $0x158] sm:$0xff]
    %v1983 = vld [vmem:[#allocation10 + $0x160] sm:$0xff]
    %v1984 = vld [vmem:[#allocation10 + $0x168] sm:$0xff]
    %v1985 = vld [vmem:[#allocation10 + $0x170] sm:$0xff]
    %v1986 = vld [vmem:[#allocation10 + $0x178] sm:$0xff]
    %v1987 = vld [vmem:[#allocation10 + $0x180] sm:$0xff]
    %v1988 = vld [vmem:[#allocation10 + $0x188] sm:$0xff]
    %v1989 = vld [vmem:[#allocation10 + $0x190] sm:$0xff]
    %v1990 = vld [vmem:[#allocation10 + $0x198] sm:$0xff]
    %v1991 = vld [vmem:[#allocation10 + $0x1a0] sm:$0xff]
    %v1992 = vld [vmem:[#allocation10 + $0x1a8] sm:$0xff]
    %v1993 = vld [vmem:[#allocation10 + $0x1b0] sm:$0xff]
    %v1994 = vld [vmem:[#allocation10 + $0x1b8] sm:$0xff]
    %v1995 = vld [vmem:[#allocation10 + $0x1c0] sm:$0xff]
    %v1996 = vld [vmem:[#allocation10 + $0x1c8] sm:$0xff]
    %v1997 = vld [vmem:[#allocation10 + $0x1d0] sm:$0xff]
    %v1998 = vld [vmem:[#allocation10 + $0x1d8] sm:$0xff]
    %v1999 = vld [vmem:[#allocation10 + $0x1e0] sm:$0xff]
    %v2000 = vld [vmem:[#allocation10 + $0x1e8] sm:$0xff]
    %v2001 = vld [vmem:[#allocation10 + $0x1f0] sm:$0xff]
    %v2002 = vld [vmem:[#allocation10 + $0x1f8] sm:$0xff]
    %v2003 = vld [vmem:[%s6] sm:$0xf]
    %v2005 = vlaneseq
    %v2006 = vshrl.u32 %v2005, 7
    %v2007 = vsub.s32 0, %v2006
    %v2008 = vrot.slane %v2003, %v2007
    %v2009 = vlaneseq
    %v2010 = vshrl.u32 %v2009, 7
    %v2011 = vsub.s32 1, %v2010
    %v2012 = vrot.slane %v2003, %v2011
    %v2013 = vlaneseq
    %v2014 = vshrl.u32 %v2013, 7
    %v2015 = vsub.s32 2, %v2014
    %v2016 = vrot.slane %v2003, %v2015
    %v2017 = vlaneseq
    %v2018 = vshrl.u32 %v2017, 7
    %v2019 = vsub.s32 3, %v2018
    %v2020 = vrot.slane %v2003, %v2019
    %2025 = vmatprep.subr.mxu0 %v1940
    %2026 = vmatpush1.msra.mxu0 %v1939
    %2027 = vmatprep.subr.mxu0 %v1944
    %2028 = vmatpush1.msra.mxu0 %v1943
    %2029 = vmatprep.subr.mxu0 %v1948
    %2030 = vmatpush1.msra.mxu0 %v1947
    %2031 = vmatprep.subr.mxu0 %v1952
    %2032 = vmatpush1.msra.mxu0 %v1951
    %2033 = vmatprep.subr.mxu0 %v1956
    %2034 = vmatpush1.msra.mxu0 %v1955
    %2035 = vmatprep.subr.mxu0 %v1960
    %2036 = vmatpush1.msra.mxu0 %v1959
    %2037 = vmatprep.subr.mxu0 %v1964
    %2038 = vmatpush1.msra.mxu0 %v1963
    %2039 = vmatprep.subr.mxu0 %v1968
    %2040 = vmatpush1.msra.mxu0 %v1967
    %2041 = vmatprep.subr.mxu0 %v1972
    %2042 = vmatpush1.msra.mxu0 %v1971
    %2043 = vmatprep.subr.mxu0 %v1976
    %2044 = vmatpush1.msra.mxu0 %v1975
    %2045 = vmatprep.subr.mxu0 %v1980
    %2046 = vmatpush1.msra.mxu0 %v1979
    %2047 = vmatprep.subr.mxu0 %v1984
    %2048 = vmatpush1.msra.mxu0 %v1983
    %2049 = vmatprep.subr.mxu0 %v1988
    %2050 = vmatpush1.msra.mxu0 %v1987
    %2051 = vmatprep.subr.mxu0 %v1992
    %2052 = vmatpush1.msra.mxu0 %v1991
    %2053 = vmatprep.subr.mxu0 %v1996
    %2054 = vmatpush1.msra.mxu0 %v1995
    %2055 = vmatprep.subr.mxu0 %v2000
    %2056 = vmatpush1.msra.mxu0 %v1999
    %2057 = vmatprep.subr.mxu0 0.0
    %2058 = vmatpush1.msra.mxu0 0.0
    %2059 = vmatprep.subr.mxu0 0.0
    %2060 = vmatpush1.msra.mxu0 0.0
    %2061 = vmatprep.subr.mxu0 0.0
    %2062 = vmatpush1.msra.mxu0 0.0
    %2063 = vmatprep.subr.mxu0 0.0
    %2064 = vmatpush1.msra.mxu0 0.0
    %2065 = vmatprep.subr.mxu0 0.0
    %2066 = vmatpush1.msra.mxu0 0.0
    %2067 = vmatprep.subr.mxu0 0.0
    %2068 = vmatpush1.msra.mxu0 0.0
    %2069 = vmatprep.subr.mxu0 0.0
    %2070 = vmatpush1.msra.mxu0 0.0
    %2071 = vmatprep.subr.mxu0 0.0
    %2072 = vmatpush1.msra.mxu0 0.0
    %2073 = vmatprep.subr.mxu0 0.0
    %2074 = vmatpush1.msra.mxu0 0.0
    %2075 = vmatprep.subr.mxu0 0.0
    %2076 = vmatpush1.msra.mxu0 0.0
    %2077 = vmatprep.subr.mxu0 0.0
    %2078 = vmatpush1.msra.mxu0 0.0
    %2079 = vmatprep.subr.mxu0 0.0
    %2080 = vmatpush1.msra.mxu0 0.0
    %2081 = vmatprep.subr.mxu0 0.0
    %2082 = vmatpush1.msra.mxu0 0.0
    %2083 = vmatprep.subr.mxu0 0.0
    %2084 = vmatpush1.msra.mxu0 0.0
    %2085 = vmatprep.subr.mxu0 0.0
    %2086 = vmatpush1.msra.mxu0 0.0
    %2087 = vmatprep.subr.mxu0 0.0
    %2088 = vmatpush1.msra.mxu0 0.0
    %2089 = vmatprep.mubr.f32.mxu0 0.0
    %2090 = vmatmul.mubr.f32.gmra.mrb[0].mxu0 %v1931
    %v2091 = vpop.f32.mrb[0].mxu0
    %v2092 = vadd.f32 %v2008, %v2091
    %v2093 = vpop.f32.mrb[0].mxu0
    %v2094 = vadd.f32 %v2012, %v2093
    %2095 = vmatprep.mubr.f32.mxu0 0.0
    %2096 = vmatmul.mubr.f32.gmra.mrb[0].mxu0 %v1932
    %v2097 = vpop.f32.mrb[0].mxu0
    %v2098 = vadd.f32 %v2008, %v2097
    %v2099 = vpop.f32.mrb[0].mxu0
    %v2100 = vadd.f32 %v2012, %v2099
    %2101 = vmatprep.mubr.f32.mxu0 0.0
    %2102 = vmatmul.mubr.f32.gmra.mrb[0].mxu0 %v1933
    %v2103 = vpop.f32.mrb[0].mxu0
    %v2104 = vadd.f32 %v2008, %v2103
    %v2105 = vpop.f32.mrb[0].mxu0
    %v2106 = vadd.f32 %v2012, %v2105
    %2107 = vmatprep.mubr.f32.mxu0 0.0
    %2108 = vmatmul.mubr.f32.gmra.mrb[0].mxu0 %v1934
    %v2109 = vpop.f32.mrb[0].mxu0
    %v2110 = vadd.f32 %v2008, %v2109
    %v2111 = vpop.f32.mrb[0].mxu0
    %v2112 = vadd.f32 %v2012, %v2111
    %2113 = vmatprep.mubr.f32.mxu0 0.0
    %2114 = vmatmul.mubr.f32.gmra.mrb[0].mxu0 %v1935
    %v2115 = vpop.f32.mrb[0].mxu0
    %v2116 = vadd.f32 %v2008, %v2115
    %v2117 = vpop.f32.mrb[0].mxu0
    %v2118 = vadd.f32 %v2012, %v2117
    %2119 = vmatprep.mubr.f32.mxu0 0.0
    %2120 = vmatmul.mubr.f32.gmra.mrb[0].mxu0 %v1936
    %v2121 = vpop.f32.mrb[0].mxu0
    %v2122 = vadd.f32 %v2008, %v2121
    %v2123 = vpop.f32.mrb[0].mxu0
    %v2124 = vadd.f32 %v2012, %v2123
    %2125 = vmatprep.mubr.f32.mxu0 0.0
    %2126 = vmatmul.mubr.f32.gmra.mrb[0].mxu0 %v1937
    %v2127 = vpop.f32.mrb[0].mxu0
    %v2128 = vadd.f32 %v2008, %v2127
    %v2129 = vpop.f32.mrb[0].mxu0
    %v2130 = vadd.f32 %v2012, %v2129
    %2131 = vmatprep.mubr.f32.mxu0 0.0
    %2132 = vmatmul.mubr.f32.gmra.mrb[0].mxu0 %v1938
    %v2133 = vpop.f32.mrb[0].mxu0
    %v2134 = vadd.f32 %v2008, %v2133
    %v2135 = vpop.f32.mrb[0].mxu0
    %v2136 = vadd.f32 %v2012, %v2135
    %2137 = vdwg.mxu0
    %2138 = vmatprep.subr.mxu0 %v1942
    %2139 = vmatpush1.msra.mxu0 %v1941
    %2140 = vmatprep.subr.mxu0 %v1946
    %2141 = vmatpush1.msra.mxu0 %v1945
    %2142 = vmatprep.subr.mxu0 %v1950
    %2143 = vmatpush1.msra.mxu0 %v1949
    %2144 = vmatprep.subr.mxu0 %v1954
    %2145 = vmatpush1.msra.mxu0 %v1953
    %2146 = vmatprep.subr.mxu0 %v1958
    %2147 = vmatpush1.msra.mxu0 %v1957
    %2148 = vmatprep.subr.mxu0 %v1962
    %2149 = vmatpush1.msra.mxu0 %v1961
    %2150 = vmatprep.subr.mxu0 %v1966
    %2151 = vmatpush1.msra.mxu0 %v1965
    %2152 = vmatprep.subr.mxu0 %v1970
    %2153 = vmatpush1.msra.mxu0 %v1969
    %2154 = vmatprep.subr.mxu0 %v1974
    %2155 = vmatpush1.msra.mxu0 %v1973
    %2156 = vmatprep.subr.mxu0 %v1978
    %2157 = vmatpush1.msra.mxu0 %v1977
    %2158 = vmatprep.subr.mxu0 %v1982
    %2159 = vmatpush1.msra.mxu0 %v1981
    %2160 = vmatprep.subr.mxu0 %v1986
    %2161 = vmatpush1.msra.mxu0 %v1985
    %2162 = vmatprep.subr.mxu0 %v1990
    %2163 = vmatpush1.msra.mxu0 %v1989
    %2164 = vmatprep.subr.mxu0 %v1994
    %2165 = vmatpush1.msra.mxu0 %v1993
    %2166 = vmatprep.subr.mxu0 %v1998
    %2167 = vmatpush1.msra.mxu0 %v1997
    %2168 = vmatprep.subr.mxu0 %v2002
    %2169 = vmatpush1.msra.mxu0 %v2001
    %2170 = vmatprep.subr.mxu0 0.0
    %2171 = vmatpush1.msra.mxu0 0.0
    %2172 = vmatprep.subr.mxu0 0.0
    %2173 = vmatpush1.msra.mxu0 0.0
    %2174 = vmatprep.subr.mxu0 0.0
    %2175 = vmatpush1.msra.mxu0 0.0
    %2176 = vmatprep.subr.mxu0 0.0
    %2177 = vmatpush1.msra.mxu0 0.0
    %2178 = vmatprep.subr.mxu0 0.0
    %2179 = vmatpush1.msra.mxu0 0.0
    %2180 = vmatprep.subr.mxu0 0.0
    %2181 = vmatpush1.msra.mxu0 0.0
    %2182 = vmatprep.subr.mxu0 0.0
    %2183 = vmatpush1.msra.mxu0 0.0
    %2184 = vmatprep.subr.mxu0 0.0
    %2185 = vmatpush1.msra.mxu0 0.0
    %2186 = vmatprep.subr.mxu0 0.0
    %2187 = vmatpush1.msra.mxu0 0.0
    %2188 = vmatprep.subr.mxu0 0.0
    %2189 = vmatpush1.msra.mxu0 0.0
    %2190 = vmatprep.subr.mxu0 0.0
    %2191 = vmatpush1.msra.mxu0 0.0
    %2192 = vmatprep.subr.mxu0 0.0
    %2193 = vmatpush1.msra.mxu0 0.0
    %2194 = vmatprep.subr.mxu0 0.0
    %2195 = vmatpush1.msra.mxu0 0.0
    %2196 = vmatprep.subr.mxu0 0.0
    %2197 = vmatpush1.msra.mxu0 0.0
    %2198 = vmatprep.subr.mxu0 0.0
    %2199 = vmatpush1.msra.mxu0 0.0
    %2200 = vmatprep.subr.mxu0 0.0
    %2201 = vmatpush1.msra.mxu0 0.0
    %2202 = vmatprep.mubr.f32.mxu0 0.0
    %2203 = vmatmul.mubr.f32.gmra.mrb[0].mxu0 %v1931
    %v2204 = vpop.f32.mrb[0].mxu0
    %v2205 = vadd.f32 %v2016, %v2204
    %v2206 = vpop.f32.mrb[0].mxu0
    %v2207 = vadd.f32 %v2020, %v2206
    %2208 = vmatprep.mubr.f32.mxu0 0.0
    %2209 = vmatmul.mubr.f32.gmra.mrb[0].mxu0 %v1932
    %v2210 = vpop.f32.mrb[0].mxu0
    %v2211 = vadd.f32 %v2016, %v2210
    %v2212 = vpop.f32.mrb[0].mxu0
    %v2213 = vadd.f32 %v2020, %v2212
    %2214 = vmatprep.mubr.f32.mxu0 0.0
    %2215 = vmatmul.mubr.f32.gmra.mrb[0].mxu0 %v1933
    %v2216 = vpop.f32.mrb[0].mxu0
    %v2217 = vadd.f32 %v2016, %v2216
    %v2218 = vpop.f32.mrb[0].mxu0
    %v2219 = vadd.f32 %v2020, %v2218
    %2220 = vmatprep.mubr.f32.mxu0 0.0
    %2221 = vmatmul.mubr.f32.gmra.mrb[0].mxu0 %v1934
    %v2222 = vpop.f32.mrb[0].mxu0
    %v2223 = vadd.f32 %v2016, %v2222
    %v2224 = vpop.f32.mrb[0].mxu0
    %v2225 = vadd.f32 %v2020, %v2224
    %2226 = vmatprep.mubr.f32.mxu0 0.0
    %2227 = vmatmul.mubr.f32.gmra.mrb[0].mxu0 %v1935
    %v2228 = vpop.f32.mrb[0].mxu0
    %v2229 = vadd.f32 %v2016, %v2228
    %v2230 = vpop.f32.mrb[0].mxu0
    %v2231 = vadd.f32 %v2020, %v2230
    %2232 = vmatprep.mubr.f32.mxu0 0.0
    %2233 = vmatmul.mubr.f32.gmra.mrb[0].mxu0 %v1936
    %v2234 = vpop.f32.mrb[0].mxu0
    %v2235 = vadd.f32 %v2016, %v2234
    %v2236 = vpop.f32.mrb[0].mxu0
    %v2237 = vadd.f32 %v2020, %v2236
    %2238 = vmatprep.mubr.f32.mxu0 0.0
    %2239 = vmatmul.mubr.f32.gmra.mrb[0].mxu0 %v1937
    %v2240 = vpop.f32.mrb[0].mxu0
    %v2241 = vadd.f32 %v2016, %v2240
    %v2242 = vpop.f32.mrb[0].mxu0
    %v2243 = vadd.f32 %v2020, %v2242
    %2244 = vmatprep.mubr.f32.mxu0 0.0
    %2245 = vmatmul.mubr.f32.gmra.mrb[0].mxu0 %v1938
    %v2246 = vpop.f32.mrb[0].mxu0
    %v2247 = vadd.f32 %v2016, %v2246
    %v2248 = vpop.f32.mrb[0].mxu0
    %v2249 = vadd.f32 %v2020, %v2248
    %2250 = vdwg.mxu0
    %2251 = vst [vmem:[#allocation2] sm:$0xff] %v2092
    %2252 = vst [vmem:[#allocation2 + $0x8] sm:$0xff] %v2094
    %2253 = vst [vmem:[#allocation2 + $0x10] sm:$0xff] %v2205
    %2254 = vst [vmem:[#allocation2 + $0x18] sm:$0xff] %v2207
    %2255 = vst [vmem:[#allocation2 + $0x20] sm:$0xff] %v2098
    %2256 = vst [vmem:[#allocation2 + $0x28] sm:$0xff] %v2100
    %2257 = vst [vmem:[#allocation2 + $0x30] sm:$0xff] %v2211
    %2258 = vst [vmem:[#allocation2 + $0x38] sm:$0xff] %v2213
    %2259 = vst [vmem:[#allocation2 + $0x40] sm:$0xff] %v2104
    %2260 = vst [vmem:[#allocation2 + $0x48] sm:$0xff] %v2106
    %2261 = vst [vmem:[#allocation2 + $0x50] sm:$0xff] %v2217
    %2262 = vst [vmem:[#allocation2 + $0x58] sm:$0xff] %v2219
    %2263 = vst [vmem:[#allocation2 + $0x60] sm:$0xff] %v2110
    %2264 = vst [vmem:[#allocation2 + $0x68] sm:$0xff] %v2112
    %2265 = vst [vmem:[#allocation2 + $0x70] sm:$0xff] %v2223
    %2266 = vst [vmem:[#allocation2 + $0x78] sm:$0xff] %v2225
    %2267 = vst [vmem:[#allocation2 + $0x80] sm:$0xff] %v2116
    %2268 = vst [vmem:[#allocation2 + $0x88] sm:$0xff] %v2118
    %2269 = vst [vmem:[#allocation2 + $0x90] sm:$0xff] %v2229
    %2270 = vst [vmem:[#allocation2 + $0x98] sm:$0xff] %v2231
    %2271 = vst [vmem:[#allocation2 + $0xa0] sm:$0xff] %v2122
    %2272 = vst [vmem:[#allocation2 + $0xa8] sm:$0xff] %v2124
    %2273 = vst [vmem:[#allocation2 + $0xb0] sm:$0xff] %v2235
    %2274 = vst [vmem:[#allocation2 + $0xb8] sm:$0xff] %v2237
    %2275 = vst [vmem:[#allocation2 + $0xc0] sm:$0xff] %v2128
    %2276 = vst [vmem:[#allocation2 + $0xc8] sm:$0xff] %v2130
    %2277 = vst [vmem:[#allocation2 + $0xd0] sm:$0xff] %v2241
    %2278 = vst [vmem:[#allocation2 + $0xd8] sm:$0xff] %v2243
    %2279 = vst [vmem:[#allocation2 + $0xe0] sm:$0xff] %v2134
    %2280 = vst [vmem:[#allocation2 + $0xe8] sm:$0xff] %v2136
    %2281 = vst [vmem:[#allocation2 + $0xf0] sm:$0xff] %v2247
    %2282 = vst [vmem:[#allocation2 + $0xf8] sm:$0xff] %v2249
    %v2283 = vld [vmem:[#allocation12] sm:$0xff]
    %v2284 = vld [vmem:[#allocation12 + $0x8] sm:$0xff]
    %v2285 = vld [vmem:[#allocation12 + $0x10] sm:$0xff]
    %v2286 = vld [vmem:[#allocation12 + $0x18] sm:$0xff]
    %v2287 = vld [vmem:[#allocation12 + $0x20] sm:$0xff]
    %v2288 = vld [vmem:[#allocation12 + $0x28] sm:$0xff]
    %v2289 = vld [vmem:[#allocation12 + $0x30] sm:$0xff]
    %v2290 = vld [vmem:[#allocation12 + $0x38] sm:$0xff]
    %v2291 = vld [vmem:[#allocation12 + $0x40] sm:$0xff]
    %v2292 = vld [vmem:[#allocation12 + $0x48] sm:$0xff]
    %v2293 = vld [vmem:[#allocation12 + $0x50] sm:$0xff]
    %v2294 = vld [vmem:[#allocation12 + $0x58] sm:$0xff]
    %v2295 = vld [vmem:[#allocation12 + $0x60] sm:$0xff]
    %v2296 = vld [vmem:[#allocation12 + $0x68] sm:$0xff]
    %v2297 = vld [vmem:[#allocation12 + $0x70] sm:$0xff]
    %v2298 = vld [vmem:[#allocation12 + $0x78] sm:$0xff]
    %v2299 = vld [vmem:[#allocation12 + $0x80] sm:$0xff]
    %v2300 = vld [vmem:[#allocation12 + $0x88] sm:$0xff]
    %v2301 = vld [vmem:[#allocation12 + $0x90] sm:$0xff]
    %v2302 = vld [vmem:[#allocation12 + $0x98] sm:$0xff]
    %v2303 = vld [vmem:[#allocation12 + $0xa0] sm:$0xff]
    %v2304 = vld [vmem:[#allocation12 + $0xa8] sm:$0xff]
    %v2305 = vld [vmem:[#allocation12 + $0xb0] sm:$0xff]
    %v2306 = vld [vmem:[#allocation12 + $0xb8] sm:$0xff]
    %v2307 = vld [vmem:[#allocation12 + $0xc0] sm:$0xff]
    %v2308 = vld [vmem:[#allocation12 + $0xc8] sm:$0xff]
    %v2309 = vld [vmem:[#allocation12 + $0xd0] sm:$0xff]
    %v2310 = vld [vmem:[#allocation12 + $0xd8] sm:$0xff]
    %v2311 = vld [vmem:[#allocation12 + $0xe0] sm:$0xff]
    %v2312 = vld [vmem:[#allocation12 + $0xe8] sm:$0xff]
    %v2313 = vld [vmem:[#allocation12 + $0xf0] sm:$0xff]
    %v2314 = vld [vmem:[#allocation12 + $0xf8] sm:$0xff]
    %v2315 = vld [vmem:[#allocation12 + $0x100] sm:$0xff]
    %v2316 = vld [vmem:[#allocation12 + $0x108] sm:$0xff]
    %v2317 = vld [vmem:[#allocation12 + $0x110] sm:$0xff]
    %v2318 = vld [vmem:[#allocation12 + $0x118] sm:$0xff]
    %v2319 = vld [vmem:[#allocation12 + $0x120] sm:$0xff]
    %v2320 = vld [vmem:[#allocation12 + $0x128] sm:$0xff]
    %v2321 = vld [vmem:[#allocation12 + $0x130] sm:$0xff]
    %v2322 = vld [vmem:[#allocation12 + $0x138] sm:$0xff]
    %v2323 = vld [vmem:[#allocation12 + $0x140] sm:$0xff]
    %v2324 = vld [vmem:[#allocation12 + $0x148] sm:$0xff]
    %v2325 = vld [vmem:[#allocation12 + $0x150] sm:$0xff]
    %v2326 = vld [vmem:[#allocation12 + $0x158] sm:$0xff]
    %v2327 = vld [vmem:[#allocation12 + $0x160] sm:$0xff]
    %v2328 = vld [vmem:[#allocation12 + $0x168] sm:$0xff]
    %v2329 = vld [vmem:[#allocation12 + $0x170] sm:$0xff]
    %v2330 = vld [vmem:[#allocation12 + $0x178] sm:$0xff]
    %v2331 = vld [vmem:[#allocation12 + $0x180] sm:$0xff]
    %v2332 = vld [vmem:[#allocation12 + $0x188] sm:$0xff]
    %v2333 = vld [vmem:[#allocation12 + $0x190] sm:$0xff]
    %v2334 = vld [vmem:[#allocation12 + $0x198] sm:$0xff]
    %v2335 = vld [vmem:[#allocation12 + $0x1a0] sm:$0xff]
    %v2336 = vld [vmem:[#allocation12 + $0x1a8] sm:$0xff]
    %v2337 = vld [vmem:[#allocation12 + $0x1b0] sm:$0xff]
    %v2338 = vld [vmem:[#allocation12 + $0x1b8] sm:$0xff]
    %v2339 = vld [vmem:[#allocation12 + $0x1c0] sm:$0xff]
    %v2340 = vld [vmem:[#allocation12 + $0x1c8] sm:$0xff]
    %v2341 = vld [vmem:[#allocation12 + $0x1d0] sm:$0xff]
    %v2342 = vld [vmem:[#allocation12 + $0x1d8] sm:$0xff]
    %v2343 = vld [vmem:[#allocation12 + $0x1e0] sm:$0xff]
    %v2344 = vld [vmem:[#allocation12 + $0x1e8] sm:$0xff]
    %v2345 = vld [vmem:[#allocation12 + $0x1f0] sm:$0xff]
    %v2346 = vld [vmem:[#allocation12 + $0x1f8] sm:$0xff]
    %v2347 = vld [vmem:[#allocation2] sm:$0xff]
    %v2348 = vld [vmem:[#allocation2 + $0x8] sm:$0xff]
    %v2349 = vld [vmem:[#allocation2 + $0x10] sm:$0xff]
    %v2350 = vld [vmem:[#allocation2 + $0x18] sm:$0xff]
    %2351 = vmatprep.subr.mxu0 %v2284
    %2352 = vmatpush1.msra.mxu0 %v2283
    %2353 = vmatprep.subr.mxu0 %v2288
    %2354 = vmatpush1.msra.mxu0 %v2287
    %2355 = vmatprep.subr.mxu0 %v2292
    %2356 = vmatpush1.msra.mxu0 %v2291
    %2357 = vmatprep.subr.mxu0 %v2296
    %2358 = vmatpush1.msra.mxu0 %v2295
    %2359 = vmatprep.subr.mxu0 %v2300
    %2360 = vmatpush1.msra.mxu0 %v2299
    %2361 = vmatprep.subr.mxu0 %v2304
    %2362 = vmatpush1.msra.mxu0 %v2303
    %2363 = vmatprep.subr.mxu0 %v2308
    %2364 = vmatpush1.msra.mxu0 %v2307
    %2365 = vmatprep.subr.mxu0 %v2312
    %2366 = vmatpush1.msra.mxu0 %v2311
    %2367 = vmatprep.subr.mxu0 %v2316
    %2368 = vmatpush1.msra.mxu0 %v2315
    %2369 = vmatprep.subr.mxu0 %v2320
    %2370 = vmatpush1.msra.mxu0 %v2319
    %2371 = vmatprep.subr.mxu0 %v2324
    %2372 = vmatpush1.msra.mxu0 %v2323
    %2373 = vmatprep.subr.mxu0 %v2328
    %2374 = vmatpush1.msra.mxu0 %v2327
    %2375 = vmatprep.subr.mxu0 %v2332
    %2376 = vmatpush1.msra.mxu0 %v2331
    %2377 = vmatprep.subr.mxu0 %v2336
    %2378 = vmatpush1.msra.mxu0 %v2335
    %2379 = vmatprep.subr.mxu0 %v2340
    %2380 = vmatpush1.msra.mxu0 %v2339
    %2381 = vmatprep.subr.mxu0 %v2344
    %2382 = vmatpush1.msra.mxu0 %v2343
    %2383 = vmatprep.subr.mxu0 0.0
    %2384 = vmatpush1.msra.mxu0 0.0
    %2385 = vmatprep.subr.mxu0 0.0
    %2386 = vmatpush1.msra.mxu0 0.0
    %2387 = vmatprep.subr.mxu0 0.0
    %2388 = vmatpush1.msra.mxu0 0.0
    %2389 = vmatprep.subr.mxu0 0.0
    %2390 = vmatpush1.msra.mxu0 0.0
    %2391 = vmatprep.subr.mxu0 0.0
    %2392 = vmatpush1.msra.mxu0 0.0
    %2393 = vmatprep.subr.mxu0 0.0
    %2394 = vmatpush1.msra.mxu0 0.0
    %2395 = vmatprep.subr.mxu0 0.0
    %2396 = vmatpush1.msra.mxu0 0.0
    %2397 = vmatprep.subr.mxu0 0.0
    %2398 = vmatpush1.msra.mxu0 0.0
    %2399 = vmatprep.subr.mxu0 0.0
    %2400 = vmatpush1.msra.mxu0 0.0
    %2401 = vmatprep.subr.mxu0 0.0
    %2402 = vmatpush1.msra.mxu0 0.0
    %2403 = vmatprep.subr.mxu0 0.0
    %2404 = vmatpush1.msra.mxu0 0.0
    %2405 = vmatprep.subr.mxu0 0.0
    %2406 = vmatpush1.msra.mxu0 0.0
    %2407 = vmatprep.subr.mxu0 0.0
    %2408 = vmatpush1.msra.mxu0 0.0
    %2409 = vmatprep.subr.mxu0 0.0
    %2410 = vmatpush1.msra.mxu0 0.0
    %2411 = vmatprep.subr.mxu0 0.0
    %2412 = vmatpush1.msra.mxu0 0.0
    %2413 = vmatprep.subr.mxu0 0.0
    %2414 = vmatpush1.msra.mxu0 0.0
    %2415 = vmatprep.mubr.f32.mxu0 0.0
    %2416 = vmatmul.mubr.f32.gmra.mrb[0].mxu0 0.0
    %v2417 = vpop.f32.mrb[0].mxu0
    %v2418 = vadd.f32 0.0, %v2417
    %v2419 = vpop.f32.mrb[0].mxu0
    %v2420 = vadd.f32 0.0, %v2419
    %2421 = vdwg.mxu0
    %2422 = vmatprep.subr.mxu0 %v2286
    %2423 = vmatpush1.msra.mxu0 %v2285
    %2424 = vmatprep.subr.mxu0 %v2290
    %2425 = vmatpush1.msra.mxu0 %v2289
    %2426 = vmatprep.subr.mxu0 %v2294
    %2427 = vmatpush1.msra.mxu0 %v2293
    %2428 = vmatprep.subr.mxu0 %v2298
    %2429 = vmatpush1.msra.mxu0 %v2297
    %2430 = vmatprep.subr.mxu0 %v2302
    %2431 = vmatpush1.msra.mxu0 %v2301
    %2432 = vmatprep.subr.mxu0 %v2306
    %2433 = vmatpush1.msra.mxu0 %v2305
    %2434 = vmatprep.subr.mxu0 %v2310
    %2435 = vmatpush1.msra.mxu0 %v2309
    %2436 = vmatprep.subr.mxu0 %v2314
    %2437 = vmatpush1.msra.mxu0 %v2313
    %2438 = vmatprep.subr.mxu0 %v2318
    %2439 = vmatpush1.msra.mxu0 %v2317
    %2440 = vmatprep.subr.mxu0 %v2322
    %2441 = vmatpush1.msra.mxu0 %v2321
    %2442 = vmatprep.subr.mxu0 %v2326
    %2443 = vmatpush1.msra.mxu0 %v2325
    %2444 = vmatprep.subr.mxu0 %v2330
    %2445 = vmatpush1.msra.mxu0 %v2329
    %2446 = vmatprep.subr.mxu0 %v2334
    %2447 = vmatpush1.msra.mxu0 %v2333
    %2448 = vmatprep.subr.mxu0 %v2338
    %2449 = vmatpush1.msra.mxu0 %v2337
    %2450 = vmatprep.subr.mxu0 %v2342
    %2451 = vmatpush1.msra.mxu0 %v2341
    %2452 = vmatprep.subr.mxu0 %v2346
    %2453 = vmatpush1.msra.mxu0 %v2345
    %2454 = vmatprep.subr.mxu0 0.0
    %2455 = vmatpush1.msra.mxu0 0.0
    %2456 = vmatprep.subr.mxu0 0.0
    %2457 = vmatpush1.msra.mxu0 0.0
    %2458 = vmatprep.subr.mxu0 0.0
    %2459 = vmatpush1.msra.mxu0 0.0
    %2460 = vmatprep.subr.mxu0 0.0
    %2461 = vmatpush1.msra.mxu0 0.0
    %2462 = vmatprep.subr.mxu0 0.0
    %2463 = vmatpush1.msra.mxu0 0.0
    %2464 = vmatprep.subr.mxu0 0.0
    %2465 = vmatpush1.msra.mxu0 0.0
    %2466 = vmatprep.subr.mxu0 0.0
    %2467 = vmatpush1.msra.mxu0 0.0
    %2468 = vmatprep.subr.mxu0 0.0
    %2469 = vmatpush1.msra.mxu0 0.0
    %2470 = vmatprep.subr.mxu0 0.0
    %2471 = vmatpush1.msra.mxu0 0.0
    %2472 = vmatprep.subr.mxu0 0.0
    %2473 = vmatpush1.msra.mxu0 0.0
    %2474 = vmatprep.subr.mxu0 0.0
    %2475 = vmatpush1.msra.mxu0 0.0
    %2476 = vmatprep.subr.mxu0 0.0
    %2477 = vmatpush1.msra.mxu0 0.0
    %2478 = vmatprep.subr.mxu0 0.0
    %2479 = vmatpush1.msra.mxu0 0.0
    %2480 = vmatprep.subr.mxu0 0.0
    %2481 = vmatpush1.msra.mxu0 0.0
    %2482 = vmatprep.subr.mxu0 0.0
    %2483 = vmatpush1.msra.mxu0 0.0
    %2484 = vmatprep.subr.mxu0 0.0
    %2485 = vmatpush1.msra.mxu0 0.0
    %2486 = vmatprep.mubr.f32.mxu0 0.0
    %2487 = vmatmul.mubr.f32.gmra.mrb[0].mxu0 0.0
    %v2488 = vpop.f32.mrb[0].mxu0
    %v2489 = vadd.f32 0.0, %v2488
    %v2490 = vpop.f32.mrb[0].mxu0
    %v2491 = vadd.f32 0.0, %v2490
    %2492 = vdwg.mxu0
    %v2493 = vadd.f32 %v2347, %v2418
    %v2494 = vadd.f32 %v2348, %v2420
    %v2495 = vadd.f32 %v2349, %v2489
    %v2496 = vadd.f32 %v2350, %v2491
    %v2497 = vxor.u32 %v2493, 2147483648
    %v2498 = vmul.f32 %v2497, 1.442695
    %v2499 = vpow.pop %v2498
    %v2500 = vadd.f32 %v2499, 1.0
    %v2501 = vrcp.pop %v2500
    %v2502 = vmul.f32 1.0, %v2501
    %v2503 = vxor.u32 %v2494, 2147483648
    %v2504 = vmul.f32 %v2503, 1.442695
    %v2505 = vpow.pop %v2504
    %v2506 = vadd.f32 %v2505, 1.0
    %v2507 = vrcp.pop %v2506
    %v2508 = vmul.f32 1.0, %v2507
    %v2509 = vtanh.pop %v2495
    %v2510 = vxor.u32 %v2496, 2147483648
    %v2511 = vmul.f32 %v2510, 1.442695
    %v2512 = vpow.pop %v2511
    %v2513 = vadd.f32 %v2512, 1.0
    %v2514 = vrcp.pop %v2513
    %v2515 = vmul.f32 1.0, %v2514
    %v2516 = vmul.f32 %v2508, 0.0
    %v2517 = vmul.f32 %v2502, %v2509
    %v2518 = vadd.f32 %v2516, %v2517
    %v2519 = vtanh.pop %v2518
    %v2520 = vmul.f32 %v2515, %v2519
    %v2521 = vld [vmem:[#allocation2 + $0x20] sm:$0xff]
    %v2522 = vld [vmem:[#allocation2 + $0x28] sm:$0xff]
    %v2523 = vld [vmem:[#allocation2 + $0x30] sm:$0xff]
    %v2524 = vld [vmem:[#allocation2 + $0x38] sm:$0xff]
    %2525 = vmatprep.subr.mxu0 %v2284
    %2526 = vmatpush1.msra.mxu0 %v2283
    %2527 = vmatprep.subr.mxu0 %v2288
    %2528 = vmatpush1.msra.mxu0 %v2287
    %2529 = vmatprep.subr.mxu0 %v2292
    %2530 = vmatpush1.msra.mxu0 %v2291
    %2531 = vmatprep.subr.mxu0 %v2296
    %2532 = vmatpush1.msra.mxu0 %v2295
    %2533 = vmatprep.subr.mxu0 %v2300
    %2534 = vmatpush1.msra.mxu0 %v2299
    %2535 = vmatprep.subr.mxu0 %v2304
    %2536 = vmatpush1.msra.mxu0 %v2303
    %2537 = vmatprep.subr.mxu0 %v2308
    %2538 = vmatpush1.msra.mxu0 %v2307
    %2539 = vmatprep.subr.mxu0 %v2312
    %2540 = vmatpush1.msra.mxu0 %v2311
    %2541 = vmatprep.subr.mxu0 %v2316
    %2542 = vmatpush1.msra.mxu0 %v2315
    %2543 = vmatprep.subr.mxu0 %v2320
    %2544 = vmatpush1.msra.mxu0 %v2319
    %2545 = vmatprep.subr.mxu0 %v2324
    %2546 = vmatpush1.msra.mxu0 %v2323
    %2547 = vmatprep.subr.mxu0 %v2328
    %2548 = vmatpush1.msra.mxu0 %v2327
    %2549 = vmatprep.subr.mxu0 %v2332
    %2550 = vmatpush1.msra.mxu0 %v2331
    %2551 = vmatprep.subr.mxu0 %v2336
    %2552 = vmatpush1.msra.mxu0 %v2335
    %2553 = vmatprep.subr.mxu0 %v2340
    %2554 = vmatpush1.msra.mxu0 %v2339
    %2555 = vmatprep.subr.mxu0 %v2344
    %2556 = vmatpush1.msra.mxu0 %v2343
    %2557 = vmatprep.subr.mxu0 0.0
    %2558 = vmatpush1.msra.mxu0 0.0
    %2559 = vmatprep.subr.mxu0 0.0
    %2560 = vmatpush1.msra.mxu0 0.0
    %2561 = vmatprep.subr.mxu0 0.0
    %2562 = vmatpush1.msra.mxu0 0.0
    %2563 = vmatprep.subr.mxu0 0.0
    %2564 = vmatpush1.msra.mxu0 0.0
    %2565 = vmatprep.subr.mxu0 0.0
    %2566 = vmatpush1.msra.mxu0 0.0
    %2567 = vmatprep.subr.mxu0 0.0
    %2568 = vmatpush1.msra.mxu0 0.0
    %2569 = vmatprep.subr.mxu0 0.0
    %2570 = vmatpush1.msra.mxu0 0.0
    %2571 = vmatprep.subr.mxu0 0.0
    %2572 = vmatpush1.msra.mxu0 0.0
    %2573 = vmatprep.subr.mxu0 0.0
    %2574 = vmatpush1.msra.mxu0 0.0
    %2575 = vmatprep.subr.mxu0 0.0
    %2576 = vmatpush1.msra.mxu0 0.0
    %2577 = vmatprep.subr.mxu0 0.0
    %2578 = vmatpush1.msra.mxu0 0.0
    %2579 = vmatprep.subr.mxu0 0.0
    %2580 = vmatpush1.msra.mxu0 0.0
    %2581 = vmatprep.subr.mxu0 0.0
    %2582 = vmatpush1.msra.mxu0 0.0
    %2583 = vmatprep.subr.mxu0 0.0
    %2584 = vmatpush1.msra.mxu0 0.0
    %2585 = vmatprep.subr.mxu0 0.0
    %2586 = vmatpush1.msra.mxu0 0.0
    %2587 = vmatprep.subr.mxu0 0.0
    %2588 = vmatpush1.msra.mxu0 0.0
    %2589 = vmatprep.mubr.f32.mxu0 0.0
    %2590 = vmatmul.mubr.f32.gmra.mrb[0].mxu0 %v2520
    %v2591 = vpop.f32.mrb[0].mxu0
    %v2592 = vadd.f32 0.0, %v2591
    %v2593 = vpop.f32.mrb[0].mxu0
    %v2594 = vadd.f32 0.0, %v2593
    %2595 = vdwg.mxu0
    %2596 = vmatprep.subr.mxu0 %v2286
    %2597 = vmatpush1.msra.mxu0 %v2285
    %2598 = vmatprep.subr.mxu0 %v2290
    %2599 = vmatpush1.msra.mxu0 %v2289
    %2600 = vmatprep.subr.mxu0 %v2294
    %2601 = vmatpush1.msra.mxu0 %v2293
    %2602 = vmatprep.subr.mxu0 %v2298
    %2603 = vmatpush1.msra.mxu0 %v2297
    %2604 = vmatprep.subr.mxu0 %v2302
    %2605 = vmatpush1.msra.mxu0 %v2301
    %2606 = vmatprep.subr.mxu0 %v2306
    %2607 = vmatpush1.msra.mxu0 %v2305
    %2608 = vmatprep.subr.mxu0 %v2310
    %2609 = vmatpush1.msra.mxu0 %v2309
    %2610 = vmatprep.subr.mxu0 %v2314
    %2611 = vmatpush1.msra.mxu0 %v2313
    %2612 = vmatprep.subr.mxu0 %v2318
    %2613 = vmatpush1.msra.mxu0 %v2317
    %2614 = vmatprep.subr.mxu0 %v2322
    %2615 = vmatpush1.msra.mxu0 %v2321
    %2616 = vmatprep.subr.mxu0 %v2326
    %2617 = vmatpush1.msra.mxu0 %v2325
    %2618 = vmatprep.subr.mxu0 %v2330
    %2619 = vmatpush1.msra.mxu0 %v2329
    %2620 = vmatprep.subr.mxu0 %v2334
    %2621 = vmatpush1.msra.mxu0 %v2333
    %2622 = vmatprep.subr.mxu0 %v2338
    %2623 = vmatpush1.msra.mxu0 %v2337
    %2624 = vmatprep.subr.mxu0 %v2342
    %2625 = vmatpush1.msra.mxu0 %v2341
    %2626 = vmatprep.subr.mxu0 %v2346
    %2627 = vmatpush1.msra.mxu0 %v2345
    %2628 = vmatprep.subr.mxu0 0.0
    %2629 = vmatpush1.msra.mxu0 0.0
    %2630 = vmatprep.subr.mxu0 0.0
    %2631 = vmatpush1.msra.mxu0 0.0
    %2632 = vmatprep.subr.mxu0 0.0
    %2633 = vmatpush1.msra.mxu0 0.0
    %2634 = vmatprep.subr.mxu0 0.0
    %2635 = vmatpush1.msra.mxu0 0.0
    %2636 = vmatprep.subr.mxu0 0.0
    %2637 = vmatpush1.msra.mxu0 0.0
    %2638 = vmatprep.subr.mxu0 0.0
    %2639 = vmatpush1.msra.mxu0 0.0
    %2640 = vmatprep.subr.mxu0 0.0
    %2641 = vmatpush1.msra.mxu0 0.0
    %2642 = vmatprep.subr.mxu0 0.0
    %2643 = vmatpush1.msra.mxu0 0.0
    %2644 = vmatprep.subr.mxu0 0.0
    %2645 = vmatpush1.msra.mxu0 0.0
    %2646 = vmatprep.subr.mxu0 0.0
    %2647 = vmatpush1.msra.mxu0 0.0
    %2648 = vmatprep.subr.mxu0 0.0
    %2649 = vmatpush1.msra.mxu0 0.0
    %2650 = vmatprep.subr.mxu0 0.0
    %2651 = vmatpush1.msra.mxu0 0.0
    %2652 = vmatprep.subr.mxu0 0.0
    %2653 = vmatpush1.msra.mxu0 0.0
    %2654 = vmatprep.subr.mxu0 0.0
    %2655 = vmatpush1.msra.mxu0 0.0
    %2656 = vmatprep.subr.mxu0 0.0
    %2657 = vmatpush1.msra.mxu0 0.0
    %2658 = vmatprep.subr.mxu0 0.0
    %2659 = vmatpush1.msra.mxu0 0.0
    %2660 = vmatprep.mubr.f32.mxu0 0.0
    %2661 = vmatmul.mubr.f32.gmra.mrb[0].mxu0 %v2520
    %v2662 = vpop.f32.mrb[0].mxu0
    %v2663 = vadd.f32 0.0, %v2662
    %v2664 = vpop.f32.mrb[0].mxu0
    %v2665 = vadd.f32 0.0, %v2664
    %2666 = vdwg.mxu0
    %v2667 = vadd.f32 %v2521, %v2592
    %v2668 = vadd.f32 %v2522, %v2594
    %v2669 = vadd.f32 %v2523, %v2663
    %v2670 = vadd.f32 %v2524, %v2665
    %v2671 = vxor.u32 %v2667, 2147483648
    %v2672 = vmul.f32 %v2671, 1.442695
    %v2673 = vpow.pop %v2672
    %v2674 = vadd.f32 %v2673, 1.0
    %v2675 = vrcp.pop %v2674
    %v2676 = vmul.f32 1.0, %v2675
    %v2677 = vxor.u32 %v2668, 2147483648
    %v2678 = vmul.f32 %v2677, 1.442695
    %v2679 = vpow.pop %v2678
    %v2680 = vadd.f32 %v2679, 1.0
    %v2681 = vrcp.pop %v2680
    %v2682 = vmul.f32 1.0, %v2681
    %v2683 = vtanh.pop %v2669
    %v2684 = vxor.u32 %v2670, 2147483648
    %v2685 = vmul.f32 %v2684, 1.442695
    %v2686 = vpow.pop %v2685
    %v2687 = vadd.f32 %v2686, 1.0
    %v2688 = vrcp.pop %v2687
    %v2689 = vmul.f32 1.0, %v2688
    %v2690 = vmul.f32 %v2682, %v2518
    %v2691 = vmul.f32 %v2676, %v2683
    %v2692 = vadd.f32 %v2690, %v2691
    %v2693 = vtanh.pop %v2692
    %v2694 = vmul.f32 %v2689, %v2693
    %v2695 = vld [vmem:[#allocation2 + $0x40] sm:$0xff]
    %v2696 = vld [vmem:[#allocation2 + $0x48] sm:$0xff]
    %v2697 = vld [vmem:[#allocation2 + $0x50] sm:$0xff]
    %v2698 = vld [vmem:[#allocation2 + $0x58] sm:$0xff]
    %2699 = vmatprep.subr.mxu0 %v2284
    %2700 = vmatpush1.msra.mxu0 %v2283
    %2701 = vmatprep.subr.mxu0 %v2288
    %2702 = vmatpush1.msra.mxu0 %v2287
    %2703 = vmatprep.subr.mxu0 %v2292
    %2704 = vmatpush1.msra.mxu0 %v2291
    %2705 = vmatprep.subr.mxu0 %v2296
    %2706 = vmatpush1.msra.mxu0 %v2295
    %2707 = vmatprep.subr.mxu0 %v2300
    %2708 = vmatpush1.msra.mxu0 %v2299
    %2709 = vmatprep.subr.mxu0 %v2304
    %2710 = vmatpush1.msra.mxu0 %v2303
    %2711 = vmatprep.subr.mxu0 %v2308
    %2712 = vmatpush1.msra.mxu0 %v2307
    %2713 = vmatprep.subr.mxu0 %v2312
    %2714 = vmatpush1.msra.mxu0 %v2311
    %2715 = vmatprep.subr.mxu0 %v2316
    %2716 = vmatpush1.msra.mxu0 %v2315
    %2717 = vmatprep.subr.mxu0 %v2320
    %2718 = vmatpush1.msra.mxu0 %v2319
    %2719 = vmatprep.subr.mxu0 %v2324
    %2720 = vmatpush1.msra.mxu0 %v2323
    %2721 = vmatprep.subr.mxu0 %v2328
    %2722 = vmatpush1.msra.mxu0 %v2327
    %2723 = vmatprep.subr.mxu0 %v2332
    %2724 = vmatpush1.msra.mxu0 %v2331
    %2725 = vmatprep.subr.mxu0 %v2336
    %2726 = vmatpush1.msra.mxu0 %v2335
    %2727 = vmatprep.subr.mxu0 %v2340
    %2728 = vmatpush1.msra.mxu0 %v2339
    %2729 = vmatprep.subr.mxu0 %v2344
    %2730 = vmatpush1.msra.mxu0 %v2343
    %2731 = vmatprep.subr.mxu0 0.0
    %2732 = vmatpush1.msra.mxu0 0.0
    %2733 = vmatprep.subr.mxu0 0.0
    %2734 = vmatpush1.msra.mxu0 0.0
    %2735 = vmatprep.subr.mxu0 0.0
    %2736 = vmatpush1.msra.mxu0 0.0
    %2737 = vmatprep.subr.mxu0 0.0
    %2738 = vmatpush1.msra.mxu0 0.0
    %2739 = vmatprep.subr.mxu0 0.0
    %2740 = vmatpush1.msra.mxu0 0.0
    %2741 = vmatprep.subr.mxu0 0.0
    %2742 = vmatpush1.msra.mxu0 0.0
    %2743 = vmatprep.subr.mxu0 0.0
    %2744 = vmatpush1.msra.mxu0 0.0
    %2745 = vmatprep.subr.mxu0 0.0
    %2746 = vmatpush1.msra.mxu0 0.0
    %2747 = vmatprep.subr.mxu0 0.0
    %2748 = vmatpush1.msra.mxu0 0.0
    %2749 = vmatprep.subr.mxu0 0.0
    %2750 = vmatpush1.msra.mxu0 0.0
    %2751 = vmatprep.subr.mxu0 0.0
    %2752 = vmatpush1.msra.mxu0 0.0
    %2753 = vmatprep.subr.mxu0 0.0
    %2754 = vmatpush1.msra.mxu0 0.0
    %2755 = vmatprep.subr.mxu0 0.0
    %2756 = vmatpush1.msra.mxu0 0.0
    %2757 = vmatprep.subr.mxu0 0.0
    %2758 = vmatpush1.msra.mxu0 0.0
    %2759 = vmatprep.subr.mxu0 0.0
    %2760 = vmatpush1.msra.mxu0 0.0
    %2761 = vmatprep.subr.mxu0 0.0
    %2762 = vmatpush1.msra.mxu0 0.0
    %2763 = vmatprep.mubr.f32.mxu0 0.0
    %2764 = vmatmul.mubr.f32.gmra.mrb[0].mxu0 %v2694
    %v2765 = vpop.f32.mrb[0].mxu0
    %v2766 = vadd.f32 0.0, %v2765
    %v2767 = vpop.f32.mrb[0].mxu0
    %v2768 = vadd.f32 0.0, %v2767
    %2769 = vdwg.mxu0
    %2770 = vmatprep.subr.mxu0 %v2286
    %2771 = vmatpush1.msra.mxu0 %v2285
    %2772 = vmatprep.subr.mxu0 %v2290
    %2773 = vmatpush1.msra.mxu0 %v2289
    %2774 = vmatprep.subr.mxu0 %v2294
    %2775 = vmatpush1.msra.mxu0 %v2293
    %2776 = vmatprep.subr.mxu0 %v2298
    %2777 = vmatpush1.msra.mxu0 %v2297
    %2778 = vmatprep.subr.mxu0 %v2302
    %2779 = vmatpush1.msra.mxu0 %v2301
    %2780 = vmatprep.subr.mxu0 %v2306
    %2781 = vmatpush1.msra.mxu0 %v2305
    %2782 = vmatprep.subr.mxu0 %v2310
    %2783 = vmatpush1.msra.mxu0 %v2309
    %2784 = vmatprep.subr.mxu0 %v2314
    %2785 = vmatpush1.msra.mxu0 %v2313
    %2786 = vmatprep.subr.mxu0 %v2318
    %2787 = vmatpush1.msra.mxu0 %v2317
    %2788 = vmatprep.subr.mxu0 %v2322
    %2789 = vmatpush1.msra.mxu0 %v2321
    %2790 = vmatprep.subr.mxu0 %v2326
    %2791 = vmatpush1.msra.mxu0 %v2325
    %2792 = vmatprep.subr.mxu0 %v2330
    %2793 = vmatpush1.msra.mxu0 %v2329
    %2794 = vmatprep.subr.mxu0 %v2334
    %2795 = vmatpush1.msra.mxu0 %v2333
    %2796 = vmatprep.subr.mxu0 %v2338
    %2797 = vmatpush1.msra.mxu0 %v2337
    %2798 = vmatprep.subr.mxu0 %v2342
    %2799 = vmatpush1.msra.mxu0 %v2341
    %2800 = vmatprep.subr.mxu0 %v2346
    %2801 = vmatpush1.msra.mxu0 %v2345
    %2802 = vmatprep.subr.mxu0 0.0
    %2803 = vmatpush1.msra.mxu0 0.0
    %2804 = vmatprep.subr.mxu0 0.0
    %2805 = vmatpush1.msra.mxu0 0.0
    %2806 = vmatprep.subr.mxu0 0.0
    %2807 = vmatpush1.msra.mxu0 0.0
    %2808 = vmatprep.subr.mxu0 0.0
    %2809 = vmatpush1.msra.mxu0 0.0
    %2810 = vmatprep.subr.mxu0 0.0
    %2811 = vmatpush1.msra.mxu0 0.0
    %2812 = vmatprep.subr.mxu0 0.0
    %2813 = vmatpush1.msra.mxu0 0.0
    %2814 = vmatprep.subr.mxu0 0.0
    %2815 = vmatpush1.msra.mxu0 0.0
    %2816 = vmatprep.subr.mxu0 0.0
    %2817 = vmatpush1.msra.mxu0 0.0
    %2818 = vmatprep.subr.mxu0 0.0
    %2819 = vmatpush1.msra.mxu0 0.0
    %2820 = vmatprep.subr.mxu0 0.0
    %2821 = vmatpush1.msra.mxu0 0.0
    %2822 = vmatprep.subr.mxu0 0.0
    %2823 = vmatpush1.msra.mxu0 0.0
    %2824 = vmatprep.subr.mxu0 0.0
    %2825 = vmatpush1.msra.mxu0 0.0
    %2826 = vmatprep.subr.mxu0 0.0
    %2827 = vmatpush1.msra.mxu0 0.0
    %2828 = vmatprep.subr.mxu0 0.0
    %2829 = vmatpush1.msra.mxu0 0.0
    %2830 = vmatprep.subr.mxu0 0.0
    %2831 = vmatpush1.msra.mxu0 0.0
    %2832 = vmatprep.subr.mxu0 0.0
    %2833 = vmatpush1.msra.mxu0 0.0
    %2834 = vmatprep.mubr.f32.mxu0 0.0
    %2835 = vmatmul.mubr.f32.gmra.mrb[0].mxu0 %v2694
    %v2836 = vpop.f32.mrb[0].mxu0
    %v2837 = vadd.f32 0.0, %v2836
    %v2838 = vpop.f32.mrb[0].mxu0
    %v2839 = vadd.f32 0.0, %v2838
    %2840 = vdwg.mxu0
    %v2841 = vadd.f32 %v2695, %v2766
    %v2842 = vadd.f32 %v2696, %v2768
    %v2843 = vadd.f32 %v2697, %v2837
    %v2844 = vadd.f32 %v2698, %v2839
    %v2845 = vxor.u32 %v2841, 2147483648
    %v2846 = vmul.f32 %v2845, 1.442695
    %v2847 = vpow.pop %v2846
    %v2848 = vadd.f32 %v2847, 1.0
    %v2849 = vrcp.pop %v2848
    %v2850 = vmul.f32 1.0, %v2849
    %v2851 = vxor.u32 %v2842, 2147483648
    %v2852 = vmul.f32 %v2851, 1.442695
    %v2853 = vpow.pop %v2852
    %v2854 = vadd.f32 %v2853, 1.0
    %v2855 = vrcp.pop %v2854
    %v2856 = vmul.f32 1.0, %v2855
    %v2857 = vtanh.pop %v2843
    %v2858 = vxor.u32 %v2844, 2147483648
    %v2859 = vmul.f32 %v2858, 1.442695
    %v2860 = vpow.pop %v2859
    %v2861 = vadd.f32 %v2860, 1.0
    %v2862 = vrcp.pop %v2861
    %v2863 = vmul.f32 1.0, %v2862
    %v2864 = vmul.f32 %v2856, %v2692
    %v2865 = vmul.f32 %v2850, %v2857
    %v2866 = vadd.f32 %v2864, %v2865
    %v2867 = vtanh.pop %v2866
    %v2868 = vmul.f32 %v2863, %v2867
    %v2869 = vld [vmem:[#allocation2 + $0x60] sm:$0xff]
    %v2870 = vld [vmem:[#allocation2 + $0x68] sm:$0xff]
    %v2871 = vld [vmem:[#allocation2 + $0x70] sm:$0xff]
    %v2872 = vld [vmem:[#allocation2 + $0x78] sm:$0xff]
    %2873 = vmatprep.subr.mxu0 %v2284
    %2874 = vmatpush1.msra.mxu0 %v2283
    %2875 = vmatprep.subr.mxu0 %v2288
    %2876 = vmatpush1.msra.mxu0 %v2287
    %2877 = vmatprep.subr.mxu0 %v2292
    %2878 = vmatpush1.msra.mxu0 %v2291
    %2879 = vmatprep.subr.mxu0 %v2296
    %2880 = vmatpush1.msra.mxu0 %v2295
    %2881 = vmatprep.subr.mxu0 %v2300
    %2882 = vmatpush1.msra.mxu0 %v2299
    %2883 = vmatprep.subr.mxu0 %v2304
    %2884 = vmatpush1.msra.mxu0 %v2303
    %2885 = vmatprep.subr.mxu0 %v2308
    %2886 = vmatpush1.msra.mxu0 %v2307
    %2887 = vmatprep.subr.mxu0 %v2312
    %2888 = vmatpush1.msra.mxu0 %v2311
    %2889 = vmatprep.subr.mxu0 %v2316
    %2890 = vmatpush1.msra.mxu0 %v2315
    %2891 = vmatprep.subr.mxu0 %v2320
    %2892 = vmatpush1.msra.mxu0 %v2319
    %2893 = vmatprep.subr.mxu0 %v2324
    %2894 = vmatpush1.msra.mxu0 %v2323
    %2895 = vmatprep.subr.mxu0 %v2328
    %2896 = vmatpush1.msra.mxu0 %v2327
    %2897 = vmatprep.subr.mxu0 %v2332
    %2898 = vmatpush1.msra.mxu0 %v2331
    %2899 = vmatprep.subr.mxu0 %v2336
    %2900 = vmatpush1.msra.mxu0 %v2335
    %2901 = vmatprep.subr.mxu0 %v2340
    %2902 = vmatpush1.msra.mxu0 %v2339
    %2903 = vmatprep.subr.mxu0 %v2344
    %2904 = vmatpush1.msra.mxu0 %v2343
    %2905 = vmatprep.subr.mxu0 0.0
    %2906 = vmatpush1.msra.mxu0 0.0
    %2907 = vmatprep.subr.mxu0 0.0
    %2908 = vmatpush1.msra.mxu0 0.0
    %2909 = vmatprep.subr.mxu0 0.0
    %2910 = vmatpush1.msra.mxu0 0.0
    %2911 = vmatprep.subr.mxu0 0.0
    %2912 = vmatpush1.msra.mxu0 0.0
    %2913 = vmatprep.subr.mxu0 0.0
    %2914 = vmatpush1.msra.mxu0 0.0
    %2915 = vmatprep.subr.mxu0 0.0
    %2916 = vmatpush1.msra.mxu0 0.0
    %2917 = vmatprep.subr.mxu0 0.0
    %2918 = vmatpush1.msra.mxu0 0.0
    %2919 = vmatprep.subr.mxu0 0.0
    %2920 = vmatpush1.msra.mxu0 0.0
    %2921 = vmatprep.subr.mxu0 0.0
    %2922 = vmatpush1.msra.mxu0 0.0
    %2923 = vmatprep.subr.mxu0 0.0
    %2924 = vmatpush1.msra.mxu0 0.0
    %2925 = vmatprep.subr.mxu0 0.0
    %2926 = vmatpush1.msra.mxu0 0.0
    %2927 = vmatprep.subr.mxu0 0.0
    %2928 = vmatpush1.msra.mxu0 0.0
    %2929 = vmatprep.subr.mxu0 0.0
    %2930 = vmatpush1.msra.mxu0 0.0
    %2931 = vmatprep.subr.mxu0 0.0
    %2932 = vmatpush1.msra.mxu0 0.0
    %2933 = vmatprep.subr.mxu0 0.0
    %2934 = vmatpush1.msra.mxu0 0.0
    %2935 = vmatprep.subr.mxu0 0.0
    %2936 = vmatpush1.msra.mxu0 0.0
    %2937 = vmatprep.mubr.f32.mxu0 0.0
    %2938 = vmatmul.mubr.f32.gmra.mrb[0].mxu0 %v2868
    %v2939 = vpop.f32.mrb[0].mxu0
    %v2940 = vadd.f32 0.0, %v2939
    %v2941 = vpop.f32.mrb[0].mxu0
    %v2942 = vadd.f32 0.0, %v2941
    %2943 = vdwg.mxu0
    %2944 = vmatprep.subr.mxu0 %v2286
    %2945 = vmatpush1.msra.mxu0 %v2285
    %2946 = vmatprep.subr.mxu0 %v2290
    %2947 = vmatpush1.msra.mxu0 %v2289
    %2948 = vmatprep.subr.mxu0 %v2294
    %2949 = vmatpush1.msra.mxu0 %v2293
    %2950 = vmatprep.subr.mxu0 %v2298
    %2951 = vmatpush1.msra.mxu0 %v2297
    %2952 = vmatprep.subr.mxu0 %v2302
    %2953 = vmatpush1.msra.mxu0 %v2301
    %2954 = vmatprep.subr.mxu0 %v2306
    %2955 = vmatpush1.msra.mxu0 %v2305
    %2956 = vmatprep.subr.mxu0 %v2310
    %2957 = vmatpush1.msra.mxu0 %v2309
    %2958 = vmatprep.subr.mxu0 %v2314
    %2959 = vmatpush1.msra.mxu0 %v2313
    %2960 = vmatprep.subr.mxu0 %v2318
    %2961 = vmatpush1.msra.mxu0 %v2317
    %2962 = vmatprep.subr.mxu0 %v2322
    %2963 = vmatpush1.msra.mxu0 %v2321
    %2964 = vmatprep.subr.mxu0 %v2326
    %2965 = vmatpush1.msra.mxu0 %v2325
    %2966 = vmatprep.subr.mxu0 %v2330
    %2967 = vmatpush1.msra.mxu0 %v2329
    %2968 = vmatprep.subr.mxu0 %v2334
    %2969 = vmatpush1.msra.mxu0 %v2333
    %2970 = vmatprep.subr.mxu0 %v2338
    %2971 = vmatpush1.msra.mxu0 %v2337
    %2972 = vmatprep.subr.mxu0 %v2342
    %2973 = vmatpush1.msra.mxu0 %v2341
    %2974 = vmatprep.subr.mxu0 %v2346
    %2975 = vmatpush1.msra.mxu0 %v2345
    %2976 = vmatprep.subr.mxu0 0.0
    %2977 = vmatpush1.msra.mxu0 0.0
    %2978 = vmatprep.subr.mxu0 0.0
    %2979 = vmatpush1.msra.mxu0 0.0
    %2980 = vmatprep.subr.mxu0 0.0
    %2981 = vmatpush1.msra.mxu0 0.0
    %2982 = vmatprep.subr.mxu0 0.0
    %2983 = vmatpush1.msra.mxu0 0.0
    %2984 = vmatprep.subr.mxu0 0.0
    %2985 = vmatpush1.msra.mxu0 0.0
    %2986 = vmatprep.subr.mxu0 0.0
    %2987 = vmatpush1.msra.mxu0 0.0
    %2988 = vmatprep.subr.mxu0 0.0
    %2989 = vmatpush1.msra.mxu0 0.0
    %2990 = vmatprep.subr.mxu0 0.0
    %2991 = vmatpush1.msra.mxu0 0.0
    %2992 = vmatprep.subr.mxu0 0.0
    %2993 = vmatpush1.msra.mxu0 0.0
    %2994 = vmatprep.subr.mxu0 0.0
    %2995 = vmatpush1.msra.mxu0 0.0
    %2996 = vmatprep.subr.mxu0 0.0
    %2997 = vmatpush1.msra.mxu0 0.0
    %2998 = vmatprep.subr.mxu0 0.0
    %2999 = vmatpush1.msra.mxu0 0.0
    %3000 = vmatprep.subr.mxu0 0.0
    %3001 = vmatpush1.msra.mxu0 0.0
    %3002 = vmatprep.subr.mxu0 0.0
    %3003 = vmatpush1.msra.mxu0 0.0
    %3004 = vmatprep.subr.mxu0 0.0
    %3005 = vmatpush1.msra.mxu0 0.0
    %3006 = vmatprep.subr.mxu0 0.0
    %3007 = vmatpush1.msra.mxu0 0.0
    %3008 = vmatprep.mubr.f32.mxu0 0.0
    %3009 = vmatmul.mubr.f32.gmra.mrb[0].mxu0 %v2868
    %v3010 = vpop.f32.mrb[0].mxu0
    %v3011 = vadd.f32 0.0, %v3010
    %v3012 = vpop.f32.mrb[0].mxu0
    %v3013 = vadd.f32 0.0, %v3012
    %3014 = vdwg.mxu0
    %v3015 = vadd.f32 %v2869, %v2940
    %v3016 = vadd.f32 %v2870, %v2942
    %v3017 = vadd.f32 %v2871, %v3011
    %v3018 = vadd.f32 %v2872, %v3013
    %v3019 = vxor.u32 %v3015, 2147483648
    %v3020 = vmul.f32 %v3019, 1.442695
    %v3021 = vpow.pop %v3020
    %v3022 = vadd.f32 %v3021, 1.0
    %v3023 = vrcp.pop %v3022
    %v3024 = vmul.f32 1.0, %v3023
    %v3025 = vxor.u32 %v3016, 2147483648
    %v3026 = vmul.f32 %v3025, 1.442695
    %v3027 = vpow.pop %v3026
    %v3028 = vadd.f32 %v3027, 1.0
    %v3029 = vrcp.pop %v3028
    %v3030 = vmul.f32 1.0, %v3029
    %v3031 = vtanh.pop %v3017
    %v3032 = vxor.u32 %v3018, 2147483648
    %v3033 = vmul.f32 %v3032, 1.442695
    %v3034 = vpow.pop %v3033
    %v3035 = vadd.f32 %v3034, 1.0
    %v3036 = vrcp.pop %v3035
    %v3037 = vmul.f32 1.0, %v3036
    %v3038 = vmul.f32 %v3030, %v2866
    %v3039 = vmul.f32 %v3024, %v3031
    %v3040 = vadd.f32 %v3038, %v3039
    %v3041 = vtanh.pop %v3040
    %v3042 = vmul.f32 %v3037, %v3041
    %v3043 = vld [vmem:[#allocation2 + $0x80] sm:$0xff]
    %v3044 = vld [vmem:[#allocation2 + $0x88] sm:$0xff]
    %v3045 = vld [vmem:[#allocation2 + $0x90] sm:$0xff]
    %v3046 = vld [vmem:[#allocation2 + $0x98] sm:$0xff]
    %3047 = vmatprep.subr.mxu0 %v2284
    %3048 = vmatpush1.msra.mxu0 %v2283
    %3049 = vmatprep.subr.mxu0 %v2288
    %3050 = vmatpush1.msra.mxu0 %v2287
    %3051 = vmatprep.subr.mxu0 %v2292
    %3052 = vmatpush1.msra.mxu0 %v2291
    %3053 = vmatprep.subr.mxu0 %v2296
    %3054 = vmatpush1.msra.mxu0 %v2295
    %3055 = vmatprep.subr.mxu0 %v2300
    %3056 = vmatpush1.msra.mxu0 %v2299
    %3057 = vmatprep.subr.mxu0 %v2304
    %3058 = vmatpush1.msra.mxu0 %v2303
    %3059 = vmatprep.subr.mxu0 %v2308
    %3060 = vmatpush1.msra.mxu0 %v2307
    %3061 = vmatprep.subr.mxu0 %v2312
    %3062 = vmatpush1.msra.mxu0 %v2311
    %3063 = vmatprep.subr.mxu0 %v2316
    %3064 = vmatpush1.msra.mxu0 %v2315
    %3065 = vmatprep.subr.mxu0 %v2320
    %3066 = vmatpush1.msra.mxu0 %v2319
    %3067 = vmatprep.subr.mxu0 %v2324
    %3068 = vmatpush1.msra.mxu0 %v2323
    %3069 = vmatprep.subr.mxu0 %v2328
    %3070 = vmatpush1.msra.mxu0 %v2327
    %3071 = vmatprep.subr.mxu0 %v2332
    %3072 = vmatpush1.msra.mxu0 %v2331
    %3073 = vmatprep.subr.mxu0 %v2336
    %3074 = vmatpush1.msra.mxu0 %v2335
    %3075 = vmatprep.subr.mxu0 %v2340
    %3076 = vmatpush1.msra.mxu0 %v2339
    %3077 = vmatprep.subr.mxu0 %v2344
    %3078 = vmatpush1.msra.mxu0 %v2343
    %3079 = vmatprep.subr.mxu0 0.0
    %3080 = vmatpush1.msra.mxu0 0.0
    %3081 = vmatprep.subr.mxu0 0.0
    %3082 = vmatpush1.msra.mxu0 0.0
    %3083 = vmatprep.subr.mxu0 0.0
    %3084 = vmatpush1.msra.mxu0 0.0
    %3085 = vmatprep.subr.mxu0 0.0
    %3086 = vmatpush1.msra.mxu0 0.0
    %3087 = vmatprep.subr.mxu0 0.0
    %3088 = vmatpush1.msra.mxu0 0.0
    %3089 = vmatprep.subr.mxu0 0.0
    %3090 = vmatpush1.msra.mxu0 0.0
    %3091 = vmatprep.subr.mxu0 0.0
    %3092 = vmatpush1.msra.mxu0 0.0
    %3093 = vmatprep.subr.mxu0 0.0
    %3094 = vmatpush1.msra.mxu0 0.0
    %3095 = vmatprep.subr.mxu0 0.0
    %3096 = vmatpush1.msra.mxu0 0.0
    %3097 = vmatprep.subr.mxu0 0.0
    %3098 = vmatpush1.msra.mxu0 0.0
    %3099 = vmatprep.subr.mxu0 0.0
    %3100 = vmatpush1.msra.mxu0 0.0
    %3101 = vmatprep.subr.mxu0 0.0
    %3102 = vmatpush1.msra.mxu0 0.0
    %3103 = vmatprep.subr.mxu0 0.0
    %3104 = vmatpush1.msra.mxu0 0.0
    %3105 = vmatprep.subr.mxu0 0.0
    %3106 = vmatpush1.msra.mxu0 0.0
    %3107 = vmatprep.subr.mxu0 0.0
    %3108 = vmatpush1.msra.mxu0 0.0
    %3109 = vmatprep.subr.mxu0 0.0
    %3110 = vmatpush1.msra.mxu0 0.0
    %3111 = vmatprep.mubr.f32.mxu0 0.0
    %3112 = vmatmul.mubr.f32.gmra.mrb[0].mxu0 %v3042
    %v3113 = vpop.f32.mrb[0].mxu0
    %v3114 = vadd.f32 0.0, %v3113
    %v3115 = vpop.f32.mrb[0].mxu0
    %v3116 = vadd.f32 0.0, %v3115
    %3117 = vdwg.mxu0
    %3118 = vmatprep.subr.mxu0 %v2286
    %3119 = vmatpush1.msra.mxu0 %v2285
    %3120 = vmatprep.subr.mxu0 %v2290
    %3121 = vmatpush1.msra.mxu0 %v2289
    %3122 = vmatprep.subr.mxu0 %v2294
    %3123 = vmatpush1.msra.mxu0 %v2293
    %3124 = vmatprep.subr.mxu0 %v2298
    %3125 = vmatpush1.msra.mxu0 %v2297
    %3126 = vmatprep.subr.mxu0 %v2302
    %3127 = vmatpush1.msra.mxu0 %v2301
    %3128 = vmatprep.subr.mxu0 %v2306
    %3129 = vmatpush1.msra.mxu0 %v2305
    %3130 = vmatprep.subr.mxu0 %v2310
    %3131 = vmatpush1.msra.mxu0 %v2309
    %3132 = vmatprep.subr.mxu0 %v2314
    %3133 = vmatpush1.msra.mxu0 %v2313
    %3134 = vmatprep.subr.mxu0 %v2318
    %3135 = vmatpush1.msra.mxu0 %v2317
    %3136 = vmatprep.subr.mxu0 %v2322
    %3137 = vmatpush1.msra.mxu0 %v2321
    %3138 = vmatprep.subr.mxu0 %v2326
    %3139 = vmatpush1.msra.mxu0 %v2325
    %3140 = vmatprep.subr.mxu0 %v2330
    %3141 = vmatpush1.msra.mxu0 %v2329
    %3142 = vmatprep.subr.mxu0 %v2334
    %3143 = vmatpush1.msra.mxu0 %v2333
    %3144 = vmatprep.subr.mxu0 %v2338
    %3145 = vmatpush1.msra.mxu0 %v2337
    %3146 = vmatprep.subr.mxu0 %v2342
    %3147 = vmatpush1.msra.mxu0 %v2341
    %3148 = vmatprep.subr.mxu0 %v2346
    %3149 = vmatpush1.msra.mxu0 %v2345
    %3150 = vmatprep.subr.mxu0 0.0
    %3151 = vmatpush1.msra.mxu0 0.0
    %3152 = vmatprep.subr.mxu0 0.0
    %3153 = vmatpush1.msra.mxu0 0.0
    %3154 = vmatprep.subr.mxu0 0.0
    %3155 = vmatpush1.msra.mxu0 0.0
    %3156 = vmatprep.subr.mxu0 0.0
    %3157 = vmatpush1.msra.mxu0 0.0
    %3158 = vmatprep.subr.mxu0 0.0
    %3159 = vmatpush1.msra.mxu0 0.0
    %3160 = vmatprep.subr.mxu0 0.0
    %3161 = vmatpush1.msra.mxu0 0.0
    %3162 = vmatprep.subr.mxu0 0.0
    %3163 = vmatpush1.msra.mxu0 0.0
    %3164 = vmatprep.subr.mxu0 0.0
    %3165 = vmatpush1.msra.mxu0 0.0
    %3166 = vmatprep.subr.mxu0 0.0
    %3167 = vmatpush1.msra.mxu0 0.0
    %3168 = vmatprep.subr.mxu0 0.0
    %3169 = vmatpush1.msra.mxu0 0.0
    %3170 = vmatprep.subr.mxu0 0.0
    %3171 = vmatpush1.msra.mxu0 0.0
    %3172 = vmatprep.subr.mxu0 0.0
    %3173 = vmatpush1.msra.mxu0 0.0
    %3174 = vmatprep.subr.mxu0 0.0
    %3175 = vmatpush1.msra.mxu0 0.0
    %3176 = vmatprep.subr.mxu0 0.0
    %3177 = vmatpush1.msra.mxu0 0.0
    %3178 = vmatprep.subr.mxu0 0.0
    %3179 = vmatpush1.msra.mxu0 0.0
    %3180 = vmatprep.subr.mxu0 0.0
    %3181 = vmatpush1.msra.mxu0 0.0
    %3182 = vmatprep.mubr.f32.mxu0 0.0
    %3183 = vmatmul.mubr.f32.gmra.mrb[0].mxu0 %v3042
    %v3184 = vpop.f32.mrb[0].mxu0
    %v3185 = vadd.f32 0.0, %v3184
    %v3186 = vpop.f32.mrb[0].mxu0
    %v3187 = vadd.f32 0.0, %v3186
    %3188 = vdwg.mxu0
    %v3189 = vadd.f32 %v3043, %v3114
    %v3190 = vadd.f32 %v3044, %v3116
    %v3191 = vadd.f32 %v3045, %v3185
    %v3192 = vadd.f32 %v3046, %v3187
    %v3193 = vxor.u32 %v3189, 2147483648
    %v3194 = vmul.f32 %v3193, 1.442695
    %v3195 = vpow.pop %v3194
    %v3196 = vadd.f32 %v3195, 1.0
    %v3197 = vrcp.pop %v3196
    %v3198 = vmul.f32 1.0, %v3197
    %v3199 = vxor.u32 %v3190, 2147483648
    %v3200 = vmul.f32 %v3199, 1.442695
    %v3201 = vpow.pop %v3200
    %v3202 = vadd.f32 %v3201, 1.0
    %v3203 = vrcp.pop %v3202
    %v3204 = vmul.f32 1.0, %v3203
    %v3205 = vtanh.pop %v3191
    %v3206 = vxor.u32 %v3192, 2147483648
    %v3207 = vmul.f32 %v3206, 1.442695
    %v3208 = vpow.pop %v3207
    %v3209 = vadd.f32 %v3208, 1.0
    %v3210 = vrcp.pop %v3209
    %v3211 = vmul.f32 1.0, %v3210
    %v3212 = vmul.f32 %v3204, %v3040
    %v3213 = vmul.f32 %v3198, %v3205
    %v3214 = vadd.f32 %v3212, %v3213
    %v3215 = vtanh.pop %v3214
    %v3216 = vmul.f32 %v3211, %v3215
    %v3217 = vld [vmem:[#allocation2 + $0xa0] sm:$0xff]
    %v3218 = vld [vmem:[#allocation2 + $0xa8] sm:$0xff]
    %v3219 = vld [vmem:[#allocation2 + $0xb0] sm:$0xff]
    %v3220 = vld [vmem:[#allocation2 + $0xb8] sm:$0xff]
    %3221 = vmatprep.subr.mxu0 %v2284
    %3222 = vmatpush1.msra.mxu0 %v2283
    %3223 = vmatprep.subr.mxu0 %v2288
    %3224 = vmatpush1.msra.mxu0 %v2287
    %3225 = vmatprep.subr.mxu0 %v2292
    %3226 = vmatpush1.msra.mxu0 %v2291
    %3227 = vmatprep.subr.mxu0 %v2296
    %3228 = vmatpush1.msra.mxu0 %v2295
    %3229 = vmatprep.subr.mxu0 %v2300
    %3230 = vmatpush1.msra.mxu0 %v2299
    %3231 = vmatprep.subr.mxu0 %v2304
    %3232 = vmatpush1.msra.mxu0 %v2303
    %3233 = vmatprep.subr.mxu0 %v2308
    %3234 = vmatpush1.msra.mxu0 %v2307
    %3235 = vmatprep.subr.mxu0 %v2312
    %3236 = vmatpush1.msra.mxu0 %v2311
    %3237 = vmatprep.subr.mxu0 %v2316
    %3238 = vmatpush1.msra.mxu0 %v2315
    %3239 = vmatprep.subr.mxu0 %v2320
    %3240 = vmatpush1.msra.mxu0 %v2319
    %3241 = vmatprep.subr.mxu0 %v2324
    %3242 = vmatpush1.msra.mxu0 %v2323
    %3243 = vmatprep.subr.mxu0 %v2328
    %3244 = vmatpush1.msra.mxu0 %v2327
    %3245 = vmatprep.subr.mxu0 %v2332
    %3246 = vmatpush1.msra.mxu0 %v2331
    %3247 = vmatprep.subr.mxu0 %v2336
    %3248 = vmatpush1.msra.mxu0 %v2335
    %3249 = vmatprep.subr.mxu0 %v2340
    %3250 = vmatpush1.msra.mxu0 %v2339
    %3251 = vmatprep.subr.mxu0 %v2344
    %3252 = vmatpush1.msra.mxu0 %v2343
    %3253 = vmatprep.subr.mxu0 0.0
    %3254 = vmatpush1.msra.mxu0 0.0
    %3255 = vmatprep.subr.mxu0 0.0
    %3256 = vmatpush1.msra.mxu0 0.0
    %3257 = vmatprep.subr.mxu0 0.0
    %3258 = vmatpush1.msra.mxu0 0.0
    %3259 = vmatprep.subr.mxu0 0.0
    %3260 = vmatpush1.msra.mxu0 0.0
    %3261 = vmatprep.subr.mxu0 0.0
    %3262 = vmatpush1.msra.mxu0 0.0
    %3263 = vmatprep.subr.mxu0 0.0
    %3264 = vmatpush1.msra.mxu0 0.0
    %3265 = vmatprep.subr.mxu0 0.0
    %3266 = vmatpush1.msra.mxu0 0.0
    %3267 = vmatprep.subr.mxu0 0.0
    %3268 = vmatpush1.msra.mxu0 0.0
    %3269 = vmatprep.subr.mxu0 0.0
    %3270 = vmatpush1.msra.mxu0 0.0
    %3271 = vmatprep.subr.mxu0 0.0
    %3272 = vmatpush1.msra.mxu0 0.0
    %3273 = vmatprep.subr.mxu0 0.0
    %3274 = vmatpush1.msra.mxu0 0.0
    %3275 = vmatprep.subr.mxu0 0.0
    %3276 = vmatpush1.msra.mxu0 0.0
    %3277 = vmatprep.subr.mxu0 0.0
    %3278 = vmatpush1.msra.mxu0 0.0
    %3279 = vmatprep.subr.mxu0 0.0
    %3280 = vmatpush1.msra.mxu0 0.0
    %3281 = vmatprep.subr.mxu0 0.0
    %3282 = vmatpush1.msra.mxu0 0.0
    %3283 = vmatprep.subr.mxu0 0.0
    %3284 = vmatpush1.msra.mxu0 0.0
    %3285 = vmatprep.mubr.f32.mxu0 0.0
    %3286 = vmatmul.mubr.f32.gmra.mrb[0].mxu0 %v3216
    %v3287 = vpop.f32.mrb[0].mxu0
    %v3288 = vadd.f32 0.0, %v3287
    %v3289 = vpop.f32.mrb[0].mxu0
    %v3290 = vadd.f32 0.0, %v3289
    %3291 = vdwg.mxu0
    %3292 = vmatprep.subr.mxu0 %v2286
    %3293 = vmatpush1.msra.mxu0 %v2285
    %3294 = vmatprep.subr.mxu0 %v2290
    %3295 = vmatpush1.msra.mxu0 %v2289
    %3296 = vmatprep.subr.mxu0 %v2294
    %3297 = vmatpush1.msra.mxu0 %v2293
    %3298 = vmatprep.subr.mxu0 %v2298
    %3299 = vmatpush1.msra.mxu0 %v2297
    %3300 = vmatprep.subr.mxu0 %v2302
    %3301 = vmatpush1.msra.mxu0 %v2301
    %3302 = vmatprep.subr.mxu0 %v2306
    %3303 = vmatpush1.msra.mxu0 %v2305
    %3304 = vmatprep.subr.mxu0 %v2310
    %3305 = vmatpush1.msra.mxu0 %v2309
    %3306 = vmatprep.subr.mxu0 %v2314
    %3307 = vmatpush1.msra.mxu0 %v2313
    %3308 = vmatprep.subr.mxu0 %v2318
    %3309 = vmatpush1.msra.mxu0 %v2317
    %3310 = vmatprep.subr.mxu0 %v2322
    %3311 = vmatpush1.msra.mxu0 %v2321
    %3312 = vmatprep.subr.mxu0 %v2326
    %3313 = vmatpush1.msra.mxu0 %v2325
    %3314 = vmatprep.subr.mxu0 %v2330
    %3315 = vmatpush1.msra.mxu0 %v2329
    %3316 = vmatprep.subr.mxu0 %v2334
    %3317 = vmatpush1.msra.mxu0 %v2333
    %3318 = vmatprep.subr.mxu0 %v2338
    %3319 = vmatpush1.msra.mxu0 %v2337
    %3320 = vmatprep.subr.mxu0 %v2342
    %3321 = vmatpush1.msra.mxu0 %v2341
    %3322 = vmatprep.subr.mxu0 %v2346
    %3323 = vmatpush1.msra.mxu0 %v2345
    %3324 = vmatprep.subr.mxu0 0.0
    %3325 = vmatpush1.msra.mxu0 0.0
    %3326 = vmatprep.subr.mxu0 0.0
    %3327 = vmatpush1.msra.mxu0 0.0
    %3328 = vmatprep.subr.mxu0 0.0
    %3329 = vmatpush1.msra.mxu0 0.0
    %3330 = vmatprep.subr.mxu0 0.0
    %3331 = vmatpush1.msra.mxu0 0.0
    %3332 = vmatprep.subr.mxu0 0.0
    %3333 = vmatpush1.msra.mxu0 0.0
    %3334 = vmatprep.subr.mxu0 0.0
    %3335 = vmatpush1.msra.mxu0 0.0
    %3336 = vmatprep.subr.mxu0 0.0
    %3337 = vmatpush1.msra.mxu0 0.0
    %3338 = vmatprep.subr.mxu0 0.0
    %3339 = vmatpush1.msra.mxu0 0.0
    %3340 = vmatprep.subr.mxu0 0.0
    %3341 = vmatpush1.msra.mxu0 0.0
    %3342 = vmatprep.subr.mxu0 0.0
    %3343 = vmatpush1.msra.mxu0 0.0
    %3344 = vmatprep.subr.mxu0 0.0
    %3345 = vmatpush1.msra.mxu0 0.0
    %3346 = vmatprep.subr.mxu0 0.0
    %3347 = vmatpush1.msra.mxu0 0.0
    %3348 = vmatprep.subr.mxu0 0.0
    %3349 = vmatpush1.msra.mxu0 0.0
    %3350 = vmatprep.subr.mxu0 0.0
    %3351 = vmatpush1.msra.mxu0 0.0
    %3352 = vmatprep.subr.mxu0 0.0
    %3353 = vmatpush1.msra.mxu0 0.0
    %3354 = vmatprep.subr.mxu0 0.0
    %3355 = vmatpush1.msra.mxu0 0.0
    %3356 = vmatprep.mubr.f32.mxu0 0.0
    %3357 = vmatmul.mubr.f32.gmra.mrb[0].mxu0 %v3216
    %v3358 = vpop.f32.mrb[0].mxu0
    %v3359 = vadd.f32 0.0, %v3358
    %v3360 = vpop.f32.mrb[0].mxu0
    %v3361 = vadd.f32 0.0, %v3360
    %3362 = vdwg.mxu0
    %v3363 = vadd.f32 %v3217, %v3288
    %v3364 = vadd.f32 %v3218, %v3290
    %v3365 = vadd.f32 %v3219, %v3359
    %v3366 = vadd.f32 %v3220, %v3361
    %v3367 = vxor.u32 %v3363, 2147483648
    %v3368 = vmul.f32 %v3367, 1.442695
    %v3369 = vpow.pop %v3368
    %v3370 = vadd.f32 %v3369, 1.0
    %v3371 = vrcp.pop %v3370
    %v3372 = vmul.f32 1.0, %v3371
    %v3373 = vxor.u32 %v3364, 2147483648
    %v3374 = vmul.f32 %v3373, 1.442695
    %v3375 = vpow.pop %v3374
    %v3376 = vadd.f32 %v3375, 1.0
    %v3377 = vrcp.pop %v3376
    %v3378 = vmul.f32 1.0, %v3377
    %v3379 = vtanh.pop %v3365
    %v3380 = vxor.u32 %v3366, 2147483648
    %v3381 = vmul.f32 %v3380, 1.442695
    %v3382 = vpow.pop %v3381
    %v3383 = vadd.f32 %v3382, 1.0
    %v3384 = vrcp.pop %v3383
    %v3385 = vmul.f32 1.0, %v3384
    %v3386 = vmul.f32 %v3378, %v3214
    %v3387 = vmul.f32 %v3372, %v3379
    %v3388 = vadd.f32 %v3386, %v3387
    %v3389 = vtanh.pop %v3388
    %v3390 = vmul.f32 %v3385, %v3389
    %v3391 = vld [vmem:[#allocation2 + $0xc0] sm:$0xff]
    %v3392 = vld [vmem:[#allocation2 + $0xc8] sm:$0xff]
    %v3393 = vld [vmem:[#allocation2 + $0xd0] sm:$0xff]
    %v3394 = vld [vmem:[#allocation2 + $0xd8] sm:$0xff]
    %3395 = vmatprep.subr.mxu0 %v2284
    %3396 = vmatpush1.msra.mxu0 %v2283
    %3397 = vmatprep.subr.mxu0 %v2288
    %3398 = vmatpush1.msra.mxu0 %v2287
    %3399 = vmatprep.subr.mxu0 %v2292
    %3400 = vmatpush1.msra.mxu0 %v2291
    %3401 = vmatprep.subr.mxu0 %v2296
    %3402 = vmatpush1.msra.mxu0 %v2295
    %3403 = vmatprep.subr.mxu0 %v2300
    %3404 = vmatpush1.msra.mxu0 %v2299
    %3405 = vmatprep.subr.mxu0 %v2304
    %3406 = vmatpush1.msra.mxu0 %v2303
    %3407 = vmatprep.subr.mxu0 %v2308
    %3408 = vmatpush1.msra.mxu0 %v2307
    %3409 = vmatprep.subr.mxu0 %v2312
    %3410 = vmatpush1.msra.mxu0 %v2311
    %3411 = vmatprep.subr.mxu0 %v2316
    %3412 = vmatpush1.msra.mxu0 %v2315
    %3413 = vmatprep.subr.mxu0 %v2320
    %3414 = vmatpush1.msra.mxu0 %v2319
    %3415 = vmatprep.subr.mxu0 %v2324
    %3416 = vmatpush1.msra.mxu0 %v2323
    %3417 = vmatprep.subr.mxu0 %v2328
    %3418 = vmatpush1.msra.mxu0 %v2327
    %3419 = vmatprep.subr.mxu0 %v2332
    %3420 = vmatpush1.msra.mxu0 %v2331
    %3421 = vmatprep.subr.mxu0 %v2336
    %3422 = vmatpush1.msra.mxu0 %v2335
    %3423 = vmatprep.subr.mxu0 %v2340
    %3424 = vmatpush1.msra.mxu0 %v2339
    %3425 = vmatprep.subr.mxu0 %v2344
    %3426 = vmatpush1.msra.mxu0 %v2343
    %3427 = vmatprep.subr.mxu0 0.0
    %3428 = vmatpush1.msra.mxu0 0.0
    %3429 = vmatprep.subr.mxu0 0.0
    %3430 = vmatpush1.msra.mxu0 0.0
    %3431 = vmatprep.subr.mxu0 0.0
    %3432 = vmatpush1.msra.mxu0 0.0
    %3433 = vmatprep.subr.mxu0 0.0
    %3434 = vmatpush1.msra.mxu0 0.0
    %3435 = vmatprep.subr.mxu0 0.0
    %3436 = vmatpush1.msra.mxu0 0.0
    %3437 = vmatprep.subr.mxu0 0.0
    %3438 = vmatpush1.msra.mxu0 0.0
    %3439 = vmatprep.subr.mxu0 0.0
    %3440 = vmatpush1.msra.mxu0 0.0
    %3441 = vmatprep.subr.mxu0 0.0
    %3442 = vmatpush1.msra.mxu0 0.0
    %3443 = vmatprep.subr.mxu0 0.0
    %3444 = vmatpush1.msra.mxu0 0.0
    %3445 = vmatprep.subr.mxu0 0.0
    %3446 = vmatpush1.msra.mxu0 0.0
    %3447 = vmatprep.subr.mxu0 0.0
    %3448 = vmatpush1.msra.mxu0 0.0
    %3449 = vmatprep.subr.mxu0 0.0
    %3450 = vmatpush1.msra.mxu0 0.0
    %3451 = vmatprep.subr.mxu0 0.0
    %3452 = vmatpush1.msra.mxu0 0.0
    %3453 = vmatprep.subr.mxu0 0.0
    %3454 = vmatpush1.msra.mxu0 0.0
    %3455 = vmatprep.subr.mxu0 0.0
    %3456 = vmatpush1.msra.mxu0 0.0
    %3457 = vmatprep.subr.mxu0 0.0
    %3458 = vmatpush1.msra.mxu0 0.0
    %3459 = vmatprep.mubr.f32.mxu0 0.0
    %3460 = vmatmul.mubr.f32.gmra.mrb[0].mxu0 %v3390
    %v3461 = vpop.f32.mrb[0].mxu0
    %v3462 = vadd.f32 0.0, %v3461
    %v3463 = vpop.f32.mrb[0].mxu0
    %v3464 = vadd.f32 0.0, %v3463
    %3465 = vdwg.mxu0
    %3466 = vmatprep.subr.mxu0 %v2286
    %3467 = vmatpush1.msra.mxu0 %v2285
    %3468 = vmatprep.subr.mxu0 %v2290
    %3469 = vmatpush1.msra.mxu0 %v2289
    %3470 = vmatprep.subr.mxu0 %v2294
    %3471 = vmatpush1.msra.mxu0 %v2293
    %3472 = vmatprep.subr.mxu0 %v2298
    %3473 = vmatpush1.msra.mxu0 %v2297
    %3474 = vmatprep.subr.mxu0 %v2302
    %3475 = vmatpush1.msra.mxu0 %v2301
    %3476 = vmatprep.subr.mxu0 %v2306
    %3477 = vmatpush1.msra.mxu0 %v2305
    %3478 = vmatprep.subr.mxu0 %v2310
    %3479 = vmatpush1.msra.mxu0 %v2309
    %3480 = vmatprep.subr.mxu0 %v2314
    %3481 = vmatpush1.msra.mxu0 %v2313
    %3482 = vmatprep.subr.mxu0 %v2318
    %3483 = vmatpush1.msra.mxu0 %v2317
    %3484 = vmatprep.subr.mxu0 %v2322
    %3485 = vmatpush1.msra.mxu0 %v2321
    %3486 = vmatprep.subr.mxu0 %v2326
    %3487 = vmatpush1.msra.mxu0 %v2325
    %3488 = vmatprep.subr.mxu0 %v2330
    %3489 = vmatpush1.msra.mxu0 %v2329
    %3490 = vmatprep.subr.mxu0 %v2334
    %3491 = vmatpush1.msra.mxu0 %v2333
    %3492 = vmatprep.subr.mxu0 %v2338
    %3493 = vmatpush1.msra.mxu0 %v2337
    %3494 = vmatprep.subr.mxu0 %v2342
    %3495 = vmatpush1.msra.mxu0 %v2341
    %3496 = vmatprep.subr.mxu0 %v2346
    %3497 = vmatpush1.msra.mxu0 %v2345
    %3498 = vmatprep.subr.mxu0 0.0
    %3499 = vmatpush1.msra.mxu0 0.0
    %3500 = vmatprep.subr.mxu0 0.0
    %3501 = vmatpush1.msra.mxu0 0.0
    %3502 = vmatprep.subr.mxu0 0.0
    %3503 = vmatpush1.msra.mxu0 0.0
    %3504 = vmatprep.subr.mxu0 0.0
    %3505 = vmatpush1.msra.mxu0 0.0
    %3506 = vmatprep.subr.mxu0 0.0
    %3507 = vmatpush1.msra.mxu0 0.0
    %3508 = vmatprep.subr.mxu0 0.0
    %3509 = vmatpush1.msra.mxu0 0.0
    %3510 = vmatprep.subr.mxu0 0.0
    %3511 = vmatpush1.msra.mxu0 0.0
    %3512 = vmatprep.subr.mxu0 0.0
    %3513 = vmatpush1.msra.mxu0 0.0
    %3514 = vmatprep.subr.mxu0 0.0
    %3515 = vmatpush1.msra.mxu0 0.0
    %3516 = vmatprep.subr.mxu0 0.0
    %3517 = vmatpush1.msra.mxu0 0.0
    %3518 = vmatprep.subr.mxu0 0.0
    %3519 = vmatpush1.msra.mxu0 0.0
    %3520 = vmatprep.subr.mxu0 0.0
    %3521 = vmatpush1.msra.mxu0 0.0
    %3522 = vmatprep.subr.mxu0 0.0
    %3523 = vmatpush1.msra.mxu0 0.0
    %3524 = vmatprep.subr.mxu0 0.0
    %3525 = vmatpush1.msra.mxu0 0.0
    %3526 = vmatprep.subr.mxu0 0.0
    %3527 = vmatpush1.msra.mxu0 0.0
    %3528 = vmatprep.subr.mxu0 0.0
    %3529 = vmatpush1.msra.mxu0 0.0
    %3530 = vmatprep.mubr.f32.mxu0 0.0
    %3531 = vmatmul.mubr.f32.gmra.mrb[0].mxu0 %v3390
    %v3532 = vpop.f32.mrb[0].mxu0
    %v3533 = vadd.f32 0.0, %v3532
    %v3534 = vpop.f32.mrb[0].mxu0
    %v3535 = vadd.f32 0.0, %v3534
    %3536 = vdwg.mxu0
    %v3537 = vadd.f32 %v3391, %v3462
    %v3538 = vadd.f32 %v3392, %v3464
    %v3539 = vadd.f32 %v3393, %v3533
    %v3540 = vadd.f32 %v3394, %v3535
    %v3541 = vxor.u32 %v3537, 2147483648
    %v3542 = vmul.f32 %v3541, 1.442695
    %v3543 = vpow.pop %v3542
    %v3544 = vadd.f32 %v3543, 1.0
    %v3545 = vrcp.pop %v3544
    %v3546 = vmul.f32 1.0, %v3545
    %v3547 = vxor.u32 %v3538, 2147483648
    %v3548 = vmul.f32 %v3547, 1.442695
    %v3549 = vpow.pop %v3548
    %v3550 = vadd.f32 %v3549, 1.0
    %v3551 = vrcp.pop %v3550
    %v3552 = vmul.f32 1.0, %v3551
    %v3553 = vtanh.pop %v3539
    %v3554 = vxor.u32 %v3540, 2147483648
    %v3555 = vmul.f32 %v3554, 1.442695
    %v3556 = vpow.pop %v3555
    %v3557 = vadd.f32 %v3556, 1.0
    %v3558 = vrcp.pop %v3557
    %v3559 = vmul.f32 1.0, %v3558
    %v3560 = vmul.f32 %v3552, %v3388
    %v3561 = vmul.f32 %v3546, %v3553
    %v3562 = vadd.f32 %v3560, %v3561
    %v3563 = vtanh.pop %v3562
    %v3564 = vmul.f32 %v3559, %v3563
    %v3565 = vld [vmem:[#allocation2 + $0xe0] sm:$0xff]
    %v3566 = vld [vmem:[#allocation2 + $0xe8] sm:$0xff]
    %v3567 = vld [vmem:[#allocation2 + $0xf0] sm:$0xff]
    %v3568 = vld [vmem:[#allocation2 + $0xf8] sm:$0xff]
    %3569 = vmatprep.subr.mxu0 %v2284
    %3570 = vmatpush1.msra.mxu0 %v2283
    %3571 = vmatprep.subr.mxu0 %v2288
    %3572 = vmatpush1.msra.mxu0 %v2287
    %3573 = vmatprep.subr.mxu0 %v2292
    %3574 = vmatpush1.msra.mxu0 %v2291
    %3575 = vmatprep.subr.mxu0 %v2296
    %3576 = vmatpush1.msra.mxu0 %v2295
    %3577 = vmatprep.subr.mxu0 %v2300
    %3578 = vmatpush1.msra.mxu0 %v2299
    %3579 = vmatprep.subr.mxu0 %v2304
    %3580 = vmatpush1.msra.mxu0 %v2303
    %3581 = vmatprep.subr.mxu0 %v2308
    %3582 = vmatpush1.msra.mxu0 %v2307
    %3583 = vmatprep.subr.mxu0 %v2312
    %3584 = vmatpush1.msra.mxu0 %v2311
    %3585 = vmatprep.subr.mxu0 %v2316
    %3586 = vmatpush1.msra.mxu0 %v2315
    %3587 = vmatprep.subr.mxu0 %v2320
    %3588 = vmatpush1.msra.mxu0 %v2319
    %3589 = vmatprep.subr.mxu0 %v2324
    %3590 = vmatpush1.msra.mxu0 %v2323
    %3591 = vmatprep.subr.mxu0 %v2328
    %3592 = vmatpush1.msra.mxu0 %v2327
    %3593 = vmatprep.subr.mxu0 %v2332
    %3594 = vmatpush1.msra.mxu0 %v2331
    %3595 = vmatprep.subr.mxu0 %v2336
    %3596 = vmatpush1.msra.mxu0 %v2335
    %3597 = vmatprep.subr.mxu0 %v2340
    %3598 = vmatpush1.msra.mxu0 %v2339
    %3599 = vmatprep.subr.mxu0 %v2344
    %3600 = vmatpush1.msra.mxu0 %v2343
    %3601 = vmatprep.subr.mxu0 0.0
    %3602 = vmatpush1.msra.mxu0 0.0
    %3603 = vmatprep.subr.mxu0 0.0
    %3604 = vmatpush1.msra.mxu0 0.0
    %3605 = vmatprep.subr.mxu0 0.0
    %3606 = vmatpush1.msra.mxu0 0.0
    %3607 = vmatprep.subr.mxu0 0.0
    %3608 = vmatpush1.msra.mxu0 0.0
    %3609 = vmatprep.subr.mxu0 0.0
    %3610 = vmatpush1.msra.mxu0 0.0
    %3611 = vmatprep.subr.mxu0 0.0
    %3612 = vmatpush1.msra.mxu0 0.0
    %3613 = vmatprep.subr.mxu0 0.0
    %3614 = vmatpush1.msra.mxu0 0.0
    %3615 = vmatprep.subr.mxu0 0.0
    %3616 = vmatpush1.msra.mxu0 0.0
    %3617 = vmatprep.subr.mxu0 0.0
    %3618 = vmatpush1.msra.mxu0 0.0
    %3619 = vmatprep.subr.mxu0 0.0
    %3620 = vmatpush1.msra.mxu0 0.0
    %3621 = vmatprep.subr.mxu0 0.0
    %3622 = vmatpush1.msra.mxu0 0.0
    %3623 = vmatprep.subr.mxu0 0.0
    %3624 = vmatpush1.msra.mxu0 0.0
    %3625 = vmatprep.subr.mxu0 0.0
    %3626 = vmatpush1.msra.mxu0 0.0
    %3627 = vmatprep.subr.mxu0 0.0
    %3628 = vmatpush1.msra.mxu0 0.0
    %3629 = vmatprep.subr.mxu0 0.0
    %3630 = vmatpush1.msra.mxu0 0.0
    %3631 = vmatprep.subr.mxu0 0.0
    %3632 = vmatpush1.msra.mxu0 0.0
    %3633 = vmatprep.mubr.f32.mxu0 0.0
    %3634 = vmatmul.mubr.f32.gmra.mrb[0].mxu0 %v3564
    %v3635 = vpop.f32.mrb[0].mxu0
    %v3636 = vadd.f32 0.0, %v3635
    %v3637 = vpop.f32.mrb[0].mxu0
    %v3638 = vadd.f32 0.0, %v3637
    %3639 = vdwg.mxu0
    %3640 = vmatprep.subr.mxu0 %v2286
    %3641 = vmatpush1.msra.mxu0 %v2285
    %3642 = vmatprep.subr.mxu0 %v2290
    %3643 = vmatpush1.msra.mxu0 %v2289
    %3644 = vmatprep.subr.mxu0 %v2294
    %3645 = vmatpush1.msra.mxu0 %v2293
    %3646 = vmatprep.subr.mxu0 %v2298
    %3647 = vmatpush1.msra.mxu0 %v2297
    %3648 = vmatprep.subr.mxu0 %v2302
    %3649 = vmatpush1.msra.mxu0 %v2301
    %3650 = vmatprep.subr.mxu0 %v2306
    %3651 = vmatpush1.msra.mxu0 %v2305
    %3652 = vmatprep.subr.mxu0 %v2310
    %3653 = vmatpush1.msra.mxu0 %v2309
    %3654 = vmatprep.subr.mxu0 %v2314
    %3655 = vmatpush1.msra.mxu0 %v2313
    %3656 = vmatprep.subr.mxu0 %v2318
    %3657 = vmatpush1.msra.mxu0 %v2317
    %3658 = vmatprep.subr.mxu0 %v2322
    %3659 = vmatpush1.msra.mxu0 %v2321
    %3660 = vmatprep.subr.mxu0 %v2326
    %3661 = vmatpush1.msra.mxu0 %v2325
    %3662 = vmatprep.subr.mxu0 %v2330
    %3663 = vmatpush1.msra.mxu0 %v2329
    %3664 = vmatprep.subr.mxu0 %v2334
    %3665 = vmatpush1.msra.mxu0 %v2333
    %3666 = vmatprep.subr.mxu0 %v2338
    %3667 = vmatpush1.msra.mxu0 %v2337
    %3668 = vmatprep.subr.mxu0 %v2342
    %3669 = vmatpush1.msra.mxu0 %v2341
    %3670 = vmatprep.subr.mxu0 %v2346
    %3671 = vmatpush1.msra.mxu0 %v2345
    %3672 = vmatprep.subr.mxu0 0.0
    %3673 = vmatpush1.msra.mxu0 0.0
    %3674 = vmatprep.subr.mxu0 0.0
    %3675 = vmatpush1.msra.mxu0 0.0
    %3676 = vmatprep.subr.mxu0 0.0
    %3677 = vmatpush1.msra.mxu0 0.0
    %3678 = vmatprep.subr.mxu0 0.0
    %3679 = vmatpush1.msra.mxu0 0.0
    %3680 = vmatprep.subr.mxu0 0.0
    %3681 = vmatpush1.msra.mxu0 0.0
    %3682 = vmatprep.subr.mxu0 0.0
    %3683 = vmatpush1.msra.mxu0 0.0
    %3684 = vmatprep.subr.mxu0 0.0
    %3685 = vmatpush1.msra.mxu0 0.0
    %3686 = vmatprep.subr.mxu0 0.0
    %3687 = vmatpush1.msra.mxu0 0.0
    %3688 = vmatprep.subr.mxu0 0.0
    %3689 = vmatpush1.msra.mxu0 0.0
    %3690 = vmatprep.subr.mxu0 0.0
    %3691 = vmatpush1.msra.mxu0 0.0
    %3692 = vmatprep.subr.mxu0 0.0
    %3693 = vmatpush1.msra.mxu0 0.0
    %3694 = vmatprep.subr.mxu0 0.0
    %3695 = vmatpush1.msra.mxu0 0.0
    %3696 = vmatprep.subr.mxu0 0.0
    %3697 = vmatpush1.msra.mxu0 0.0
    %3698 = vmatprep.subr.mxu0 0.0
    %3699 = vmatpush1.msra.mxu0 0.0
    %3700 = vmatprep.subr.mxu0 0.0
    %3701 = vmatpush1.msra.mxu0 0.0
    %3702 = vmatprep.subr.mxu0 0.0
    %3703 = vmatpush1.msra.mxu0 0.0
    %3704 = vmatprep.mubr.f32.mxu0 0.0
    %3705 = vmatmul.mubr.f32.gmra.mrb[0].mxu0 %v3564
    %v3706 = vpop.f32.mrb[0].mxu0
    %v3707 = vadd.f32 0.0, %v3706
    %v3708 = vpop.f32.mrb[0].mxu0
    %v3709 = vadd.f32 0.0, %v3708
    %3710 = vdwg.mxu0
    %v3711 = vadd.f32 %v3565, %v3636
    %v3712 = vadd.f32 %v3566, %v3638
    %v3713 = vadd.f32 %v3567, %v3707
    %v3714 = vadd.f32 %v3568, %v3709
    %v3715 = vxor.u32 %v3711, 2147483648
    %v3716 = vmul.f32 %v3715, 1.442695
    %v3717 = vpow.pop %v3716
    %v3718 = vadd.f32 %v3717, 1.0
    %v3719 = vrcp.pop %v3718
    %v3720 = vmul.f32 1.0, %v3719
    %v3721 = vxor.u32 %v3712, 2147483648
    %v3722 = vmul.f32 %v3721, 1.442695
    %v3723 = vpow.pop %v3722
    %v3724 = vadd.f32 %v3723, 1.0
    %v3725 = vrcp.pop %v3724
    %v3726 = vmul.f32 1.0, %v3725
    %v3727 = vtanh.pop %v3713
    %v3728 = vxor.u32 %v3714, 2147483648
    %v3729 = vmul.f32 %v3728, 1.442695
    %v3730 = vpow.pop %v3729
    %v3731 = vadd.f32 %v3730, 1.0
    %v3732 = vrcp.pop %v3731
    %v3733 = vmul.f32 1.0, %v3732
    %v3734 = vmul.f32 %v3726, %v3562
    %v3735 = vmul.f32 %v3720, %v3727
    %v3736 = vadd.f32 %v3734, %v3735
    %v3737 = vtanh.pop %v3736
    %v3738 = vmul.f32 %v3733, %v3737
    %v3739 = vld [vmem:[#allocation13] sm:$0xff]
    %v3740 = vld [vmem:[#allocation13 + $0x8] sm:$0xff]
    %v3741 = vld [vmem:[#allocation13 + $0x10] sm:$0xff]
    %v3742 = vld [vmem:[#allocation13 + $0x18] sm:$0xff]
    %v3743 = vld [vmem:[#allocation13 + $0x20] sm:$0xff]
    %v3744 = vld [vmem:[#allocation13 + $0x28] sm:$0xff]
    %v3745 = vld [vmem:[#allocation13 + $0x30] sm:$0xff]
    %v3746 = vld [vmem:[#allocation13 + $0x38] sm:$0xff]
    %v3747 = vld [vmem:[#allocation13 + $0x40] sm:$0xff]
    %v3748 = vld [vmem:[#allocation13 + $0x48] sm:$0xff]
    %v3749 = vld [vmem:[#allocation13 + $0x50] sm:$0xff]
    %v3750 = vld [vmem:[#allocation13 + $0x58] sm:$0xff]
    %v3751 = vld [vmem:[#allocation13 + $0x60] sm:$0xff]
    %v3752 = vld [vmem:[#allocation13 + $0x68] sm:$0xff]
    %v3753 = vld [vmem:[#allocation13 + $0x70] sm:$0xff]
    %v3754 = vld [vmem:[#allocation13 + $0x78] sm:$0xff]
    %v3755 = vld [vmem:[%s8] sm:$0x1]
    %v3757 = vlaneseq
    %v3758 = vshrl.u32 %v3757, 7
    %v3759 = vsub.s32 0, %v3758
    %v3760 = vrot.slane %v3755, %v3759
    %3762 = vmatprep.subr.mxu0 0.0
    %3763 = vmatpush1.msra.mxu0 %v3739
    %3764 = vmatprep.subr.mxu0 0.0
    %3765 = vmatpush1.msra.mxu0 %v3740
    %3766 = vmatprep.subr.mxu0 0.0
    %3767 = vmatpush1.msra.mxu0 %v3741
    %3768 = vmatprep.subr.mxu0 0.0
    %3769 = vmatpush1.msra.mxu0 %v3742
    %3770 = vmatprep.subr.mxu0 0.0
    %3771 = vmatpush1.msra.mxu0 %v3743
    %3772 = vmatprep.subr.mxu0 0.0
    %3773 = vmatpush1.msra.mxu0 %v3744
    %3774 = vmatprep.subr.mxu0 0.0
    %3775 = vmatpush1.msra.mxu0 %v3745
    %3776 = vmatprep.subr.mxu0 0.0
    %3777 = vmatpush1.msra.mxu0 %v3746
    %3778 = vmatprep.subr.mxu0 0.0
    %3779 = vmatpush1.msra.mxu0 %v3747
    %3780 = vmatprep.subr.mxu0 0.0
    %3781 = vmatpush1.msra.mxu0 %v3748
    %3782 = vmatprep.subr.mxu0 0.0
    %3783 = vmatpush1.msra.mxu0 %v3749
    %3784 = vmatprep.subr.mxu0 0.0
    %3785 = vmatpush1.msra.mxu0 %v3750
    %3786 = vmatprep.subr.mxu0 0.0
    %3787 = vmatpush1.msra.mxu0 %v3751
    %3788 = vmatprep.subr.mxu0 0.0
    %3789 = vmatpush1.msra.mxu0 %v3752
    %3790 = vmatprep.subr.mxu0 0.0
    %3791 = vmatpush1.msra.mxu0 %v3753
    %3792 = vmatprep.subr.mxu0 0.0
    %3793 = vmatpush1.msra.mxu0 %v3754
    %3794 = vmatprep.subr.mxu0 0.0
    %3795 = vmatpush1.msra.mxu0 0.0
    %3796 = vmatprep.subr.mxu0 0.0
    %3797 = vmatpush1.msra.mxu0 0.0
    %3798 = vmatprep.subr.mxu0 0.0
    %3799 = vmatpush1.msra.mxu0 0.0
    %3800 = vmatprep.subr.mxu0 0.0
    %3801 = vmatpush1.msra.mxu0 0.0
    %3802 = vmatprep.subr.mxu0 0.0
    %3803 = vmatpush1.msra.mxu0 0.0
    %3804 = vmatprep.subr.mxu0 0.0
    %3805 = vmatpush1.msra.mxu0 0.0
    %3806 = vmatprep.subr.mxu0 0.0
    %3807 = vmatpush1.msra.mxu0 0.0
    %3808 = vmatprep.subr.mxu0 0.0
    %3809 = vmatpush1.msra.mxu0 0.0
    %3810 = vmatprep.subr.mxu0 0.0
    %3811 = vmatpush1.msra.mxu0 0.0
    %3812 = vmatprep.subr.mxu0 0.0
    %3813 = vmatpush1.msra.mxu0 0.0
    %3814 = vmatprep.subr.mxu0 0.0
    %3815 = vmatpush1.msra.mxu0 0.0
    %3816 = vmatprep.subr.mxu0 0.0
    %3817 = vmatpush1.msra.mxu0 0.0
    %3818 = vmatprep.subr.mxu0 0.0
    %3819 = vmatpush1.msra.mxu0 0.0
    %3820 = vmatprep.subr.mxu0 0.0
    %3821 = vmatpush1.msra.mxu0 0.0
    %3822 = vmatprep.subr.mxu0 0.0
    %3823 = vmatpush1.msra.mxu0 0.0
    %3824 = vmatprep.subr.mxu0 0.0
    %3825 = vmatpush1.msra.mxu0 0.0
    %3826 = vmatprep.mubr.f32.mxu0 0.0
    %3827 = vmatmul.mubr.f32.gmra.mrb[0].mxu0 %v3738
    %v3828 = vpop.f32.mrb[0].mxu0
    %v3829 = vadd.f32 %v3760, %v3828
    %v3830 = vpop.f32.mrb[0].mxu0
    %3831 = vdwg.mxu0
    %3832 = vmax.xlane.f32.xlu0 %v3829
    %v3833 = vpop.xlane.xlu0 %3832
    %v3834 = vsub.f32 %v3829, %v3833
    %v3835 = vmul.f32 %v3834, 1.442695
    %v3836 = vpow.pop %v3835
    %3837 = vadd.xlane.f32.xlu0 %v3836
    %v3838 = vpop.xlane.xlu0 %3837
    %v3839 = vlog2.pop %v3838
    %v3840 = vmul.f32 %v3839, 0.6931472
    %v3841 = vsub.f32 %v3834, %v3840
    %3842 = vst [vmem:[#allocation15] sm:$0xff] %v3841
    // Predicated region
    $region62: #{tpu_custom_call.1} parent=1 // pred_check
      _
    $region63: #{tpu_custom_call.1} parent=1 // pred_check_branch
      %3844 = sbr.rel (0) target = $region65
    $region64: #{tpu_custom_call.1} parent=1 // pred_region
      %s3846 = ssub.s32 128, 128
      %3847 = vsyncadd [#allocation6], %s3846
      %s3849 = sshll.u32 [#allocation15], 4
      %s3850 = int_to_ptr.vmem [resolvable:$true] %s3849
      %3852 = dma.vmem_to_hbm [thread:$0]  %s3850, 128, %s9, [#allocation6]
    $region65: #{tpu_custom_call.1} parent=1 // pred_fallthru
      _
    // Predicated region
    $region66: #{tpu_custom_call.1} parent=1 // pred_check
      _
    $region67: #{tpu_custom_call.1} parent=1 // pred_check_branch
      %3854 = sbr.rel (0) target = $region69
    $region68: #{tpu_custom_call.1} parent=1 // pred_region
      %3855 = dma.done [#allocation6], 128
    $region69: #{tpu_custom_call.1} parent=1 // pred_fallthru
      _
    %3856 = vsyncpa [#allocation5], 1
    %3857 = vsyncpa [#allocation8], 1
    %3858 = vsyncpa [#allocation11], 1
    %3859 = vsyncpa [#allocation14], 1
    %3860 = vsyncpa [#allocation6], 1

</llo_original>
